<compile_context>
chip_gen: v7x
topology: tpu7x:2x2x1
jax: 0.10.0
libtpu: 0.0.40
codegen_flags: <defaults>
</compile_context>

<pallas_src>
import functools

import jax
import jax.numpy as jnp
from jax import lax
from jax.experimental import pallas as pl
from jax.experimental.pallas import tpu as pltpu

EPS = 1e-5
EXPANSION = 4


def _bottleneck_kernel(Nb, H, W, Cin, D, Cout,
                       x_ref, w1_ref, b1_ref,
                       w2_ref, b2_ref,
                       w3_ref, b3_ref,
                       o_ref, xpad_ref):
    M = Nb * H * W

    # ---- conv1 (1x1, BN1 scale folded into w1) + bias + ReLU --------------
    # Cast x to bf16 immediately; do NOT keep the f32 x live across the
    # kernel (it is re-read from the VMEM-resident input block at the end).
    x_bf = x_ref[...].astype(jnp.bfloat16).reshape(M, Cin)
    y1 = jnp.dot(x_bf, w1_ref[...], preferred_element_type=jnp.float32)
    y1 = jnp.maximum(y1 + b1_ref[...], 0.0)              # (M, D) f32

    # ---- conv2: 3x3 grouped conv (stride 1, pad 1) as ONE im2col matmul ---
    # y1 goes (already in bf16) into an (Nb, H+2, W+2, D) scratch with a zero
    # halo; the 9 shifted taps are concatenated along the channel axis into a
    # (M, 9*D) operand and contracted against the block-diagonal (9*D, D)
    # weight in a single MXU pass (numerically identical to the grouped conv,
    # f32 accumulation). Only the halo is zeroed each step (the interior is
    # fully overwritten), so there is no cross-step state and the batch grid
    # axis stays "parallel".
    zero_row = jnp.zeros((Nb, 1, W + 2, D), jnp.bfloat16)
    zero_col = jnp.zeros((Nb, H, 1, D), jnp.bfloat16)
    xpad_ref[:, 0:1, :, :] = zero_row
    xpad_ref[:, H + 1:H + 2, :, :] = zero_row
    xpad_ref[:, 1:H + 1, 0:1, :] = zero_col
    xpad_ref[:, 1:H + 1, W + 1:W + 2, :] = zero_col
    xpad_ref[:, 1:H + 1, 1:W + 1, :] = (
        y1.astype(jnp.bfloat16).reshape(Nb, H, W, D))

    taps = [xpad_ref[:, dy:dy + H, dx:dx + W, :].reshape(M, D)
            for dy in range(3) for dx in range(3)]          # 9 x (M, D) bf16
    im2col = jnp.concatenate(taps, axis=-1)                 # (M, 9*D) bf16
    y2 = jnp.dot(im2col, w2_ref[...], preferred_element_type=jnp.float32)
    y2 = jnp.maximum(y2 + b2_ref[...], 0.0)                 # (M, D) f32

    # ---- conv3 (1x1, BN3 scale folded into w3) + bias ---------------------
    y3 = jnp.dot(y2.astype(jnp.bfloat16), w3_ref[...],
                 preferred_element_type=jnp.float32)
    y3 = y3 + b3_ref[...]                                    # (M, Cout) f32

    # ---- identity residual (stride=1, Cin == Cout) + ReLU, all f32 --------
    # Re-read x from the VMEM input block instead of keeping it live.
    identity = x_ref[...].reshape(M, Cout)
    out = jnp.maximum(y3 + identity, 0.0)
    o_ref[...] = out.reshape(Nb, H * W, Cout).astype(o_ref.dtype)


def _choose_block_n(N, H, W, Cin, D, Cout, vmem_budget=42 << 20):
    """Pick images/step: M >= 256, grid >= 4 if possible, VMEM-capped."""
    HW = H * W

    def vmem_bytes(bn):
        M = bn * HW
        x_blk = 2 * bn * HW * Cin * 4          # double-buffered input block
        o_blk = 2 * bn * HW * Cout * 4         # double-buffered output block
        scratch = bn * (H + 2) * (W + 2) * D * 2      # bf16 padded scratch
        weights = (Cin * D + 9 * D * D + D * Cout) * 2 + (2 * D + Cout) * 4
        work = M * 9 * D * 2 + 2 * M * D * 4   # im2col operand + f32 temps
        return x_blk + o_blk + scratch + weights + work

    divisors = [d for d in range(1, N + 1) if N % d == 0]
    tiers = (
        lambda bn: bn * HW >= 256 and N // bn >= 4,   # feed both TCs, 2 steps each
        lambda bn: bn * HW >= 256 and N // bn >= 2,
        lambda bn: bn * HW >= 256,
        lambda bn: True,
    )
    for cond in tiers:
        for bn in divisors:
            if cond(bn) and vmem_bytes(bn) <= vmem_budget:
                return bn
    return 1


def resnext_bottleneck_pallas(x_nchw, kernel_params, block_n=None):
    (w1, b1, w2, b2, w3, b3) = kernel_params
    N, Cin, H, W = x_nchw.shape
    D = w1.shape[1]
    Cout = w3.shape[1]
    assert Cin == Cout, "identity residual needs in_channels == out_channels*4"
    assert w2.shape == (9 * D, D)

    if block_n is None:
        block_n = _choose_block_n(N, H, W, Cin, D, Cout)
    assert N % block_n == 0

    HW = H * W
    # NCHW -> NHWC -> (N, H*W, C): channels on the 128-lane axis, spatial rows
    # flattened so the in-kernel (M, C) reshapes are layout-preserving.
    x = jnp.transpose(x_nchw, (0, 2, 3, 1)).reshape(N, HW, Cin)

    kernel = functools.partial(_bottleneck_kernel, block_n, H, W, Cin, D, Cout)

    def const_spec(shape):
        # Constant index map across the grid -> single-buffer to save VMEM.
        return pl.BlockSpec(shape, lambda n: (0,) * len(shape),
                            pipeline_mode=pl.Buffered(1))

    out = pl.pallas_call(
        kernel,
        out_shape=jax.ShapeDtypeStruct((N, HW, Cout), jnp.float32),
        grid=(N // block_n,),
        in_specs=[
            pl.BlockSpec((block_n, HW, Cin), lambda n: (n, 0, 0)),   # x
            const_spec((Cin, D)), const_spec((1, D)),                # conv1/bn1
            const_spec((9 * D, D)), const_spec((1, D)),              # conv2/bn2
            const_spec((D, Cout)), const_spec((1, Cout)),            # conv3/bn3
        ],
        out_specs=pl.BlockSpec((block_n, HW, Cout), lambda n: (n, 0, 0)),
        scratch_shapes=[pltpu.VMEM((block_n, H + 2, W + 2, D), jnp.bfloat16)],
        compiler_params=pltpu.CompilerParams(
            dimension_semantics=("parallel",)),
    )(x, w1, b1, w2, b2, w3, b3)

    return jnp.transpose(out.reshape(N, H, W, Cout), (0, 3, 1, 2))


def make_params(key, in_channels, out_channels, cardinality, base_width):
    """Deterministic synthetic parameters (module __init__ shapes)."""
    D = int(out_channels * (base_width / 64.0)) * cardinality
    Cout = out_channels * EXPANSION
    cpg = D // cardinality
    ks = jax.random.split(key, 15)

    # PyTorch-layout conv weights (OIHW), bias=False
    w1_t = jax.random.normal(ks[0], (D, in_channels, 1, 1), jnp.float32) * 0.1
    w2_t = jax.random.normal(ks[1], (D, cpg, 3, 3), jnp.float32) * 0.1
    w3_t = jax.random.normal(ks[2], (Cout, D, 1, 1), jnp.float32) * 0.1

    def bn_params(kg, kb, km, kv, C):
        gamma = 1.0 + 0.1 * jax.random.normal(kg, (C,), jnp.float32)
        beta = 0.1 * jax.random.normal(kb, (C,), jnp.float32)
        mean = 0.1 * jax.random.normal(km, (C,), jnp.float32)
        var = jnp.abs(jax.random.normal(kv, (C,), jnp.float32)) + 0.5
        scale = gamma / jnp.sqrt(var + EPS)
        bias = beta - mean * scale
        return scale, bias, (gamma, beta, mean, var)

    s1, b1, bn1 = bn_params(ks[3], ks[4], ks[5], ks[6], D)
    s2, b2, bn2 = bn_params(ks[7], ks[8], ks[9], ks[10], D)
    s3, b3, bn3 = bn_params(ks[11], ks[12], ks[13], ks[14], Cout)

    # Kernel-layout weights with the inference-mode BN scale folded into the
    # output-channel columns (kernel only does bias-add + ReLU).
    w1 = jnp.transpose(w1_t.reshape(D, in_channels), (1, 0)) * s1[None, :]
    w3 = jnp.transpose(w3_t.reshape(Cout, D), (1, 0)) * s3[None, :]

    # Grouped 3x3 weight -> dense block-diagonal (3, 3, D_in, D_out), then
    # flattened to the (9*D, D) im2col layout the kernel contracts against.
    # TODO(synk): at production cardinality (32) use group-blocked contractions
    # instead of materializing the mostly-zero dense weight.
    w2d = jnp.zeros((3, 3, D, D), jnp.float32)
    for g in range(cardinality):
        blk = w2_t[g * cpg:(g + 1) * cpg]                  # (oc, ic, 3, 3)
        w2d = w2d.at[:, :, g * cpg:(g + 1) * cpg, g * cpg:(g + 1) * cpg].set(
            jnp.transpose(blk, (2, 3, 1, 0)))              # (3, 3, ic, oc)
    w2d = w2d * s2[None, None, None, :]
    w2_flat = w2d.reshape(9 * D, D)                        # rows: (dy, dx, cin)

    def as_row(v):
        return v.reshape(1, -1)

    # Matmul operands in bf16 (halves weight DMA, doubles MXU throughput on
    # v6e/v7x); biases stay f32 and accumulation in-kernel is f32.
    kernel_params = (w1.astype(jnp.bfloat16), as_row(b1),
                     w2_flat.astype(jnp.bfloat16), as_row(b2),
                     w3.astype(jnp.bfloat16), as_row(b3))
    torch_params = (w1_t, w2_t, w3_t, bn1, bn2, bn3)
    return kernel_params, torch_params


def ref_forward(x, torch_params, cardinality):
    """Pure-JAX f32 reference mirroring the PyTorch forward (eval-mode BN)."""
    (w1_t, w2_t, w3_t, bn1, bn2, bn3) = torch_params
    dn = ('NCHW', 'OIHW', 'NCHW')
    hi = jax.lax.Precision.HIGHEST

    def bn_apply(y, p):
        g, b, m, v = p
        inv = g / jnp.sqrt(v + EPS)
        return (y - m[None, :, None, None]) * inv[None, :, None, None] \
            + b[None, :, None, None]

    y = lax.conv_general_dilated(x, w1_t, (1, 1), 'VALID',
                                 dimension_numbers=dn, precision=hi)
    y = jnp.maximum(bn_apply(y, bn1), 0.0)
    y = lax.conv_general_dilated(y, w2_t, (1, 1), ((1, 1), (1, 1)),
                                 dimension_numbers=dn,
                                 feature_group_count=cardinality, precision=hi)
    y = jnp.maximum(bn_apply(y, bn2), 0.0)
    y = lax.conv_general_dilated(y, w3_t, (1, 1), 'VALID',
                                 dimension_numbers=dn, precision=hi)
    y = bn_apply(y, bn3)
    return jnp.maximum(y + x, 0.0)


if __name__ == "__main__":
    # Small but lane-dense ResNeXt bottleneck:
    # in=128, out=32 (expansion 4 -> 128), cardinality=8, base_width=32 -> D=128
    # => every channel dim is a multiple of 128 (unmasked loads/stores).
    # N=16 lets block_n=4 give a 256-row matmul M dimension AND a grid of 4
    # steps (2 per TensorCore on v7x) so DMA overlaps compute.
    N, in_channels, H, W = 16, 128, 8, 8
    out_channels, cardinality, base_width = 32, 8, 32

    key = jax.random.PRNGKey(0)
    kx, kp = jax.random.split(key)
    x = jax.random.normal(kx, (N, in_channels, H, W), jnp.float32)

    kernel_params, torch_params = make_params(
        kp, in_channels, out_channels, cardinality, base_width)

    out = resnext_bottleneck_pallas(x, kernel_params)
    out = jax.block_until_ready(out)

    ref = ref_forward(x, torch_params, cardinality)
    assert out.shape == ref.shape, (out.shape, ref.shape)
    max_err = float(jnp.max(jnp.abs(out - ref)))
    # bf16 matmul operands with f32 accumulation through three chained convs:
    # allow 2% of the output dynamic range.
    tol = 2e-2 * max(1.0, float(jnp.max(jnp.abs(ref))))
    assert max_err <= tol, (max_err, tol)

    print("KERNEL_OK")
</pallas_src>

<mosaic_0001>
module attributes {stable_mosaic.version = 11 : i64} {
  func.func @_bottleneck_kernel(%arg0: i32, %arg1: memref<4x64x128xf32, #tpu.memory_space<vmem>>, %arg2: memref<128x128xbf16, #tpu.memory_space<vmem>>, %arg3: memref<1x128xf32, #tpu.memory_space<vmem>>, %arg4: memref<1152x128xbf16, #tpu.memory_space<vmem>>, %arg5: memref<1x128xf32, #tpu.memory_space<vmem>>, %arg6: memref<128x128xbf16, #tpu.memory_space<vmem>>, %arg7: memref<1x128xf32, #tpu.memory_space<vmem>>, %arg8: memref<4x64x128xf32, #tpu.memory_space<vmem>>, %arg9: memref<4x10x10x128xbf16, #tpu.memory_space<vmem>>) attributes {dimension_semantics = [#tpu.dimension_semantics<parallel>], iteration_bounds = array<i64: 4>, scalar_prefetch = 0 : i64, scratch_operands = 1 : i64, tpu.core_type = #tpu.core_type<tc>, window_params = [{transform_indices = @transform_0, window_bounds = array<i64: 4, 64, 128>}, {pipeline_mode = #tpu.pipeline_mode<synchronous>, transform_indices = @transform_1, window_bounds = array<i64: 128, 128>}, {pipeline_mode = #tpu.pipeline_mode<synchronous>, transform_indices = @transform_2, window_bounds = array<i64: 1, 128>}, {pipeline_mode = #tpu.pipeline_mode<synchronous>, transform_indices = @transform_3, window_bounds = array<i64: 1152, 128>}, {pipeline_mode = #tpu.pipeline_mode<synchronous>, transform_indices = @transform_4, window_bounds = array<i64: 1, 128>}, {pipeline_mode = #tpu.pipeline_mode<synchronous>, transform_indices = @transform_5, window_bounds = array<i64: 128, 128>}, {pipeline_mode = #tpu.pipeline_mode<synchronous>, transform_indices = @transform_6, window_bounds = array<i64: 1, 128>}, {transform_indices = @transform_7, window_bounds = array<i64: 4, 64, 128>}]} {
    %c0 = arith.constant 0 : index
    %c0_0 = arith.constant 0 : index
    %c0_1 = arith.constant 0 : index
    %0 = vector.load %arg1[%c0, %c0_0, %c0_1] : memref<4x64x128xf32, #tpu.memory_space<vmem>>, vector<4x64x128xf32>
    %1 = arith.truncf %0 : vector<4x64x128xf32> to vector<4x64x128xbf16>
    %2 = vector.shape_cast %1 : vector<4x64x128xbf16> to vector<256x128xbf16>
    %c0_2 = arith.constant 0 : index
    %c0_3 = arith.constant 0 : index
    %3 = vector.load %arg2[%c0_2, %c0_3] : memref<128x128xbf16, #tpu.memory_space<vmem>>, vector<128x128xbf16>
    %cst = arith.constant dense<0.000000e+00> : vector<256x128xf32>
    %4 = tpu.matmul %2, %3, %cst {dimension_numbers = #tpu.dot_dimension_numbers<[1], [0], [0], [1], [0, 0, 1, 1], [], []>} : vector<256x128xbf16>, vector<128x128xbf16>, vector<256x128xf32> -> vector<256x128xf32>
    %c0_4 = arith.constant 0 : index
    %c0_5 = arith.constant 0 : index
    %5 = vector.load %arg3[%c0_4, %c0_5] : memref<1x128xf32, #tpu.memory_space<vmem>>, vector<1x128xf32>
    %6 = vector.broadcast %5 : vector<1x128xf32> to vector<256x128xf32>
    %7 = arith.addf %4, %6 : vector<256x128xf32>
    %cst_6 = arith.constant 0.000000e+00 : f32
    %8 = vector.broadcast %cst_6 : f32 to vector<256x128xf32>
    %9 = arith.maximumf %7, %8 : vector<256x128xf32>
    %cst_7 = arith.constant 0.000000e+00 : bf16
    %10 = vector.broadcast %cst_7 : bf16 to vector<4x1x10x128xbf16>
    %cst_8 = arith.constant 0.000000e+00 : bf16
    %11 = vector.broadcast %cst_8 : bf16 to vector<4x8x1x128xbf16>
    %c0_9 = arith.constant 0 : index
    %c0_10 = arith.constant 0 : index
    %c0_11 = arith.constant 0 : index
    %c0_12 = arith.constant 0 : index
    %12 = vector.load %arg9[%c0_9, %c0_10, %c0_11, %c0_12] : memref<4x10x10x128xbf16, #tpu.memory_space<vmem>>, vector<4x1x10x128xbf16>
    tpu.vector_store %arg9[%c0_9, %c0_10, %c0_11, %c0_12], %10 {strides = array<i32>} : memref<4x10x10x128xbf16, #tpu.memory_space<vmem>>, vector<4x1x10x128xbf16>,
    %c0_13 = arith.constant 0 : index
    %c9 = arith.constant 9 : index
    %c0_14 = arith.constant 0 : index
    %c0_15 = arith.constant 0 : index
    %13 = vector.load %arg9[%c0_13, %c9, %c0_14, %c0_15] : memref<4x10x10x128xbf16, #tpu.memory_space<vmem>>, vector<4x1x10x128xbf16>
    tpu.vector_store %arg9[%c0_13, %c9, %c0_14, %c0_15], %10 {strides = array<i32>} : memref<4x10x10x128xbf16, #tpu.memory_space<vmem>>, vector<4x1x10x128xbf16>,
    %c0_16 = arith.constant 0 : index
    %c1 = arith.constant 1 : index
    %c0_17 = arith.constant 0 : index
    %c0_18 = arith.constant 0 : index
    %14 = vector.load %arg9[%c0_16, %c1, %c0_17, %c0_18] : memref<4x10x10x128xbf16, #tpu.memory_space<vmem>>, vector<4x8x1x128xbf16>
    tpu.vector_store %arg9[%c0_16, %c1, %c0_17, %c0_18], %11 {strides = array<i32>} : memref<4x10x10x128xbf16, #tpu.memory_space<vmem>>, vector<4x8x1x128xbf16>,
    %c0_19 = arith.constant 0 : index
    %c1_20 = arith.constant 1 : index
    %c9_21 = arith.constant 9 : index
    %c0_22 = arith.constant 0 : index
    %15 = vector.load %arg9[%c0_19, %c1_20, %c9_21, %c0_22] : memref<4x10x10x128xbf16, #tpu.memory_space<vmem>>, vector<4x8x1x128xbf16>
    tpu.vector_store %arg9[%c0_19, %c1_20, %c9_21, %c0_22], %11 {strides = array<i32>} : memref<4x10x10x128xbf16, #tpu.memory_space<vmem>>, vector<4x8x1x128xbf16>,
    %16 = arith.truncf %9 : vector<256x128xf32> to vector<256x128xbf16>
    %17 = vector.shape_cast %16 : vector<256x128xbf16> to vector<4x8x8x128xbf16>
    %c0_23 = arith.constant 0 : index
    %c1_24 = arith.constant 1 : index
    %c1_25 = arith.constant 1 : index
    %c0_26 = arith.constant 0 : index
    %18 = vector.load %arg9[%c0_23, %c1_24, %c1_25, %c0_26] : memref<4x10x10x128xbf16, #tpu.memory_space<vmem>>, vector<4x8x8x128xbf16>
    tpu.vector_store %arg9[%c0_23, %c1_24, %c1_25, %c0_26], %17 {strides = array<i32>} : memref<4x10x10x128xbf16, #tpu.memory_space<vmem>>, vector<4x8x8x128xbf16>,
    %c0_27 = arith.constant 0 : index
    %c0_28 = arith.constant 0 : index
    %c0_29 = arith.constant 0 : index
    %c0_30 = arith.constant 0 : index
    %19 = vector.load %arg9[%c0_27, %c0_28, %c0_29, %c0_30] : memref<4x10x10x128xbf16, #tpu.memory_space<vmem>>, vector<4x8x8x128xbf16>
    %20 = vector.shape_cast %19 : vector<4x8x8x128xbf16> to vector<256x128xbf16>
    %c0_31 = arith.constant 0 : index
    %c0_32 = arith.constant 0 : index
    %c1_33 = arith.constant 1 : index
    %c0_34 = arith.constant 0 : index
    %21 = vector.load %arg9[%c0_31, %c0_32, %c1_33, %c0_34] : memref<4x10x10x128xbf16, #tpu.memory_space<vmem>>, vector<4x8x8x128xbf16>
    %22 = vector.shape_cast %21 : vector<4x8x8x128xbf16> to vector<256x128xbf16>
    %c0_35 = arith.constant 0 : index
    %c0_36 = arith.constant 0 : index
    %c2 = arith.constant 2 : index
    %c0_37 = arith.constant 0 : index
    %23 = vector.load %arg9[%c0_35, %c0_36, %c2, %c0_37] : memref<4x10x10x128xbf16, #tpu.memory_space<vmem>>, vector<4x8x8x128xbf16>
    %24 = vector.shape_cast %23 : vector<4x8x8x128xbf16> to vector<256x128xbf16>
    %c0_38 = arith.constant 0 : index
    %c1_39 = arith.constant 1 : index
    %c0_40 = arith.constant 0 : index
    %c0_41 = arith.constant 0 : index
    %25 = vector.load %arg9[%c0_38, %c1_39, %c0_40, %c0_41] : memref<4x10x10x128xbf16, #tpu.memory_space<vmem>>, vector<4x8x8x128xbf16>
    %26 = vector.shape_cast %25 : vector<4x8x8x128xbf16> to vector<256x128xbf16>
    %c0_42 = arith.constant 0 : index
    %c1_43 = arith.constant 1 : index
    %c1_44 = arith.constant 1 : index
    %c0_45 = arith.constant 0 : index
    %27 = vector.load %arg9[%c0_42, %c1_43, %c1_44, %c0_45] : memref<4x10x10x128xbf16, #tpu.memory_space<vmem>>, vector<4x8x8x128xbf16>
    %28 = vector.shape_cast %27 : vector<4x8x8x128xbf16> to vector<256x128xbf16>
    %c0_46 = arith.constant 0 : index
    %c1_47 = arith.constant 1 : index
    %c2_48 = arith.constant 2 : index
    %c0_49 = arith.constant 0 : index
    %29 = vector.load %arg9[%c0_46, %c1_47, %c2_48, %c0_49] : memref<4x10x10x128xbf16, #tpu.memory_space<vmem>>, vector<4x8x8x128xbf16>
    %30 = vector.shape_cast %29 : vector<4x8x8x128xbf16> to vector<256x128xbf16>
    %c0_50 = arith.constant 0 : index
    %c2_51 = arith.constant 2 : index
    %c0_52 = arith.constant 0 : index
    %c0_53 = arith.constant 0 : index
    %31 = vector.load %arg9[%c0_50, %c2_51, %c0_52, %c0_53] : memref<4x10x10x128xbf16, #tpu.memory_space<vmem>>, vector<4x8x8x128xbf16>
    %32 = vector.shape_cast %31 : vector<4x8x8x128xbf16> to vector<256x128xbf16>
    %c0_54 = arith.constant 0 : index
    %c2_55 = arith.constant 2 : index
    %c1_56 = arith.constant 1 : index
    %c0_57 = arith.constant 0 : index
    %33 = vector.load %arg9[%c0_54, %c2_55, %c1_56, %c0_57] : memref<4x10x10x128xbf16, #tpu.memory_space<vmem>>, vector<4x8x8x128xbf16>
    %34 = vector.shape_cast %33 : vector<4x8x8x128xbf16> to vector<256x128xbf16>
    %c0_58 = arith.constant 0 : index
    %c2_59 = arith.constant 2 : index
    %c2_60 = arith.constant 2 : index
    %c0_61 = arith.constant 0 : index
    %35 = vector.load %arg9[%c0_58, %c2_59, %c2_60, %c0_61] : memref<4x10x10x128xbf16, #tpu.memory_space<vmem>>, vector<4x8x8x128xbf16>
    %36 = vector.shape_cast %35 : vector<4x8x8x128xbf16> to vector<256x128xbf16>
    %37 = tpu.concatenate %20, %22, %24, %26, %28, %30, %32, %34, %36 in 1 : vector<256x128xbf16>, vector<256x128xbf16>, vector<256x128xbf16>, vector<256x128xbf16>, vector<256x128xbf16>, vector<256x128xbf16>, vector<256x128xbf16>, vector<256x128xbf16>, vector<256x128xbf16> -> vector<256x1152xbf16>
    %c0_62 = arith.constant 0 : index
    %c0_63 = arith.constant 0 : index
    %38 = vector.load %arg4[%c0_62, %c0_63] : memref<1152x128xbf16, #tpu.memory_space<vmem>>, vector<1152x128xbf16>
    %cst_64 = arith.constant dense<0.000000e+00> : vector<256x128xf32>
    %39 = tpu.matmul %37, %38, %cst_64 {dimension_numbers = #tpu.dot_dimension_numbers<[1], [0], [0], [1], [0, 0, 1, 1], [], []>} : vector<256x1152xbf16>, vector<1152x128xbf16>, vector<256x128xf32> -> vector<256x128xf32>
    %c0_65 = arith.constant 0 : index
    %c0_66 = arith.constant 0 : index
    %40 = vector.load %arg5[%c0_65, %c0_66] : memref<1x128xf32, #tpu.memory_space<vmem>>, vector<1x128xf32>
    %41 = vector.broadcast %40 : vector<1x128xf32> to vector<256x128xf32>
    %42 = arith.addf %39, %41 : vector<256x128xf32>
    %cst_67 = arith.constant 0.000000e+00 : f32
    %43 = vector.broadcast %cst_67 : f32 to vector<256x128xf32>
    %44 = arith.maximumf %42, %43 : vector<256x128xf32>
    %45 = arith.truncf %44 : vector<256x128xf32> to vector<256x128xbf16>
    %c0_68 = arith.constant 0 : index
    %c0_69 = arith.constant 0 : index
    %46 = vector.load %arg6[%c0_68, %c0_69] : memref<128x128xbf16, #tpu.memory_space<vmem>>, vector<128x128xbf16>
    %cst_70 = arith.constant dense<0.000000e+00> : vector<256x128xf32>
    %47 = tpu.matmul %45, %46, %cst_70 {dimension_numbers = #tpu.dot_dimension_numbers<[1], [0], [0], [1], [0, 0, 1, 1], [], []>} : vector<256x128xbf16>, vector<128x128xbf16>, vector<256x128xf32> -> vector<256x128xf32>
    %c0_71 = arith.constant 0 : index
    %c0_72 = arith.constant 0 : index
    %48 = vector.load %arg7[%c0_71, %c0_72] : memref<1x128xf32, #tpu.memory_space<vmem>>, vector<1x128xf32>
    %49 = vector.broadcast %48 : vector<1x128xf32> to vector<256x128xf32>
    %50 = arith.addf %47, %49 : vector<256x128xf32>
    %c0_73 = arith.constant 0 : index
    %c0_74 = arith.constant 0 : index
    %c0_75 = arith.constant 0 : index
    %51 = vector.load %arg1[%c0_73, %c0_74, %c0_75] : memref<4x64x128xf32, #tpu.memory_space<vmem>>, vector<4x64x128xf32>
    %52 = vector.shape_cast %51 : vector<4x64x128xf32> to vector<256x128xf32>
    %53 = arith.addf %50, %52 : vector<256x128xf32>
    %cst_76 = arith.constant 0.000000e+00 : f32
    %54 = vector.broadcast %cst_76 : f32 to vector<256x128xf32>
    %55 = arith.maximumf %53, %54 : vector<256x128xf32>
    %56 = vector.shape_cast %55 : vector<256x128xf32> to vector<4x64x128xf32>
    %c0_77 = arith.constant 0 : index
    %c0_78 = arith.constant 0 : index
    %c0_79 = arith.constant 0 : index
    %57 = vector.load %arg8[%c0_77, %c0_78, %c0_79] : memref<4x64x128xf32, #tpu.memory_space<vmem>>, vector<4x64x128xf32>
    tpu.vector_store %arg8[%c0_77, %c0_78, %c0_79], %56 {strides = array<i32>} : memref<4x64x128xf32, #tpu.memory_space<vmem>>, vector<4x64x128xf32>,
    return
  }
  func.func @transform_0(%arg0: i32) -> (i32, i32, i32) {
    %c0_i32 = arith.constant 0 : i32
    %c0_i32_0 = arith.constant 0 : i32
    %c0_i32_1 = arith.constant 0 : i32
    return %arg0, %c0_i32, %c0_i32_0 : i32, i32, i32
  }
  func.func @transform_1(%arg0: i32) -> (i32, i32) {
    %c0_i32 = arith.constant 0 : i32
    %c0_i32_0 = arith.constant 0 : i32
    %c0_i32_1 = arith.constant 0 : i32
    return %c0_i32, %c0_i32_0 : i32, i32
  }
  func.func @transform_2(%arg0: i32) -> (i32, i32) {
    %c0_i32 = arith.constant 0 : i32
    %c0_i32_0 = arith.constant 0 : i32
    %c0_i32_1 = arith.constant 0 : i32
    return %c0_i32, %c0_i32_0 : i32, i32
  }
  func.func @transform_3(%arg0: i32) -> (i32, i32) {
    %c0_i32 = arith.constant 0 : i32
    %c0_i32_0 = arith.constant 0 : i32
    %c0_i32_1 = arith.constant 0 : i32
    return %c0_i32, %c0_i32_0 : i32, i32
  }
  func.func @transform_4(%arg0: i32) -> (i32, i32) {
    %c0_i32 = arith.constant 0 : i32
    %c0_i32_0 = arith.constant 0 : i32
    %c0_i32_1 = arith.constant 0 : i32
    return %c0_i32, %c0_i32_0 : i32, i32
  }
  func.func @transform_5(%arg0: i32) -> (i32, i32) {
    %c0_i32 = arith.constant 0 : i32
    %c0_i32_0 = arith.constant 0 : i32
    %c0_i32_1 = arith.constant 0 : i32
    return %c0_i32, %c0_i32_0 : i32, i32
  }
  func.func @transform_6(%arg0: i32) -> (i32, i32) {
    %c0_i32 = arith.constant 0 : i32
    %c0_i32_0 = arith.constant 0 : i32
    %c0_i32_1 = arith.constant 0 : i32
    return %c0_i32, %c0_i32_0 : i32, i32
  }
  func.func @transform_7(%arg0: i32) -> (i32, i32, i32) {
    %c0_i32 = arith.constant 0 : i32
    %c0_i32_0 = arith.constant 0 : i32
    %c0_i32_1 = arith.constant 0 : i32
    return %arg0, %c0_i32, %c0_i32_0 : i32, i32, i32
  }
}

</mosaic_0001>

<llo_original>
// kernel: tpu_custom_call.1
$region0: #{tpu_custom_call.1}
  #allocation0 [shape = 'u32[]', space=smem, size = 0x4, offset = 0x4, fixed_abs, tag = 'smem constant byte address 0x4 - core index']
  #allocation1 [shape = 'u32[144,128]{1,0:T(1,128)}', space=vmem, size = 0x12000, scoped, tag = 'internal scratch']
  #allocation2 [shape = 'bf16[4,10,10,128]{3,2,1,0:T(8,128)(2,1)}', space=vmem, size = 0x28000, scoped, tag = 'scratch operand']
  %s0 = inlined_call_operand.hbm [shape: f32[16,64,128], index: 0, kind: input, shape index: {}]
  %s1 = inlined_call_operand.hbm [shape: bf16[128,128], index: 1, kind: input, shape index: {}]
  %s2 = inlined_call_operand.vmem [shape: f32[1,128], index: 2, kind: input, shape index: {}]
  %s3 = inlined_call_operand.hbm [shape: bf16[1152,128], index: 3, kind: input, shape index: {}]
  %s4 = inlined_call_operand.vmem [shape: f32[1,128], index: 4, kind: input, shape index: {}]
  %s5 = inlined_call_operand.hbm [shape: bf16[128,128], index: 5, kind: input, shape index: {}]
  %s6 = inlined_call_operand.vmem [shape: f32[1,128], index: 6, kind: input, shape index: {}]
  %s7 = inlined_call_operand.hbm [shape: f32[16,64,128], index: 7, kind: output, shape index: {}]
  %s8 = sld [smem:[#allocation0]]
  $region77: #{tpu_custom_call.1} parent=0
    _
  %s10 = ssub.s32 1, %s8
  %s11 = scalar_select 0, %s10, %s8
  $region1: #{tpu_custom_call.1} parent=0
    #allocation3 [shape = 'u8[262144]{0}', space=vmem, size = 0x40000, scoped, tag = 'input window, operand 0']
    #allocation4 [shape = 's32[2]{0}', space=sflag, size = 0x8, scoped, tag = 'scoped memory for tpu_custom_call.1']
    #allocation5 [shape = 's32[2]{0}', space=sflag, size = 0x8, scoped, tag = 'scoped memory for tpu_custom_call.1']
    #allocation6 [shape = 'u8[32768]{0}', space=vmem, size = 0x8000, scoped, tag = 'input window, operand 1, single buffered']
    #allocation7 [shape = 's32[1]{0}', space=sflag, size = 0x4, scoped, tag = 'scoped memory for tpu_custom_call.1']
    #allocation8 [shape = 'u8[294912]{0}', space=vmem, size = 0x48000, scoped, tag = 'input window, operand 3, single buffered']
    #allocation9 [shape = 'u8[32768]{0}', space=vmem, size = 0x8000, scoped, tag = 'input window, operand 5, single buffered']
    #allocation10 [shape = 's32[1]{0}', space=sflag, size = 0x4, scoped, tag = 'scoped memory for tpu_custom_call.1']
    #allocation11 [shape = 'u8[262144]{0}', space=vmem, size = 0x40000, scoped, tag = 'output window, operand 0']
    %12 = vsyncpa [#allocation4], 0
    %s13 = scalar_lea.sflag [#allocation4], 1
    %14 = vsyncpa %s13, 0
    %15 = vsyncpa [#allocation7], 0
    %16 = vsyncpa [#allocation10], 0
    %17 = vsyncpa [#allocation5], 0
    %s18 = scalar_lea.sflag [#allocation5], 1
    %19 = vsyncpa %s18, 0
    loop: start=0, step=1, limit=6
    $region2: #{tpu_custom_call.1} parent=1 // loop_pre_header
      _
    $region3: #{tpu_custom_call.1} parent=1 // loop_header
      %s21 = sphi 0, %s25
      %p22 = scmp.ge.s32.totalorder %s21, 6
      %s31 = sphi 0, %s33
      %s34 = sphi 0, %s31
      %s35 = sphi 0, %s34
      %s51 = sphi 0, %s35
      %s55 = sphi 0, %s55
      %s57 = sphi 0, %s55
      %s58 = sphi 0, %s57
      %s72 = sphi 0, %s58
      %s76 = sphi 0, %s76
      %s78 = sphi 0, %s76
      %s79 = sphi 0, %s78
      %s93 = sphi 0, %s79
      %s97 = sphi 0, %s97
      %s99 = sphi 0, %s97
      %s100 = sphi 0, %s99
      %s114 = sphi 0, %s100
      %s118 = sphi 0, %s118
      %s120 = sphi 0, %s118
      %s121 = sphi 0, %s120
      %s135 = sphi 0, %s121
      %s139 = sphi 0, %s139
      %s141 = sphi 0, %s139
      %s142 = sphi 0, %s141
      %s156 = sphi 0, %s142
      %s160 = sphi 0, %s160
      %s162 = sphi 0, %s160
      %s163 = sphi 0, %s162
      %s177 = sphi 0, %s163
      %s183 = sphi 0, %s185
      %s186 = sphi 0, %s183
      %s187 = sphi 0, %s186
      %s203 = sphi 0, %s187
    $region4: #{tpu_custom_call.1} parent=1 // loop_header_branch
      %24 = sbr.rel (%p22) target = $region8
    $region5: #{tpu_custom_call.1} parent=1 // loop_body
      %s26 = ssub.s32 %s21, 1
      %s27 = ssub.s32 %s21, 2
      %s28 = sadd.s32 %s21, 1
      %s29 = ssub.s32 %s21, %s28
      %p30 = scmp.eq.s32.totalorder %s29, 0
      %s32 = sadd.s32 %s31, 1
      %s33 = scalar_select %p30, %s31, %s32
      %p36 = pneg %p30
      %p37 = scmp.eq.s32.totalorder %s21, 3
      %p38 = por %p36, %p37
      %p39 = scmp.ne.s32.totalorder %s31, %s34
      %p40 = scmp.eq.s32.totalorder %s21, 0
      %p41 = por %p39, %p40
      %p42 = scmp.ne.s32.totalorder %s31, %s34
      %p43 = scmp.eq.s32.totalorder %s26, 3
      %p44 = por %p42, %p43
      %p45 = scmp.ne.s32.totalorder %s34, %s35
      %p46 = scmp.eq.s32.totalorder %s26, 0
      %p47 = por %p45, %p46
      %p48 = scmp.ne.s32.totalorder %s34, %s35
      %p49 = scmp.eq.s32.totalorder %s27, 3
      %p50 = por %p48, %p49
      %p52 = scmp.ne.s32.totalorder %s35, %s51
      %p53 = scmp.eq.s32.totalorder %s27, 0
      %p54 = por %p52, %p53
      %s56 = sadd.s32 %s55, 1
      %p59 = scmp.eq.s32.totalorder %s21, 3
      %p60 = scmp.ne.s32.totalorder %s55, %s57
      %p61 = scmp.eq.s32.totalorder %s21, 0
      %p62 = por %p60, %p61
      %p63 = scmp.ne.s32.totalorder %s55, %s57
      %p64 = scmp.eq.s32.totalorder %s26, 3
      %p65 = por %p63, %p64
      %p66 = scmp.ne.s32.totalorder %s57, %s58
      %p67 = scmp.eq.s32.totalorder %s26, 0
      %p68 = por %p66, %p67
      %p69 = scmp.ne.s32.totalorder %s57, %s58
      %p70 = scmp.eq.s32.totalorder %s27, 3
      %p71 = por %p69, %p70
      %p73 = scmp.ne.s32.totalorder %s58, %s72
      %p74 = scmp.eq.s32.totalorder %s27, 0
      %p75 = por %p73, %p74
      %s77 = sadd.s32 %s76, 1
      %p80 = scmp.eq.s32.totalorder %s21, 3
      %p81 = scmp.ne.s32.totalorder %s76, %s78
      %p82 = scmp.eq.s32.totalorder %s21, 0
      %p83 = por %p81, %p82
      %p84 = scmp.ne.s32.totalorder %s76, %s78
      %p85 = scmp.eq.s32.totalorder %s26, 3
      %p86 = por %p84, %p85
      %p87 = scmp.ne.s32.totalorder %s78, %s79
      %p88 = scmp.eq.s32.totalorder %s26, 0
      %p89 = por %p87, %p88
      %p90 = scmp.ne.s32.totalorder %s78, %s79
      %p91 = scmp.eq.s32.totalorder %s27, 3
      %p92 = por %p90, %p91
      %p94 = scmp.ne.s32.totalorder %s79, %s93
      %p95 = scmp.eq.s32.totalorder %s27, 0
      %p96 = por %p94, %p95
      %s98 = sadd.s32 %s97, 1
      %p101 = scmp.eq.s32.totalorder %s21, 3
      %p102 = scmp.ne.s32.totalorder %s97, %s99
      %p103 = scmp.eq.s32.totalorder %s21, 0
      %p104 = por %p102, %p103
      %p105 = scmp.ne.s32.totalorder %s97, %s99
      %p106 = scmp.eq.s32.totalorder %s26, 3
      %p107 = por %p105, %p106
      %p108 = scmp.ne.s32.totalorder %s99, %s100
      %p109 = scmp.eq.s32.totalorder %s26, 0
      %p110 = por %p108, %p109
      %p111 = scmp.ne.s32.totalorder %s99, %s100
      %p112 = scmp.eq.s32.totalorder %s27, 3
      %p113 = por %p111, %p112
      %p115 = scmp.ne.s32.totalorder %s100, %s114
      %p116 = scmp.eq.s32.totalorder %s27, 0
      %p117 = por %p115, %p116
      %s119 = sadd.s32 %s118, 1
      %p122 = scmp.eq.s32.totalorder %s21, 3
      %p123 = scmp.ne.s32.totalorder %s118, %s120
      %p124 = scmp.eq.s32.totalorder %s21, 0
      %p125 = por %p123, %p124
      %p126 = scmp.ne.s32.totalorder %s118, %s120
      %p127 = scmp.eq.s32.totalorder %s26, 3
      %p128 = por %p126, %p127
      %p129 = scmp.ne.s32.totalorder %s120, %s121
      %p130 = scmp.eq.s32.totalorder %s26, 0
      %p131 = por %p129, %p130
      %p132 = scmp.ne.s32.totalorder %s120, %s121
      %p133 = scmp.eq.s32.totalorder %s27, 3
      %p134 = por %p132, %p133
      %p136 = scmp.ne.s32.totalorder %s121, %s135
      %p137 = scmp.eq.s32.totalorder %s27, 0
      %p138 = por %p136, %p137
      %s140 = sadd.s32 %s139, 1
      %p143 = scmp.eq.s32.totalorder %s21, 3
      %p144 = scmp.ne.s32.totalorder %s139, %s141
      %p145 = scmp.eq.s32.totalorder %s21, 0
      %p146 = por %p144, %p145
      %p147 = scmp.ne.s32.totalorder %s139, %s141
      %p148 = scmp.eq.s32.totalorder %s26, 3
      %p149 = por %p147, %p148
      %p150 = scmp.ne.s32.totalorder %s141, %s142
      %p151 = scmp.eq.s32.totalorder %s26, 0
      %p152 = por %p150, %p151
      %p153 = scmp.ne.s32.totalorder %s141, %s142
      %p154 = scmp.eq.s32.totalorder %s27, 3
      %p155 = por %p153, %p154
      %p157 = scmp.ne.s32.totalorder %s142, %s156
      %p158 = scmp.eq.s32.totalorder %s27, 0
      %p159 = por %p157, %p158
      %s161 = sadd.s32 %s160, 1
      %p164 = scmp.eq.s32.totalorder %s21, 3
      %p165 = scmp.ne.s32.totalorder %s160, %s162
      %p166 = scmp.eq.s32.totalorder %s21, 0
      %p167 = por %p165, %p166
      %p168 = scmp.ne.s32.totalorder %s160, %s162
      %p169 = scmp.eq.s32.totalorder %s26, 3
      %p170 = por %p168, %p169
      %p171 = scmp.ne.s32.totalorder %s162, %s163
      %p172 = scmp.eq.s32.totalorder %s26, 0
      %p173 = por %p171, %p172
      %p174 = scmp.ne.s32.totalorder %s162, %s163
      %p175 = scmp.eq.s32.totalorder %s27, 3
      %p176 = por %p174, %p175
      %p178 = scmp.ne.s32.totalorder %s163, %s177
      %p179 = scmp.eq.s32.totalorder %s27, 0
      %p180 = por %p178, %p179
      %s181 = ssub.s32 %s21, %s28
      %p182 = scmp.eq.s32.totalorder %s181, 0
      %s184 = sadd.s32 %s183, 1
      %s185 = scalar_select %p182, %s183, %s184
      %p188 = pneg %p182
      %p189 = scmp.eq.s32.totalorder %s21, 3
      %p190 = por %p188, %p189
      %p191 = scmp.ne.s32.totalorder %s183, %s186
      %p192 = scmp.eq.s32.totalorder %s21, 0
      %p193 = por %p191, %p192
      %p194 = scmp.ne.s32.totalorder %s183, %s186
      %p195 = scmp.eq.s32.totalorder %s26, 3
      %p196 = por %p194, %p195
      %p197 = scmp.ne.s32.totalorder %s186, %s187
      %p198 = scmp.eq.s32.totalorder %s26, 0
      %p199 = por %p197, %p198
      %p200 = scmp.ne.s32.totalorder %s186, %s187
      %p201 = scmp.eq.s32.totalorder %s27, 3
      %p202 = por %p200, %p201
      %p204 = scmp.ne.s32.totalorder %s187, %s203
      %p205 = scmp.eq.s32.totalorder %s27, 0
      %p206 = por %p204, %p205
      %p207 = scmp.le.s32.totalorder 1, %s21
      %p208 = scmp.lt.s32.totalorder %s21, 5
      %p209 = pnand %p207, %p208
      %p210 = pneg %p209
      // Predicated region
      $region9: #{tpu_custom_call.1} parent=5 // pred_check
        _
      $region10: #{tpu_custom_call.1} parent=5 // pred_check_branch
        %212 = sbr.rel (%p209) target = $region12
      $region11: #{tpu_custom_call.1} parent=5 // pred_region
        %s213 = ssub.s32 %s21, 1
        // Predicated region
        $region13: #{tpu_custom_call.1} parent=11 // pred_check
          %p214 = pneg %p68
        $region14: #{tpu_custom_call.1} parent=11 // pred_check_branch
          %216 = sbr.rel (%p214) target = $region16
        $region15: #{tpu_custom_call.1} parent=11 // pred_region
          %s218 = ssub.s32 1024, 1024
          %219 = vsyncadd [#allocation7], %s218
          %s220 = sshll.u32 [#allocation6], 4
          %s221 = int_to_ptr.vmem [resolvable:$true] %s220
          %226 = dma.hbm_to_vmem [thread:$0]  %s1, 1024, %s221, [#allocation7], 64, 64, 4
        $region16: #{tpu_custom_call.1} parent=11 // pred_fallthru
          _
        // Predicated region
        $region17: #{tpu_custom_call.1} parent=11 // pred_check
          %p227 = pneg %p89
        $region18: #{tpu_custom_call.1} parent=11 // pred_check_branch
          %229 = sbr.rel (%p227) target = $region20
        $region19: #{tpu_custom_call.1} parent=11 // pred_region
          _
        $region20: #{tpu_custom_call.1} parent=11 // pred_fallthru
          _
        // Predicated region
        $region21: #{tpu_custom_call.1} parent=11 // pred_check
          %p230 = pneg %p110
        $region22: #{tpu_custom_call.1} parent=11 // pred_check_branch
          %232 = sbr.rel (%p230) target = $region24
        $region23: #{tpu_custom_call.1} parent=11 // pred_region
          %s234 = ssub.s32 9216, 9216
          %235 = vsyncadd [#allocation7], %s234
          %s236 = sshll.u32 [#allocation8], 4
          %s237 = int_to_ptr.vmem [resolvable:$true] %s236
          %242 = dma.hbm_to_vmem [thread:$0]  %s3, 9216, %s237, [#allocation7], 64, 64, 4
        $region24: #{tpu_custom_call.1} parent=11 // pred_fallthru
          _
        // Predicated region
        $region25: #{tpu_custom_call.1} parent=11 // pred_check
          %p243 = pneg %p131
        $region26: #{tpu_custom_call.1} parent=11 // pred_check_branch
          %245 = sbr.rel (%p243) target = $region28
        $region27: #{tpu_custom_call.1} parent=11 // pred_region
          _
        $region28: #{tpu_custom_call.1} parent=11 // pred_fallthru
          _
        // Predicated region
        $region29: #{tpu_custom_call.1} parent=11 // pred_check
          %p246 = pneg %p152
        $region30: #{tpu_custom_call.1} parent=11 // pred_check_branch
          %248 = sbr.rel (%p246) target = $region32
        $region31: #{tpu_custom_call.1} parent=11 // pred_region
          %s250 = ssub.s32 1024, 1024
          %251 = vsyncadd [#allocation10], %s250
          %s252 = sshll.u32 [#allocation9], 4
          %s253 = int_to_ptr.vmem [resolvable:$true] %s252
          %258 = dma.hbm_to_vmem [thread:$0]  %s5, 1024, %s253, [#allocation10], 64, 64, 4
        $region32: #{tpu_custom_call.1} parent=11 // pred_fallthru
          _
        // Predicated region
        $region33: #{tpu_custom_call.1} parent=11 // pred_check
          %p259 = pneg %p173
        $region34: #{tpu_custom_call.1} parent=11 // pred_check_branch
          %261 = sbr.rel (%p259) target = $region36
        $region35: #{tpu_custom_call.1} parent=11 // pred_region
          _
        $region36: #{tpu_custom_call.1} parent=11 // pred_fallthru
          _
      $region12: #{tpu_custom_call.1} parent=5 // pred_fallthru
        _
      %p262 = scmp.lt.s32.totalorder %s21, 4
      // Predicated region
      $region37: #{tpu_custom_call.1} parent=5 // pred_check
        %p263 = pneg %p262
      $region38: #{tpu_custom_call.1} parent=5 // pred_check_branch
        %265 = sbr.rel (%p263) target = $region40
      $region39: #{tpu_custom_call.1} parent=5 // pred_region
        // Predicated region
        $region41: #{tpu_custom_call.1} parent=39 // pred_check
          %p266 = pneg %p41
        $region42: #{tpu_custom_call.1} parent=39 // pred_check_branch
          %268 = sbr.rel (%p266) target = $region44
        $region43: #{tpu_custom_call.1} parent=39 // pred_region
          %s269 = sand.u32 %s31, 1
          %s270 = scalar_lea.sflag [#allocation4], %s269
          %s271 = sand.u32 %s31, 1
          %s272 = smul.addr %s271, 256
          %s273 = scalar_lea.vmem [#allocation3], %s272
          %s274 = smul.u32 4, %s21
          %s276 = ssub.s32 4096, 4096
          %277 = vsyncadd %s270, %s276
          %s278 = smul.addr %s274, 8
          %s279 = smul.addr %s278, 128
          %s280 = scalar_lea.hbm %s0, %s279
          %s281 = sshll.u32 %s273, 4
          %s282 = int_to_ptr.vmem [resolvable:$true] %s281
          %287 = dma.hbm_to_vmem [thread:$0]  %s280, 4096, %s282, %s270, 128, 128, 8
        $region44: #{tpu_custom_call.1} parent=39 // pred_fallthru
          _
      $region40: #{tpu_custom_call.1} parent=5 // pred_fallthru
        _
      %p288 = scmp.le.s32.totalorder 1, %s21
      %p289 = scmp.lt.s32.totalorder %s21, 5
      %p290 = pnand %p288, %p289
      %p291 = pneg %p290
      // Predicated region
      $region45: #{tpu_custom_call.1} parent=5 // pred_check
        _
      $region46: #{tpu_custom_call.1} parent=5 // pred_check_branch
        %293 = sbr.rel (%p290) target = $region48
      $region47: #{tpu_custom_call.1} parent=5 // pred_region
        %s294 = ssub.s32 %s21, 1
        %s295 = sand.u32 %s34, 1
        %s296 = scalar_lea.sflag [#allocation4], %s295
        %s297 = sand.u32 %s34, 1
        %s298 = smul.addr %s297, 256
        %s299 = scalar_lea.vmem [#allocation3], %s298
        // Predicated region
        $region49: #{tpu_custom_call.1} parent=47 // pred_check
          %p300 = pneg %p47
        $region50: #{tpu_custom_call.1} parent=47 // pred_check_branch
          %302 = sbr.rel (%p300) target = $region52
        $region51: #{tpu_custom_call.1} parent=47 // pred_region
          %303 = dma.done %s296, 4096
        $region52: #{tpu_custom_call.1} parent=47 // pred_fallthru
          _
        // Predicated region
        $region53: #{tpu_custom_call.1} parent=47 // pred_check
          %p304 = pneg %p68
        $region54: #{tpu_custom_call.1} parent=47 // pred_check_branch
          %306 = sbr.rel (%p304) target = $region56
        $region55: #{tpu_custom_call.1} parent=47 // pred_region
          %307 = dma.done [#allocation7], 1024
        $region56: #{tpu_custom_call.1} parent=47 // pred_fallthru
          _
        // Predicated region
        $region57: #{tpu_custom_call.1} parent=47 // pred_check
          %p308 = pneg %p110
        $region58: #{tpu_custom_call.1} parent=47 // pred_check_branch
          %310 = sbr.rel (%p308) target = $region60
        $region59: #{tpu_custom_call.1} parent=47 // pred_region
          %311 = dma.done [#allocation7], 9216
        $region60: #{tpu_custom_call.1} parent=47 // pred_fallthru
          _
        // Predicated region
        $region61: #{tpu_custom_call.1} parent=47 // pred_check
          %p312 = pneg %p152
        $region62: #{tpu_custom_call.1} parent=47 // pred_check_branch
          %314 = sbr.rel (%p312) target = $region64
        $region63: #{tpu_custom_call.1} parent=47 // pred_region
          %315 = dma.done [#allocation10], 1024
        $region64: #{tpu_custom_call.1} parent=47 // pred_fallthru
          _
        %s316 = sand.u32 %s34, 1
        %s317 = scalar_lea.sflag [#allocation4], %s316
        %s318 = sand.u32 %s34, 1
        %s319 = smul.addr %s318, 256
        %s320 = scalar_lea.vmem [#allocation3], %s319
        %p321 = pneg %p47
        %p322 = pneg %p44
        %p323 = pneg %p68
        %p324 = pneg %p65
        %p325 = pneg %p89
        %p326 = pneg %p86
        %p327 = pneg %p110
        %p328 = pneg %p107
        %p329 = pneg %p131
        %p330 = pneg %p128
        %p331 = pneg %p152
        %p332 = pneg %p149
        %p333 = pneg %p173
        %p334 = pneg %p170
        %p335 = pneg %p199
        %p336 = pneg %p196
        %s337 = sand.u32 %s186, 1
        %s338 = scalar_lea.sflag [#allocation5], %s337
        %s339 = sand.u32 %s186, 1
        %s340 = smul.addr %s339, 256
        %s341 = scalar_lea.vmem [#allocation11], %s340
        %s342 = smul.u32 4, %s26
        %s343 = smul.u32 4, %s26
        %v345 = vld [vmem:[%s299] sm:$0xff]
        %v346 = vld [vmem:[%s299 + $0x8] sm:$0xff]
        %v347 = vld [vmem:[%s299 + $0x10] sm:$0xff]
        %v348 = vld [vmem:[%s299 + $0x18] sm:$0xff]
        %v349 = vld [vmem:[%s299 + $0x20] sm:$0xff]
        %v350 = vld [vmem:[%s299 + $0x28] sm:$0xff]
        %v351 = vld [vmem:[%s299 + $0x30] sm:$0xff]
        %v352 = vld [vmem:[%s299 + $0x38] sm:$0xff]
        %v353 = vld [vmem:[%s299 + $0x40] sm:$0xff]
        %v354 = vld [vmem:[%s299 + $0x48] sm:$0xff]
        %v355 = vld [vmem:[%s299 + $0x50] sm:$0xff]
        %v356 = vld [vmem:[%s299 + $0x58] sm:$0xff]
        %v357 = vld [vmem:[%s299 + $0x60] sm:$0xff]
        %v358 = vld [vmem:[%s299 + $0x68] sm:$0xff]
        %v359 = vld [vmem:[%s299 + $0x70] sm:$0xff]
        %v360 = vld [vmem:[%s299 + $0x78] sm:$0xff]
        %v361 = vld [vmem:[%s299 + $0x80] sm:$0xff]
        %v362 = vld [vmem:[%s299 + $0x88] sm:$0xff]
        %v363 = vld [vmem:[%s299 + $0x90] sm:$0xff]
        %v364 = vld [vmem:[%s299 + $0x98] sm:$0xff]
        %v365 = vld [vmem:[%s299 + $0xa0] sm:$0xff]
        %v366 = vld [vmem:[%s299 + $0xa8] sm:$0xff]
        %v367 = vld [vmem:[%s299 + $0xb0] sm:$0xff]
        %v368 = vld [vmem:[%s299 + $0xb8] sm:$0xff]
        %v369 = vld [vmem:[%s299 + $0xc0] sm:$0xff]
        %v370 = vld [vmem:[%s299 + $0xc8] sm:$0xff]
        %v371 = vld [vmem:[%s299 + $0xd0] sm:$0xff]
        %v372 = vld [vmem:[%s299 + $0xd8] sm:$0xff]
        %v373 = vld [vmem:[%s299 + $0xe0] sm:$0xff]
        %v374 = vld [vmem:[%s299 + $0xe8] sm:$0xff]
        %v375 = vld [vmem:[%s299 + $0xf0] sm:$0xff]
        %v376 = vld [vmem:[%s299 + $0xf8] sm:$0xff]
        %v377 = vpack.c.bf16 %v346, %v345
        %v378 = vpack.c.bf16 %v348, %v347
        %v379 = vpack.c.bf16 %v350, %v349
        %v380 = vpack.c.bf16 %v352, %v351
        %v381 = vpack.c.bf16 %v354, %v353
        %v382 = vpack.c.bf16 %v356, %v355
        %v383 = vpack.c.bf16 %v358, %v357
        %v384 = vpack.c.bf16 %v360, %v359
        %v385 = vpack.c.bf16 %v362, %v361
        %v386 = vpack.c.bf16 %v364, %v363
        %v387 = vpack.c.bf16 %v366, %v365
        %v388 = vpack.c.bf16 %v368, %v367
        %v389 = vpack.c.bf16 %v370, %v369
        %v390 = vpack.c.bf16 %v372, %v371
        %v391 = vpack.c.bf16 %v374, %v373
        %v392 = vpack.c.bf16 %v376, %v375
        %v393 = vld [vmem:[#allocation6] sm:$0xf]
        %v394 = vld [vmem:[#allocation6 + $0x4] sm:$0xf]
        %v395 = vld [vmem:[#allocation6 + $0x8] sm:$0xf]
        %v396 = vld [vmem:[#allocation6 + $0xc] sm:$0xf]
        %v397 = vld [vmem:[#allocation6 + $0x10] sm:$0xf]
        %v398 = vld [vmem:[#allocation6 + $0x14] sm:$0xf]
        %v399 = vld [vmem:[#allocation6 + $0x18] sm:$0xf]
        %v400 = vld [vmem:[#allocation6 + $0x1c] sm:$0xf]
        %v401 = vld [vmem:[#allocation6 + $0x20] sm:$0xf]
        %v402 = vld [vmem:[#allocation6 + $0x24] sm:$0xf]
        %v403 = vld [vmem:[#allocation6 + $0x28] sm:$0xf]
        %v404 = vld [vmem:[#allocation6 + $0x2c] sm:$0xf]
        %v405 = vld [vmem:[#allocation6 + $0x30] sm:$0xf]
        %v406 = vld [vmem:[#allocation6 + $0x34] sm:$0xf]
        %v407 = vld [vmem:[#allocation6 + $0x38] sm:$0xf]
        %v408 = vld [vmem:[#allocation6 + $0x3c] sm:$0xf]
        %v409 = vld [vmem:[%s2] sm:$0x1]
        %v411 = vlaneseq
        %v412 = vshrl.u32 %v411, 7
        %v413 = vsub.s32 0, %v412
        %v414 = vrot.slane %v409, %v413
        %v432 = vunpack.c.l.b16 %v393
        %v433 = vunpack.c.l.b16 %v394
        %v434 = vunpack.c.l.b16 %v395
        %v435 = vunpack.c.l.b16 %v396
        %v436 = vunpack.c.l.b16 %v397
        %v437 = vunpack.c.l.b16 %v398
        %v438 = vunpack.c.l.b16 %v399
        %v439 = vunpack.c.l.b16 %v400
        %v440 = vunpack.c.l.b16 %v401
        %v441 = vunpack.c.l.b16 %v402
        %v442 = vunpack.c.l.b16 %v403
        %v443 = vunpack.c.l.b16 %v404
        %v444 = vunpack.c.l.b16 %v405
        %v445 = vunpack.c.l.b16 %v406
        %v446 = vunpack.c.l.b16 %v407
        %v447 = vunpack.c.l.b16 %v408
        %v448 = vpack.c.b16 %v433, %v432
        %v449 = vpack.c.b16 %v435, %v434
        %v450 = vpack.c.b16 %v437, %v436
        %v451 = vpack.c.b16 %v439, %v438
        %v452 = vpack.c.b16 %v441, %v440
        %v453 = vpack.c.b16 %v443, %v442
        %v454 = vpack.c.b16 %v445, %v444
        %v455 = vpack.c.b16 %v447, %v446
        %464 = vmatprep.subr.bf16.mxu0 0
        %465 = vmatpush1.bf16.msra.mxu0 %v448
        %466 = vmatprep.subr.bf16.mxu0 0
        %467 = vmatpush1.bf16.msra.mxu0 %v449
        %468 = vmatprep.subr.bf16.mxu0 0
        %469 = vmatpush1.bf16.msra.mxu0 %v450
        %470 = vmatprep.subr.bf16.mxu0 0
        %471 = vmatpush1.bf16.msra.mxu0 %v451
        %472 = vmatprep.subr.bf16.mxu0 0
        %473 = vmatpush1.bf16.msra.mxu0 %v452
        %474 = vmatprep.subr.bf16.mxu0 0
        %475 = vmatpush1.bf16.msra.mxu0 %v453
        %476 = vmatprep.subr.bf16.mxu0 0
        %477 = vmatpush1.bf16.msra.mxu0 %v454
        %478 = vmatprep.subr.bf16.mxu0 0
        %479 = vmatpush1.bf16.msra.mxu0 %v455
        %480 = vmatprep.subr.bf16.mxu0 0
        %481 = vmatpush1.bf16.msra.mxu0 0
        %482 = vmatprep.subr.bf16.mxu0 0
        %483 = vmatpush1.bf16.msra.mxu0 0
        %484 = vmatprep.subr.bf16.mxu0 0
        %485 = vmatpush1.bf16.msra.mxu0 0
        %486 = vmatprep.subr.bf16.mxu0 0
        %487 = vmatpush1.bf16.msra.mxu0 0
        %488 = vmatprep.subr.bf16.mxu0 0
        %489 = vmatpush1.bf16.msra.mxu0 0
        %490 = vmatprep.subr.bf16.mxu0 0
        %491 = vmatpush1.bf16.msra.mxu0 0
        %492 = vmatprep.subr.bf16.mxu0 0
        %493 = vmatpush1.bf16.msra.mxu0 0
        %494 = vmatprep.subr.bf16.mxu0 0
        %495 = vmatpush1.bf16.msra.mxu0 0
        %496 = vmatprep.mubr.bf16.mxu0 0
        %497 = vmatmul.mubr.bf16.gmra.mrb[0].mxu0 %v377
        %v498 = vpop.f32.mrb[0].mxu0
        %v499 = vadd.f32 %v414, %v498
        %v500 = vpop.f32.mrb[0].mxu0
        %v501 = vpop.f32.mrb[0].mxu0
        %v502 = vadd.f32 %v414, %v501
        %v503 = vpop.f32.mrb[0].mxu0
        %504 = vmatprep.mubr.bf16.mxu0 0
        %505 = vmatmul.mubr.bf16.gmra.mrb[0].mxu0 %v378
        %v506 = vpop.f32.mrb[0].mxu0
        %v507 = vadd.f32 %v414, %v506
        %v508 = vpop.f32.mrb[0].mxu0
        %v509 = vpop.f32.mrb[0].mxu0
        %v510 = vadd.f32 %v414, %v509
        %v511 = vpop.f32.mrb[0].mxu0
        %512 = vmatprep.mubr.bf16.mxu0 0
        %513 = vmatmul.mubr.bf16.gmra.mrb[0].mxu0 %v379
        %v514 = vpop.f32.mrb[0].mxu0
        %v515 = vadd.f32 %v414, %v514
        %v516 = vpop.f32.mrb[0].mxu0
        %v517 = vpop.f32.mrb[0].mxu0
        %v518 = vadd.f32 %v414, %v517
        %v519 = vpop.f32.mrb[0].mxu0
        %520 = vmatprep.mubr.bf16.mxu0 0
        %521 = vmatmul.mubr.bf16.gmra.mrb[0].mxu0 %v380
        %v522 = vpop.f32.mrb[0].mxu0
        %v523 = vadd.f32 %v414, %v522
        %v524 = vpop.f32.mrb[0].mxu0
        %v525 = vpop.f32.mrb[0].mxu0
        %v526 = vadd.f32 %v414, %v525
        %v527 = vpop.f32.mrb[0].mxu0
        %528 = vmatprep.mubr.bf16.mxu0 0
        %529 = vmatmul.mubr.bf16.gmra.mrb[0].mxu0 %v381
        %v530 = vpop.f32.mrb[0].mxu0
        %v531 = vadd.f32 %v414, %v530
        %v532 = vpop.f32.mrb[0].mxu0
        %v533 = vpop.f32.mrb[0].mxu0
        %v534 = vadd.f32 %v414, %v533
        %v535 = vpop.f32.mrb[0].mxu0
        %536 = vmatprep.mubr.bf16.mxu0 0
        %537 = vmatmul.mubr.bf16.gmra.mrb[0].mxu0 %v382
        %v538 = vpop.f32.mrb[0].mxu0
        %v539 = vadd.f32 %v414, %v538
        %v540 = vpop.f32.mrb[0].mxu0
        %v541 = vpop.f32.mrb[0].mxu0
        %v542 = vadd.f32 %v414, %v541
        %v543 = vpop.f32.mrb[0].mxu0
        %544 = vmatprep.mubr.bf16.mxu0 0
        %545 = vmatmul.mubr.bf16.gmra.mrb[0].mxu0 %v383
        %v546 = vpop.f32.mrb[0].mxu0
        %v547 = vadd.f32 %v414, %v546
        %v548 = vpop.f32.mrb[0].mxu0
        %v549 = vpop.f32.mrb[0].mxu0
        %v550 = vadd.f32 %v414, %v549
        %v551 = vpop.f32.mrb[0].mxu0
        %552 = vmatprep.mubr.bf16.mxu0 0
        %553 = vmatmul.mubr.bf16.gmra.mrb[0].mxu0 %v384
        %v554 = vpop.f32.mrb[0].mxu0
        %v555 = vadd.f32 %v414, %v554
        %v556 = vpop.f32.mrb[0].mxu0
        %v557 = vpop.f32.mrb[0].mxu0
        %v558 = vadd.f32 %v414, %v557
        %v559 = vpop.f32.mrb[0].mxu0
        %560 = vmatprep.mubr.bf16.mxu0 0
        %561 = vmatmul.mubr.bf16.gmra.mrb[0].mxu0 %v385
        %v562 = vpop.f32.mrb[0].mxu0
        %v563 = vadd.f32 %v414, %v562
        %v564 = vpop.f32.mrb[0].mxu0
        %v565 = vpop.f32.mrb[0].mxu0
        %v566 = vadd.f32 %v414, %v565
        %v567 = vpop.f32.mrb[0].mxu0
        %568 = vmatprep.mubr.bf16.mxu0 0
        %569 = vmatmul.mubr.bf16.gmra.mrb[0].mxu0 %v386
        %v570 = vpop.f32.mrb[0].mxu0
        %v571 = vadd.f32 %v414, %v570
        %v572 = vpop.f32.mrb[0].mxu0
        %v573 = vpop.f32.mrb[0].mxu0
        %v574 = vadd.f32 %v414, %v573
        %v575 = vpop.f32.mrb[0].mxu0
        %576 = vmatprep.mubr.bf16.mxu0 0
        %577 = vmatmul.mubr.bf16.gmra.mrb[0].mxu0 %v387
        %v578 = vpop.f32.mrb[0].mxu0
        %v579 = vadd.f32 %v414, %v578
        %v580 = vpop.f32.mrb[0].mxu0
        %v581 = vpop.f32.mrb[0].mxu0
        %v582 = vadd.f32 %v414, %v581
        %v583 = vpop.f32.mrb[0].mxu0
        %584 = vmatprep.mubr.bf16.mxu0 0
        %585 = vmatmul.mubr.bf16.gmra.mrb[0].mxu0 %v388
        %v586 = vpop.f32.mrb[0].mxu0
        %v587 = vadd.f32 %v414, %v586
        %v588 = vpop.f32.mrb[0].mxu0
        %v589 = vpop.f32.mrb[0].mxu0
        %v590 = vadd.f32 %v414, %v589
        %v591 = vpop.f32.mrb[0].mxu0
        %592 = vmatprep.mubr.bf16.mxu0 0
        %593 = vmatmul.mubr.bf16.gmra.mrb[0].mxu0 %v389
        %v594 = vpop.f32.mrb[0].mxu0
        %v595 = vadd.f32 %v414, %v594
        %v596 = vpop.f32.mrb[0].mxu0
        %v597 = vpop.f32.mrb[0].mxu0
        %v598 = vadd.f32 %v414, %v597
        %v599 = vpop.f32.mrb[0].mxu0
        %600 = vmatprep.mubr.bf16.mxu0 0
        %601 = vmatmul.mubr.bf16.gmra.mrb[0].mxu0 %v390
        %v602 = vpop.f32.mrb[0].mxu0
        %v603 = vadd.f32 %v414, %v602
        %v604 = vpop.f32.mrb[0].mxu0
        %v605 = vpop.f32.mrb[0].mxu0
        %v606 = vadd.f32 %v414, %v605
        %v607 = vpop.f32.mrb[0].mxu0
        %608 = vmatprep.mubr.bf16.mxu0 0
        %609 = vmatmul.mubr.bf16.gmra.mrb[0].mxu0 %v391
        %v610 = vpop.f32.mrb[0].mxu0
        %v611 = vadd.f32 %v414, %v610
        %v612 = vpop.f32.mrb[0].mxu0
        %v613 = vpop.f32.mrb[0].mxu0
        %v614 = vadd.f32 %v414, %v613
        %v615 = vpop.f32.mrb[0].mxu0
        %616 = vmatprep.mubr.bf16.mxu0 0
        %617 = vmatmul.mubr.bf16.gmra.mrb[0].mxu0 %v392
        %v618 = vpop.f32.mrb[0].mxu0
        %v619 = vadd.f32 %v414, %v618
        %v620 = vpop.f32.mrb[0].mxu0
        %v621 = vpop.f32.mrb[0].mxu0
        %v622 = vadd.f32 %v414, %v621
        %v623 = vpop.f32.mrb[0].mxu0
        %624 = vdwg.mxu0
        %v625 = vmax.f32 %v499, 0.0
        %v626 = vmax.f32 %v502, 0.0
        %v627 = vmax.f32 %v507, 0.0
        %v628 = vmax.f32 %v510, 0.0
        %v629 = vmax.f32 %v515, 0.0
        %v630 = vmax.f32 %v518, 0.0
        %v631 = vmax.f32 %v523, 0.0
        %v632 = vmax.f32 %v526, 0.0
        %v633 = vmax.f32 %v531, 0.0
        %v634 = vmax.f32 %v534, 0.0
        %v635 = vmax.f32 %v539, 0.0
        %v636 = vmax.f32 %v542, 0.0
        %v637 = vmax.f32 %v547, 0.0
        %v638 = vmax.f32 %v550, 0.0
        %v639 = vmax.f32 %v555, 0.0
        %v640 = vmax.f32 %v558, 0.0
        %v641 = vmax.f32 %v563, 0.0
        %v642 = vmax.f32 %v566, 0.0
        %v643 = vmax.f32 %v571, 0.0
        %v644 = vmax.f32 %v574, 0.0
        %v645 = vmax.f32 %v579, 0.0
        %v646 = vmax.f32 %v582, 0.0
        %v647 = vmax.f32 %v587, 0.0
        %v648 = vmax.f32 %v590, 0.0
        %v649 = vmax.f32 %v595, 0.0
        %v650 = vmax.f32 %v598, 0.0
        %v651 = vmax.f32 %v603, 0.0
        %v652 = vmax.f32 %v606, 0.0
        %v653 = vmax.f32 %v611, 0.0
        %v654 = vmax.f32 %v614, 0.0
        %v655 = vmax.f32 %v619, 0.0
        %v656 = vmax.f32 %v622, 0.0
        %657 = vst [vmem:[#allocation2] sm:$0xf] 0
        %658 = vst [vmem:[#allocation2 + $0x4] sm:$0x1] 0
        %659 = vst [vmem:[#allocation2 + $0x50] sm:$0xf] 0
        %660 = vst [vmem:[#allocation2 + $0x54] sm:$0x1] 0
        %661 = vst [vmem:[#allocation2 + $0xa0] sm:$0xf] 0
        %662 = vst [vmem:[#allocation2 + $0xa4] sm:$0x1] 0
        %663 = vst [vmem:[#allocation2 + $0xf0] sm:$0xf] 0
        %664 = vst [vmem:[#allocation2 + $0xf4] sm:$0x1] 0
        %s665 = scalar_lea.vmem [#allocation2], 72
        %666 = vst [vmem:[%s665] sm:$0xf] 0
        %667 = vst [vmem:[%s665 + $0x4] sm:$0x1] 0
        %668 = vst [vmem:[%s665 + $0x50] sm:$0xf] 0
        %669 = vst [vmem:[%s665 + $0x54] sm:$0x1] 0
        %670 = vst [vmem:[%s665 + $0xa0] sm:$0xf] 0
        %671 = vst [vmem:[%s665 + $0xa4] sm:$0x1] 0
        %672 = vst [vmem:[%s665 + $0xf0] sm:$0xf] 0
        %673 = vst [vmem:[%s665 + $0xf4] sm:$0x1] 0
        %s674 = scalar_lea.vmem [#allocation2], 8
        %vm675 = vcmask 1040384
        %vm676 = vsmask.f32 256
        %vm677 = vmand %vm675, %vm676
        %v678 = vld [vmem:[%s674] sm:$0x1]
        %v679 = vsel %vm677, 0, %v678
        %680 = vst [vmem:[%s674] sm:$0x1] %v679
        %v681 = vld [vmem:[%s674 + $0x8] sm:$0x1]
        %v682 = vsel %vm677, 0, %v681
        %683 = vst [vmem:[%s674 + $0x8] sm:$0x1] %v682
        %v684 = vld [vmem:[%s674 + $0x10] sm:$0x1]
        %v685 = vsel %vm677, 0, %v684
        %686 = vst [vmem:[%s674 + $0x10] sm:$0x1] %v685
        %v687 = vld [vmem:[%s674 + $0x18] sm:$0x1]
        %v688 = vsel %vm677, 0, %v687
        %689 = vst [vmem:[%s674 + $0x18] sm:$0x1] %v688
        %v690 = vld [vmem:[%s674 + $0x20] sm:$0x1]
        %v691 = vsel %vm677, 0, %v690
        %692 = vst [vmem:[%s674 + $0x20] sm:$0x1] %v691
        %v693 = vld [vmem:[%s674 + $0x28] sm:$0x1]
        %v694 = vsel %vm677, 0, %v693
        %695 = vst [vmem:[%s674 + $0x28] sm:$0x1] %v694
        %v696 = vld [vmem:[%s674 + $0x30] sm:$0x1]
        %v697 = vsel %vm677, 0, %v696
        %698 = vst [vmem:[%s674 + $0x30] sm:$0x1] %v697
        %v699 = vld [vmem:[%s674 + $0x38] sm:$0x1]
        %v700 = vsel %vm677, 0, %v699
        %701 = vst [vmem:[%s674 + $0x38] sm:$0x1] %v700
        %v702 = vld [vmem:[%s674 + $0x50] sm:$0x1]
        %v703 = vsel %vm677, 0, %v702
        %704 = vst [vmem:[%s674 + $0x50] sm:$0x1] %v703
        %v705 = vld [vmem:[%s674 + $0x58] sm:$0x1]
        %v706 = vsel %vm677, 0, %v705
        %707 = vst [vmem:[%s674 + $0x58] sm:$0x1] %v706
        %v708 = vld [vmem:[%s674 + $0x60] sm:$0x1]
        %v709 = vsel %vm677, 0, %v708
        %710 = vst [vmem:[%s674 + $0x60] sm:$0x1] %v709
        %v711 = vld [vmem:[%s674 + $0x68] sm:$0x1]
        %v712 = vsel %vm677, 0, %v711
        %713 = vst [vmem:[%s674 + $0x68] sm:$0x1] %v712
        %v714 = vld [vmem:[%s674 + $0x70] sm:$0x1]
        %v715 = vsel %vm677, 0, %v714
        %716 = vst [vmem:[%s674 + $0x70] sm:$0x1] %v715
        %v717 = vld [vmem:[%s674 + $0x78] sm:$0x1]
        %v718 = vsel %vm677, 0, %v717
        %719 = vst [vmem:[%s674 + $0x78] sm:$0x1] %v718
        %v720 = vld [vmem:[%s674 + $0x80] sm:$0x1]
        %v721 = vsel %vm677, 0, %v720
        %722 = vst [vmem:[%s674 + $0x80] sm:$0x1] %v721
        %v723 = vld [vmem:[%s674 + $0x88] sm:$0x1]
        %v724 = vsel %vm677, 0, %v723
        %725 = vst [vmem:[%s674 + $0x88] sm:$0x1] %v724
        %v726 = vld [vmem:[%s674 + $0xa0] sm:$0x1]
        %v727 = vsel %vm677, 0, %v726
        %728 = vst [vmem:[%s674 + $0xa0] sm:$0x1] %v727
        %v729 = vld [vmem:[%s674 + $0xa8] sm:$0x1]
        %v730 = vsel %vm677, 0, %v729
        %731 = vst [vmem:[%s674 + $0xa8] sm:$0x1] %v730
        %v732 = vld [vmem:[%s674 + $0xb0] sm:$0x1]
        %v733 = vsel %vm677, 0, %v732
        %734 = vst [vmem:[%s674 + $0xb0] sm:$0x1] %v733
        %v735 = vld [vmem:[%s674 + $0xb8] sm:$0x1]
        %v736 = vsel %vm677, 0, %v735
        %737 = vst [vmem:[%s674 + $0xb8] sm:$0x1] %v736
        %v738 = vld [vmem:[%s674 + $0xc0] sm:$0x1]
        %v739 = vsel %vm677, 0, %v738
        %740 = vst [vmem:[%s674 + $0xc0] sm:$0x1] %v739
        %v741 = vld [vmem:[%s674 + $0xc8] sm:$0x1]
        %v742 = vsel %vm677, 0, %v741
        %743 = vst [vmem:[%s674 + $0xc8] sm:$0x1] %v742
        %v744 = vld [vmem:[%s674 + $0xd0] sm:$0x1]
        %v745 = vsel %vm677, 0, %v744
        %746 = vst [vmem:[%s674 + $0xd0] sm:$0x1] %v745
        %v747 = vld [vmem:[%s674 + $0xd8] sm:$0x1]
        %v748 = vsel %vm677, 0, %v747
        %749 = vst [vmem:[%s674 + $0xd8] sm:$0x1] %v748
        %v750 = vld [vmem:[%s674 + $0xf0] sm:$0x1]
        %v751 = vsel %vm677, 0, %v750
        %752 = vst [vmem:[%s674 + $0xf0] sm:$0x1] %v751
        %v753 = vld [vmem:[%s674 + $0xf8] sm:$0x1]
        %v754 = vsel %vm677, 0, %v753
        %755 = vst [vmem:[%s674 + $0xf8] sm:$0x1] %v754
        %v756 = vld [vmem:[%s674 + $0x100] sm:$0x1]
        %v757 = vsel %vm677, 0, %v756
        %758 = vst [vmem:[%s674 + $0x100] sm:$0x1] %v757
        %v759 = vld [vmem:[%s674 + $0x108] sm:$0x1]
        %v760 = vsel %vm677, 0, %v759
        %761 = vst [vmem:[%s674 + $0x108] sm:$0x1] %v760
        %v762 = vld [vmem:[%s674 + $0x110] sm:$0x1]
        %v763 = vsel %vm677, 0, %v762
        %764 = vst [vmem:[%s674 + $0x110] sm:$0x1] %v763
        %v765 = vld [vmem:[%s674 + $0x118] sm:$0x1]
        %v766 = vsel %vm677, 0, %v765
        %767 = vst [vmem:[%s674 + $0x118] sm:$0x1] %v766
        %v768 = vld [vmem:[%s674 + $0x120] sm:$0x1]
        %v769 = vsel %vm677, 0, %v768
        %770 = vst [vmem:[%s674 + $0x120] sm:$0x1] %v769
        %v771 = vld [vmem:[%s674 + $0x128] sm:$0x1]
        %v772 = vsel %vm677, 0, %v771
        %773 = vst [vmem:[%s674 + $0x128] sm:$0x1] %v772
        %vm774 = vsmask.f32 7938
        %vm775 = vmand %vm675, %vm774
        %v776 = vld [vmem:[%s674 + $0x4] sm:$0x1]
        %v777 = vsel %vm775, 0, %v776
        %778 = vst [vmem:[%s674 + $0x4] sm:$0x1] %v777
        %v779 = vld [vmem:[%s674 + $0xc] sm:$0x1]
        %v780 = vsel %vm775, 0, %v779
        %781 = vst [vmem:[%s674 + $0xc] sm:$0x1] %v780
        %v782 = vld [vmem:[%s674 + $0x14] sm:$0x1]
        %v783 = vsel %vm775, 0, %v782
        %784 = vst [vmem:[%s674 + $0x14] sm:$0x1] %v783
        %v785 = vld [vmem:[%s674 + $0x1c] sm:$0x1]
        %v786 = vsel %vm775, 0, %v785
        %787 = vst [vmem:[%s674 + $0x1c] sm:$0x1] %v786
        %v788 = vld [vmem:[%s674 + $0x24] sm:$0x1]
        %v789 = vsel %vm775, 0, %v788
        %790 = vst [vmem:[%s674 + $0x24] sm:$0x1] %v789
        %v791 = vld [vmem:[%s674 + $0x2c] sm:$0x1]
        %v792 = vsel %vm775, 0, %v791
        %793 = vst [vmem:[%s674 + $0x2c] sm:$0x1] %v792
        %v794 = vld [vmem:[%s674 + $0x34] sm:$0x1]
        %v795 = vsel %vm775, 0, %v794
        %796 = vst [vmem:[%s674 + $0x34] sm:$0x1] %v795
        %v797 = vld [vmem:[%s674 + $0x3c] sm:$0x1]
        %v798 = vsel %vm775, 0, %v797
        %799 = vst [vmem:[%s674 + $0x3c] sm:$0x1] %v798
        %v800 = vld [vmem:[%s674 + $0x54] sm:$0x1]
        %v801 = vsel %vm775, 0, %v800
        %802 = vst [vmem:[%s674 + $0x54] sm:$0x1] %v801
        %v803 = vld [vmem:[%s674 + $0x5c] sm:$0x1]
        %v804 = vsel %vm775, 0, %v803
        %805 = vst [vmem:[%s674 + $0x5c] sm:$0x1] %v804
        %v806 = vld [vmem:[%s674 + $0x64] sm:$0x1]
        %v807 = vsel %vm775, 0, %v806
        %808 = vst [vmem:[%s674 + $0x64] sm:$0x1] %v807
        %v809 = vld [vmem:[%s674 + $0x6c] sm:$0x1]
        %v810 = vsel %vm775, 0, %v809
        %811 = vst [vmem:[%s674 + $0x6c] sm:$0x1] %v810
        %v812 = vld [vmem:[%s674 + $0x74] sm:$0x1]
        %v813 = vsel %vm775, 0, %v812
        %814 = vst [vmem:[%s674 + $0x74] sm:$0x1] %v813
        %v815 = vld [vmem:[%s674 + $0x7c] sm:$0x1]
        %v816 = vsel %vm775, 0, %v815
        %817 = vst [vmem:[%s674 + $0x7c] sm:$0x1] %v816
        %v818 = vld [vmem:[%s674 + $0x84] sm:$0x1]
        %v819 = vsel %vm775, 0, %v818
        %820 = vst [vmem:[%s674 + $0x84] sm:$0x1] %v819
        %v821 = vld [vmem:[%s674 + $0x8c] sm:$0x1]
        %v822 = vsel %vm775, 0, %v821
        %823 = vst [vmem:[%s674 + $0x8c] sm:$0x1] %v822
        %v824 = vld [vmem:[%s674 + $0xa4] sm:$0x1]
        %v825 = vsel %vm775, 0, %v824
        %826 = vst [vmem:[%s674 + $0xa4] sm:$0x1] %v825
        %v827 = vld [vmem:[%s674 + $0xac] sm:$0x1]
        %v828 = vsel %vm775, 0, %v827
        %829 = vst [vmem:[%s674 + $0xac] sm:$0x1] %v828
        %v830 = vld [vmem:[%s674 + $0xb4] sm:$0x1]
        %v831 = vsel %vm775, 0, %v830
        %832 = vst [vmem:[%s674 + $0xb4] sm:$0x1] %v831
        %v833 = vld [vmem:[%s674 + $0xbc] sm:$0x1]
        %v834 = vsel %vm775, 0, %v833
        %835 = vst [vmem:[%s674 + $0xbc] sm:$0x1] %v834
        %v836 = vld [vmem:[%s674 + $0xc4] sm:$0x1]
        %v837 = vsel %vm775, 0, %v836
        %838 = vst [vmem:[%s674 + $0xc4] sm:$0x1] %v837
        %v839 = vld [vmem:[%s674 + $0xcc] sm:$0x1]
        %v840 = vsel %vm775, 0, %v839
        %841 = vst [vmem:[%s674 + $0xcc] sm:$0x1] %v840
        %v842 = vld [vmem:[%s674 + $0xd4] sm:$0x1]
        %v843 = vsel %vm775, 0, %v842
        %844 = vst [vmem:[%s674 + $0xd4] sm:$0x1] %v843
        %v845 = vld [vmem:[%s674 + $0xdc] sm:$0x1]
        %v846 = vsel %vm775, 0, %v845
        %847 = vst [vmem:[%s674 + $0xdc] sm:$0x1] %v846
        %v848 = vld [vmem:[%s674 + $0xf4] sm:$0x1]
        %v849 = vsel %vm775, 0, %v848
        %850 = vst [vmem:[%s674 + $0xf4] sm:$0x1] %v849
        %v851 = vld [vmem:[%s674 + $0xfc] sm:$0x1]
        %v852 = vsel %vm775, 0, %v851
        %853 = vst [vmem:[%s674 + $0xfc] sm:$0x1] %v852
        %v854 = vld [vmem:[%s674 + $0x104] sm:$0x1]
        %v855 = vsel %vm775, 0, %v854
        %856 = vst [vmem:[%s674 + $0x104] sm:$0x1] %v855
        %v857 = vld [vmem:[%s674 + $0x10c] sm:$0x1]
        %v858 = vsel %vm775, 0, %v857
        %859 = vst [vmem:[%s674 + $0x10c] sm:$0x1] %v858
        %v860 = vld [vmem:[%s674 + $0x114] sm:$0x1]
        %v861 = vsel %vm775, 0, %v860
        %862 = vst [vmem:[%s674 + $0x114] sm:$0x1] %v861
        %v863 = vld [vmem:[%s674 + $0x11c] sm:$0x1]
        %v864 = vsel %vm775, 0, %v863
        %865 = vst [vmem:[%s674 + $0x11c] sm:$0x1] %v864
        %v866 = vld [vmem:[%s674 + $0x124] sm:$0x1]
        %v867 = vsel %vm775, 0, %v866
        %868 = vst [vmem:[%s674 + $0x124] sm:$0x1] %v867
        %v869 = vld [vmem:[%s674 + $0x12c] sm:$0x1]
        %v870 = vsel %vm775, 0, %v869
        %871 = vst [vmem:[%s674 + $0x12c] sm:$0x1] %v870
        %v872 = vpack.c.bf16 %v626, %v625
        %v873 = vpack.c.bf16 %v628, %v627
        %v874 = vpack.c.bf16 %v630, %v629
        %v875 = vpack.c.bf16 %v632, %v631
        %v876 = vpack.c.bf16 %v634, %v633
        %v877 = vpack.c.bf16 %v636, %v635
        %v878 = vpack.c.bf16 %v638, %v637
        %v879 = vpack.c.bf16 %v640, %v639
        %v880 = vpack.c.bf16 %v642, %v641
        %v881 = vpack.c.bf16 %v644, %v643
        %v882 = vpack.c.bf16 %v646, %v645
        %v883 = vpack.c.bf16 %v648, %v647
        %v884 = vpack.c.bf16 %v650, %v649
        %v885 = vpack.c.bf16 %v652, %v651
        %v886 = vpack.c.bf16 %v654, %v653
        %v887 = vpack.c.bf16 %v656, %v655
        %v904 = vunpack.c.l.b16 %v872
        %v905 = vunpack.c.h.b16 %v872
        %v906 = vunpack.c.l.b16 %v873
        %v907 = vunpack.c.h.b16 %v873
        %v908 = vunpack.c.l.b16 %v874
        %v909 = vunpack.c.h.b16 %v874
        %v910 = vunpack.c.l.b16 %v875
        %v911 = vunpack.c.h.b16 %v875
        %v912 = vunpack.c.l.b16 %v876
        %v913 = vunpack.c.h.b16 %v876
        %v914 = vunpack.c.l.b16 %v877
        %v915 = vunpack.c.h.b16 %v877
        %v916 = vunpack.c.l.b16 %v878
        %v917 = vunpack.c.h.b16 %v878
        %v918 = vunpack.c.l.b16 %v879
        %v919 = vunpack.c.h.b16 %v879
        %v920 = vunpack.c.l.b16 %v880
        %v921 = vunpack.c.h.b16 %v880
        %v922 = vunpack.c.l.b16 %v881
        %v923 = vunpack.c.h.b16 %v881
        %v924 = vunpack.c.l.b16 %v882
        %v925 = vunpack.c.h.b16 %v882
        %v926 = vunpack.c.l.b16 %v883
        %v927 = vunpack.c.h.b16 %v883
        %v928 = vunpack.c.l.b16 %v884
        %v929 = vunpack.c.h.b16 %v884
        %v930 = vunpack.c.l.b16 %v885
        %v931 = vunpack.c.h.b16 %v885
        %v932 = vunpack.c.l.b16 %v886
        %v933 = vunpack.c.h.b16 %v886
        %v934 = vunpack.c.l.b16 %v887
        %v935 = vunpack.c.h.b16 %v887
        %v936 = vpack.c.b16 %v904, %v904
        %v937 = vpack.c.b16 %v905, %v905
        %v938 = vpack.c.b16 %v906, %v906
        %v939 = vpack.c.b16 %v907, %v907
        %v940 = vpack.c.b16 %v908, %v908
        %v941 = vpack.c.b16 %v909, %v909
        %v942 = vpack.c.b16 %v910, %v910
        %v943 = vpack.c.b16 %v911, %v911
        %v944 = vpack.c.b16 %v912, %v912
        %v945 = vpack.c.b16 %v913, %v913
        %v946 = vpack.c.b16 %v914, %v914
        %v947 = vpack.c.b16 %v915, %v915
        %v948 = vpack.c.b16 %v916, %v916
        %v949 = vpack.c.b16 %v917, %v917
        %v950 = vpack.c.b16 %v918, %v918
        %v951 = vpack.c.b16 %v919, %v919
        %v952 = vpack.c.b16 %v920, %v920
        %v953 = vpack.c.b16 %v921, %v921
        %v954 = vpack.c.b16 %v922, %v922
        %v955 = vpack.c.b16 %v923, %v923
        %v956 = vpack.c.b16 %v924, %v924
        %v957 = vpack.c.b16 %v925, %v925
        %v958 = vpack.c.b16 %v926, %v926
        %v959 = vpack.c.b16 %v927, %v927
        %v960 = vpack.c.b16 %v928, %v928
        %v961 = vpack.c.b16 %v929, %v929
        %v962 = vpack.c.b16 %v930, %v930
        %v963 = vpack.c.b16 %v931, %v931
        %v964 = vpack.c.b16 %v932, %v932
        %v965 = vpack.c.b16 %v933, %v933
        %v966 = vpack.c.b16 %v934, %v934
        %v967 = vpack.c.b16 %v935, %v935
        %v969 = vshrl.u32 %v936, 16
        %v971 = vrot.slane %v969, 7
        %v972 = vshll.u32 %v936, 16
        %v974 = vor.u32 %v971, %v972
        %v975 = vrot.slane %v971, 4
        %v977 = vshrl.u32 %v937, 16
        %v979 = vrot.slane %v977, 7
        %v980 = vshll.u32 %v937, 16
        %v982 = vor.u32 %v979, %v980
        %v983 = vrot.slane %v979, 4
        %v985 = vshrl.u32 %v938, 16
        %v987 = vrot.slane %v985, 7
        %v988 = vshll.u32 %v938, 16
        %v990 = vor.u32 %v987, %v988
        %v991 = vrot.slane %v987, 4
        %v993 = vshrl.u32 %v939, 16
        %v995 = vrot.slane %v993, 7
        %v996 = vshll.u32 %v939, 16
        %v998 = vor.u32 %v995, %v996
        %v999 = vrot.slane %v995, 4
        %v1001 = vshrl.u32 %v940, 16
        %v1003 = vrot.slane %v1001, 7
        %v1004 = vshll.u32 %v940, 16
        %v1006 = vor.u32 %v1003, %v1004
        %v1007 = vrot.slane %v1003, 4
        %v1009 = vshrl.u32 %v941, 16
        %v1011 = vrot.slane %v1009, 7
        %v1012 = vshll.u32 %v941, 16
        %v1014 = vor.u32 %v1011, %v1012
        %v1015 = vrot.slane %v1011, 4
        %v1017 = vshrl.u32 %v942, 16
        %v1019 = vrot.slane %v1017, 7
        %v1020 = vshll.u32 %v942, 16
        %v1022 = vor.u32 %v1019, %v1020
        %v1023 = vrot.slane %v1019, 4
        %v1025 = vshrl.u32 %v943, 16
        %v1027 = vrot.slane %v1025, 7
        %v1028 = vshll.u32 %v943, 16
        %v1030 = vor.u32 %v1027, %v1028
        %v1031 = vrot.slane %v1027, 4
        %v1033 = vshrl.u32 %v944, 16
        %v1035 = vrot.slane %v1033, 7
        %v1036 = vshll.u32 %v944, 16
        %v1038 = vor.u32 %v1035, %v1036
        %v1039 = vrot.slane %v1035, 4
        %v1041 = vshrl.u32 %v945, 16
        %v1043 = vrot.slane %v1041, 7
        %v1044 = vshll.u32 %v945, 16
        %v1046 = vor.u32 %v1043, %v1044
        %v1047 = vrot.slane %v1043, 4
        %v1049 = vshrl.u32 %v946, 16
        %v1051 = vrot.slane %v1049, 7
        %v1052 = vshll.u32 %v946, 16
        %v1054 = vor.u32 %v1051, %v1052
        %v1055 = vrot.slane %v1051, 4
        %v1057 = vshrl.u32 %v947, 16
        %v1059 = vrot.slane %v1057, 7
        %v1060 = vshll.u32 %v947, 16
        %v1062 = vor.u32 %v1059, %v1060
        %v1063 = vrot.slane %v1059, 4
        %v1065 = vshrl.u32 %v948, 16
        %v1067 = vrot.slane %v1065, 7
        %v1068 = vshll.u32 %v948, 16
        %v1070 = vor.u32 %v1067, %v1068
        %v1071 = vrot.slane %v1067, 4
        %v1073 = vshrl.u32 %v949, 16
        %v1075 = vrot.slane %v1073, 7
        %v1076 = vshll.u32 %v949, 16
        %v1078 = vor.u32 %v1075, %v1076
        %v1079 = vrot.slane %v1075, 4
        %v1081 = vshrl.u32 %v950, 16
        %v1083 = vrot.slane %v1081, 7
        %v1084 = vshll.u32 %v950, 16
        %v1086 = vor.u32 %v1083, %v1084
        %v1087 = vrot.slane %v1083, 4
        %v1089 = vshrl.u32 %v951, 16
        %v1091 = vrot.slane %v1089, 7
        %v1092 = vshll.u32 %v951, 16
        %v1094 = vor.u32 %v1091, %v1092
        %v1095 = vrot.slane %v1091, 4
        %v1097 = vshrl.u32 %v952, 16
        %v1099 = vrot.slane %v1097, 7
        %v1100 = vshll.u32 %v952, 16
        %v1102 = vor.u32 %v1099, %v1100
        %v1103 = vrot.slane %v1099, 4
        %v1105 = vshrl.u32 %v953, 16
        %v1107 = vrot.slane %v1105, 7
        %v1108 = vshll.u32 %v953, 16
        %v1110 = vor.u32 %v1107, %v1108
        %v1111 = vrot.slane %v1107, 4
        %v1113 = vshrl.u32 %v954, 16
        %v1115 = vrot.slane %v1113, 7
        %v1116 = vshll.u32 %v954, 16
        %v1118 = vor.u32 %v1115, %v1116
        %v1119 = vrot.slane %v1115, 4
        %v1121 = vshrl.u32 %v955, 16
        %v1123 = vrot.slane %v1121, 7
        %v1124 = vshll.u32 %v955, 16
        %v1126 = vor.u32 %v1123, %v1124
        %v1127 = vrot.slane %v1123, 4
        %v1129 = vshrl.u32 %v956, 16
        %v1131 = vrot.slane %v1129, 7
        %v1132 = vshll.u32 %v956, 16
        %v1134 = vor.u32 %v1131, %v1132
        %v1135 = vrot.slane %v1131, 4
        %v1137 = vshrl.u32 %v957, 16
        %v1139 = vrot.slane %v1137, 7
        %v1140 = vshll.u32 %v957, 16
        %v1142 = vor.u32 %v1139, %v1140
        %v1143 = vrot.slane %v1139, 4
        %v1145 = vshrl.u32 %v958, 16
        %v1147 = vrot.slane %v1145, 7
        %v1148 = vshll.u32 %v958, 16
        %v1150 = vor.u32 %v1147, %v1148
        %v1151 = vrot.slane %v1147, 4
        %v1153 = vshrl.u32 %v959, 16
        %v1155 = vrot.slane %v1153, 7
        %v1156 = vshll.u32 %v959, 16
        %v1158 = vor.u32 %v1155, %v1156
        %v1159 = vrot.slane %v1155, 4
        %v1161 = vshrl.u32 %v960, 16
        %v1163 = vrot.slane %v1161, 7
        %v1164 = vshll.u32 %v960, 16
        %v1166 = vor.u32 %v1163, %v1164
        %v1167 = vrot.slane %v1163, 4
        %v1169 = vshrl.u32 %v961, 16
        %v1171 = vrot.slane %v1169, 7
        %v1172 = vshll.u32 %v961, 16
        %v1174 = vor.u32 %v1171, %v1172
        %v1175 = vrot.slane %v1171, 4
        %v1177 = vshrl.u32 %v962, 16
        %v1179 = vrot.slane %v1177, 7
        %v1180 = vshll.u32 %v962, 16
        %v1182 = vor.u32 %v1179, %v1180
        %v1183 = vrot.slane %v1179, 4
        %v1185 = vshrl.u32 %v963, 16
        %v1187 = vrot.slane %v1185, 7
        %v1188 = vshll.u32 %v963, 16
        %v1190 = vor.u32 %v1187, %v1188
        %v1191 = vrot.slane %v1187, 4
        %v1193 = vshrl.u32 %v964, 16
        %v1195 = vrot.slane %v1193, 7
        %v1196 = vshll.u32 %v964, 16
        %v1198 = vor.u32 %v1195, %v1196
        %v1199 = vrot.slane %v1195, 4
        %v1201 = vshrl.u32 %v965, 16
        %v1203 = vrot.slane %v1201, 7
        %v1204 = vshll.u32 %v965, 16
        %v1206 = vor.u32 %v1203, %v1204
        %v1207 = vrot.slane %v1203, 4
        %v1209 = vshrl.u32 %v966, 16
        %v1211 = vrot.slane %v1209, 7
        %v1212 = vshll.u32 %v966, 16
        %v1214 = vor.u32 %v1211, %v1212
        %v1215 = vrot.slane %v1211, 4
        %v1217 = vshrl.u32 %v967, 16
        %v1219 = vrot.slane %v1217, 7
        %v1220 = vshll.u32 %v967, 16
        %v1222 = vor.u32 %v1219, %v1220
        %v1223 = vrot.slane %v1219, 4
        %vm1288 = vcmask 1043456
        %vm1289 = vmand %vm1288, %vm774
        %v1290 = vld [vmem:[%s674] sm:$0xf]
        %v1291 = vsel %vm1289, %v974, %v1290
        %1292 = vst [vmem:[%s674] sm:$0xf] %v1291
        %v1293 = vld [vmem:[%s674 + $0x4] sm:$0x1]
        %v1294 = vsel %vm677, %v975, %v1293
        %1295 = vst [vmem:[%s674 + $0x4] sm:$0x1] %v1294
        %v1296 = vld [vmem:[%s674 + $0x8] sm:$0xf]
        %v1297 = vsel %vm1289, %v982, %v1296
        %1298 = vst [vmem:[%s674 + $0x8] sm:$0xf] %v1297
        %v1299 = vld [vmem:[%s674 + $0xc] sm:$0x1]
        %v1300 = vsel %vm677, %v983, %v1299
        %1301 = vst [vmem:[%s674 + $0xc] sm:$0x1] %v1300
        %v1302 = vld [vmem:[%s674 + $0x10] sm:$0xf]
        %v1303 = vsel %vm1289, %v990, %v1302
        %1304 = vst [vmem:[%s674 + $0x10] sm:$0xf] %v1303
        %v1305 = vld [vmem:[%s674 + $0x14] sm:$0x1]
        %v1306 = vsel %vm677, %v991, %v1305
        %1307 = vst [vmem:[%s674 + $0x14] sm:$0x1] %v1306
        %v1308 = vld [vmem:[%s674 + $0x18] sm:$0xf]
        %v1309 = vsel %vm1289, %v998, %v1308
        %1310 = vst [vmem:[%s674 + $0x18] sm:$0xf] %v1309
        %v1311 = vld [vmem:[%s674 + $0x1c] sm:$0x1]
        %v1312 = vsel %vm677, %v999, %v1311
        %1313 = vst [vmem:[%s674 + $0x1c] sm:$0x1] %v1312
        %v1314 = vld [vmem:[%s674 + $0x20] sm:$0xf]
        %v1315 = vsel %vm1289, %v1006, %v1314
        %1316 = vst [vmem:[%s674 + $0x20] sm:$0xf] %v1315
        %v1317 = vld [vmem:[%s674 + $0x24] sm:$0x1]
        %v1318 = vsel %vm677, %v1007, %v1317
        %1319 = vst [vmem:[%s674 + $0x24] sm:$0x1] %v1318
        %v1320 = vld [vmem:[%s674 + $0x28] sm:$0xf]
        %v1321 = vsel %vm1289, %v1014, %v1320
        %1322 = vst [vmem:[%s674 + $0x28] sm:$0xf] %v1321
        %v1323 = vld [vmem:[%s674 + $0x2c] sm:$0x1]
        %v1324 = vsel %vm677, %v1015, %v1323
        %1325 = vst [vmem:[%s674 + $0x2c] sm:$0x1] %v1324
        %v1326 = vld [vmem:[%s674 + $0x30] sm:$0xf]
        %v1327 = vsel %vm1289, %v1022, %v1326
        %1328 = vst [vmem:[%s674 + $0x30] sm:$0xf] %v1327
        %v1329 = vld [vmem:[%s674 + $0x34] sm:$0x1]
        %v1330 = vsel %vm677, %v1023, %v1329
        %1331 = vst [vmem:[%s674 + $0x34] sm:$0x1] %v1330
        %v1332 = vld [vmem:[%s674 + $0x38] sm:$0xf]
        %v1333 = vsel %vm1289, %v1030, %v1332
        %1334 = vst [vmem:[%s674 + $0x38] sm:$0xf] %v1333
        %v1335 = vld [vmem:[%s674 + $0x3c] sm:$0x1]
        %v1336 = vsel %vm677, %v1031, %v1335
        %1337 = vst [vmem:[%s674 + $0x3c] sm:$0x1] %v1336
        %v1338 = vld [vmem:[%s674 + $0x50] sm:$0xf]
        %v1339 = vsel %vm1289, %v1038, %v1338
        %1340 = vst [vmem:[%s674 + $0x50] sm:$0xf] %v1339
        %v1341 = vld [vmem:[%s674 + $0x54] sm:$0x1]
        %v1342 = vsel %vm677, %v1039, %v1341
        %1343 = vst [vmem:[%s674 + $0x54] sm:$0x1] %v1342
        %v1344 = vld [vmem:[%s674 + $0x58] sm:$0xf]
        %v1345 = vsel %vm1289, %v1046, %v1344
        %1346 = vst [vmem:[%s674 + $0x58] sm:$0xf] %v1345
        %v1347 = vld [vmem:[%s674 + $0x5c] sm:$0x1]
        %v1348 = vsel %vm677, %v1047, %v1347
        %1349 = vst [vmem:[%s674 + $0x5c] sm:$0x1] %v1348
        %v1350 = vld [vmem:[%s674 + $0x60] sm:$0xf]
        %v1351 = vsel %vm1289, %v1054, %v1350
        %1352 = vst [vmem:[%s674 + $0x60] sm:$0xf] %v1351
        %v1353 = vld [vmem:[%s674 + $0x64] sm:$0x1]
        %v1354 = vsel %vm677, %v1055, %v1353
        %1355 = vst [vmem:[%s674 + $0x64] sm:$0x1] %v1354
        %v1356 = vld [vmem:[%s674 + $0x68] sm:$0xf]
        %v1357 = vsel %vm1289, %v1062, %v1356
        %1358 = vst [vmem:[%s674 + $0x68] sm:$0xf] %v1357
        %v1359 = vld [vmem:[%s674 + $0x6c] sm:$0x1]
        %v1360 = vsel %vm677, %v1063, %v1359
        %1361 = vst [vmem:[%s674 + $0x6c] sm:$0x1] %v1360
        %v1362 = vld [vmem:[%s674 + $0x70] sm:$0xf]
        %v1363 = vsel %vm1289, %v1070, %v1362
        %1364 = vst [vmem:[%s674 + $0x70] sm:$0xf] %v1363
        %v1365 = vld [vmem:[%s674 + $0x74] sm:$0x1]
        %v1366 = vsel %vm677, %v1071, %v1365
        %1367 = vst [vmem:[%s674 + $0x74] sm:$0x1] %v1366
        %v1368 = vld [vmem:[%s674 + $0x78] sm:$0xf]
        %v1369 = vsel %vm1289, %v1078, %v1368
        %1370 = vst [vmem:[%s674 + $0x78] sm:$0xf] %v1369
        %v1371 = vld [vmem:[%s674 + $0x7c] sm:$0x1]
        %v1372 = vsel %vm677, %v1079, %v1371
        %1373 = vst [vmem:[%s674 + $0x7c] sm:$0x1] %v1372
        %v1374 = vld [vmem:[%s674 + $0x80] sm:$0xf]
        %v1375 = vsel %vm1289, %v1086, %v1374
        %1376 = vst [vmem:[%s674 + $0x80] sm:$0xf] %v1375
        %v1377 = vld [vmem:[%s674 + $0x84] sm:$0x1]
        %v1378 = vsel %vm677, %v1087, %v1377
        %1379 = vst [vmem:[%s674 + $0x84] sm:$0x1] %v1378
        %v1380 = vld [vmem:[%s674 + $0x88] sm:$0xf]
        %v1381 = vsel %vm1289, %v1094, %v1380
        %1382 = vst [vmem:[%s674 + $0x88] sm:$0xf] %v1381
        %v1383 = vld [vmem:[%s674 + $0x8c] sm:$0x1]
        %v1384 = vsel %vm677, %v1095, %v1383
        %1385 = vst [vmem:[%s674 + $0x8c] sm:$0x1] %v1384
        %v1386 = vld [vmem:[%s674 + $0xa0] sm:$0xf]
        %v1387 = vsel %vm1289, %v1102, %v1386
        %1388 = vst [vmem:[%s674 + $0xa0] sm:$0xf] %v1387
        %v1389 = vld [vmem:[%s674 + $0xa4] sm:$0x1]
        %v1390 = vsel %vm677, %v1103, %v1389
        %1391 = vst [vmem:[%s674 + $0xa4] sm:$0x1] %v1390
        %v1392 = vld [vmem:[%s674 + $0xa8] sm:$0xf]
        %v1393 = vsel %vm1289, %v1110, %v1392
        %1394 = vst [vmem:[%s674 + $0xa8] sm:$0xf] %v1393
        %v1395 = vld [vmem:[%s674 + $0xac] sm:$0x1]
        %v1396 = vsel %vm677, %v1111, %v1395
        %1397 = vst [vmem:[%s674 + $0xac] sm:$0x1] %v1396
        %v1398 = vld [vmem:[%s674 + $0xb0] sm:$0xf]
        %v1399 = vsel %vm1289, %v1118, %v1398
        %1400 = vst [vmem:[%s674 + $0xb0] sm:$0xf] %v1399
        %v1401 = vld [vmem:[%s674 + $0xb4] sm:$0x1]
        %v1402 = vsel %vm677, %v1119, %v1401
        %1403 = vst [vmem:[%s674 + $0xb4] sm:$0x1] %v1402
        %v1404 = vld [vmem:[%s674 + $0xb8] sm:$0xf]
        %v1405 = vsel %vm1289, %v1126, %v1404
        %1406 = vst [vmem:[%s674 + $0xb8] sm:$0xf] %v1405
        %v1407 = vld [vmem:[%s674 + $0xbc] sm:$0x1]
        %v1408 = vsel %vm677, %v1127, %v1407
        %1409 = vst [vmem:[%s674 + $0xbc] sm:$0x1] %v1408
        %v1410 = vld [vmem:[%s674 + $0xc0] sm:$0xf]
        %v1411 = vsel %vm1289, %v1134, %v1410
        %1412 = vst [vmem:[%s674 + $0xc0] sm:$0xf] %v1411
        %v1413 = vld [vmem:[%s674 + $0xc4] sm:$0x1]
        %v1414 = vsel %vm677, %v1135, %v1413
        %1415 = vst [vmem:[%s674 + $0xc4] sm:$0x1] %v1414
        %v1416 = vld [vmem:[%s674 + $0xc8] sm:$0xf]
        %v1417 = vsel %vm1289, %v1142, %v1416
        %1418 = vst [vmem:[%s674 + $0xc8] sm:$0xf] %v1417
        %v1419 = vld [vmem:[%s674 + $0xcc] sm:$0x1]
        %v1420 = vsel %vm677, %v1143, %v1419
        %1421 = vst [vmem:[%s674 + $0xcc] sm:$0x1] %v1420
        %v1422 = vld [vmem:[%s674 + $0xd0] sm:$0xf]
        %v1423 = vsel %vm1289, %v1150, %v1422
        %1424 = vst [vmem:[%s674 + $0xd0] sm:$0xf] %v1423
        %v1425 = vld [vmem:[%s674 + $0xd4] sm:$0x1]
        %v1426 = vsel %vm677, %v1151, %v1425
        %1427 = vst [vmem:[%s674 + $0xd4] sm:$0x1] %v1426
        %v1428 = vld [vmem:[%s674 + $0xd8] sm:$0xf]
        %v1429 = vsel %vm1289, %v1158, %v1428
        %1430 = vst [vmem:[%s674 + $0xd8] sm:$0xf] %v1429
        %v1431 = vld [vmem:[%s674 + $0xdc] sm:$0x1]
        %v1432 = vsel %vm677, %v1159, %v1431
        %1433 = vst [vmem:[%s674 + $0xdc] sm:$0x1] %v1432
        %v1434 = vld [vmem:[%s674 + $0xf0] sm:$0xf]
        %v1435 = vsel %vm1289, %v1166, %v1434
        %1436 = vst [vmem:[%s674 + $0xf0] sm:$0xf] %v1435
        %v1437 = vld [vmem:[%s674 + $0xf4] sm:$0x1]
        %v1438 = vsel %vm677, %v1167, %v1437
        %1439 = vst [vmem:[%s674 + $0xf4] sm:$0x1] %v1438
        %v1440 = vld [vmem:[%s674 + $0xf8] sm:$0xf]
        %v1441 = vsel %vm1289, %v1174, %v1440
        %1442 = vst [vmem:[%s674 + $0xf8] sm:$0xf] %v1441
        %v1443 = vld [vmem:[%s674 + $0xfc] sm:$0x1]
        %v1444 = vsel %vm677, %v1175, %v1443
        %1445 = vst [vmem:[%s674 + $0xfc] sm:$0x1] %v1444
        %v1446 = vld [vmem:[%s674 + $0x100] sm:$0xf]
        %v1447 = vsel %vm1289, %v1182, %v1446
        %1448 = vst [vmem:[%s674 + $0x100] sm:$0xf] %v1447
        %v1449 = vld [vmem:[%s674 + $0x104] sm:$0x1]
        %v1450 = vsel %vm677, %v1183, %v1449
        %1451 = vst [vmem:[%s674 + $0x104] sm:$0x1] %v1450
        %v1452 = vld [vmem:[%s674 + $0x108] sm:$0xf]
        %v1453 = vsel %vm1289, %v1190, %v1452
        %1454 = vst [vmem:[%s674 + $0x108] sm:$0xf] %v1453
        %v1455 = vld [vmem:[%s674 + $0x10c] sm:$0x1]
        %v1456 = vsel %vm677, %v1191, %v1455
        %1457 = vst [vmem:[%s674 + $0x10c] sm:$0x1] %v1456
        %v1458 = vld [vmem:[%s674 + $0x110] sm:$0xf]
        %v1459 = vsel %vm1289, %v1198, %v1458
        %1460 = vst [vmem:[%s674 + $0x110] sm:$0xf] %v1459
        %v1461 = vld [vmem:[%s674 + $0x114] sm:$0x1]
        %v1462 = vsel %vm677, %v1199, %v1461
        %1463 = vst [vmem:[%s674 + $0x114] sm:$0x1] %v1462
        %v1464 = vld [vmem:[%s674 + $0x118] sm:$0xf]
        %v1465 = vsel %vm1289, %v1206, %v1464
        %1466 = vst [vmem:[%s674 + $0x118] sm:$0xf] %v1465
        %v1467 = vld [vmem:[%s674 + $0x11c] sm:$0x1]
        %v1468 = vsel %vm677, %v1207, %v1467
        %1469 = vst [vmem:[%s674 + $0x11c] sm:$0x1] %v1468
        %v1470 = vld [vmem:[%s674 + $0x120] sm:$0xf]
        %v1471 = vsel %vm1289, %v1214, %v1470
        %1472 = vst [vmem:[%s674 + $0x120] sm:$0xf] %v1471
        %v1473 = vld [vmem:[%s674 + $0x124] sm:$0x1]
        %v1474 = vsel %vm677, %v1215, %v1473
        %1475 = vst [vmem:[%s674 + $0x124] sm:$0x1] %v1474
        %v1476 = vld [vmem:[%s674 + $0x128] sm:$0xf]
        %v1477 = vsel %vm1289, %v1222, %v1476
        %1478 = vst [vmem:[%s674 + $0x128] sm:$0xf] %v1477
        %v1479 = vld [vmem:[%s674 + $0x12c] sm:$0x1]
        %v1480 = vsel %vm677, %v1223, %v1479
        %1481 = vst [vmem:[%s674 + $0x12c] sm:$0x1] %v1480
        %v1482 = vld [vmem:[#allocation2] sm:$0xf]
        %v1483 = vld [vmem:[#allocation2 + $0x8] sm:$0xf]
        %v1484 = vld [vmem:[#allocation2 + $0x10] sm:$0xf]
        %v1485 = vld [vmem:[#allocation2 + $0x18] sm:$0xf]
        %v1486 = vld [vmem:[#allocation2 + $0x20] sm:$0xf]
        %v1487 = vld [vmem:[#allocation2 + $0x28] sm:$0xf]
        %v1488 = vld [vmem:[#allocation2 + $0x30] sm:$0xf]
        %v1489 = vld [vmem:[#allocation2 + $0x38] sm:$0xf]
        %v1490 = vld [vmem:[#allocation2 + $0x50] sm:$0xf]
        %v1491 = vld [vmem:[#allocation2 + $0x58] sm:$0xf]
        %v1492 = vld [vmem:[#allocation2 + $0x60] sm:$0xf]
        %v1493 = vld [vmem:[#allocation2 + $0x68] sm:$0xf]
        %v1494 = vld [vmem:[#allocation2 + $0x70] sm:$0xf]
        %v1495 = vld [vmem:[#allocation2 + $0x78] sm:$0xf]
        %v1496 = vld [vmem:[#allocation2 + $0x80] sm:$0xf]
        %v1497 = vld [vmem:[#allocation2 + $0x88] sm:$0xf]
        %v1498 = vld [vmem:[#allocation2 + $0xa0] sm:$0xf]
        %v1499 = vld [vmem:[#allocation2 + $0xa8] sm:$0xf]
        %v1500 = vld [vmem:[#allocation2 + $0xb0] sm:$0xf]
        %v1501 = vld [vmem:[#allocation2 + $0xb8] sm:$0xf]
        %v1502 = vld [vmem:[#allocation2 + $0xc0] sm:$0xf]
        %v1503 = vld [vmem:[#allocation2 + $0xc8] sm:$0xf]
        %v1504 = vld [vmem:[#allocation2 + $0xd0] sm:$0xf]
        %v1505 = vld [vmem:[#allocation2 + $0xd8] sm:$0xf]
        %v1506 = vld [vmem:[#allocation2 + $0xf0] sm:$0xf]
        %v1507 = vld [vmem:[#allocation2 + $0xf8] sm:$0xf]
        %v1508 = vld [vmem:[#allocation2 + $0x100] sm:$0xf]
        %v1509 = vld [vmem:[#allocation2 + $0x108] sm:$0xf]
        %v1510 = vld [vmem:[#allocation2 + $0x110] sm:$0xf]
        %v1511 = vld [vmem:[#allocation2 + $0x118] sm:$0xf]
        %v1512 = vld [vmem:[#allocation2 + $0x120] sm:$0xf]
        %v1513 = vld [vmem:[#allocation2 + $0x128] sm:$0xf]
        %v1514 = vld [vmem:[#allocation2 + $0x4] sm:$0x1]
        %v1515 = vld [vmem:[#allocation2 + $0xc] sm:$0x1]
        %v1516 = vld [vmem:[#allocation2 + $0x14] sm:$0x1]
        %v1517 = vld [vmem:[#allocation2 + $0x1c] sm:$0x1]
        %v1518 = vld [vmem:[#allocation2 + $0x24] sm:$0x1]
        %v1519 = vld [vmem:[#allocation2 + $0x2c] sm:$0x1]
        %v1520 = vld [vmem:[#allocation2 + $0x34] sm:$0x1]
        %v1521 = vld [vmem:[#allocation2 + $0x3c] sm:$0x1]
        %v1522 = vld [vmem:[#allocation2 + $0x54] sm:$0x1]
        %v1523 = vld [vmem:[#allocation2 + $0x5c] sm:$0x1]
        %v1524 = vld [vmem:[#allocation2 + $0x64] sm:$0x1]
        %v1525 = vld [vmem:[#allocation2 + $0x6c] sm:$0x1]
        %v1526 = vld [vmem:[#allocation2 + $0x74] sm:$0x1]
        %v1527 = vld [vmem:[#allocation2 + $0x7c] sm:$0x1]
        %v1528 = vld [vmem:[#allocation2 + $0x84] sm:$0x1]
        %v1529 = vld [vmem:[#allocation2 + $0x8c] sm:$0x1]
        %v1530 = vld [vmem:[#allocation2 + $0xa4] sm:$0x1]
        %v1531 = vld [vmem:[#allocation2 + $0xac] sm:$0x1]
        %v1532 = vld [vmem:[#allocation2 + $0xb4] sm:$0x1]
        %v1533 = vld [vmem:[#allocation2 + $0xbc] sm:$0x1]
        %v1534 = vld [vmem:[#allocation2 + $0xc4] sm:$0x1]
        %v1535 = vld [vmem:[#allocation2 + $0xcc] sm:$0x1]
        %v1536 = vld [vmem:[#allocation2 + $0xd4] sm:$0x1]
        %v1537 = vld [vmem:[#allocation2 + $0xdc] sm:$0x1]
        %v1538 = vld [vmem:[#allocation2 + $0xf4] sm:$0x1]
        %v1539 = vld [vmem:[#allocation2 + $0xfc] sm:$0x1]
        %v1540 = vld [vmem:[#allocation2 + $0x104] sm:$0x1]
        %v1541 = vld [vmem:[#allocation2 + $0x10c] sm:$0x1]
        %v1542 = vld [vmem:[#allocation2 + $0x114] sm:$0x1]
        %v1543 = vld [vmem:[#allocation2 + $0x11c] sm:$0x1]
        %v1544 = vld [vmem:[#allocation2 + $0x124] sm:$0x1]
        %v1545 = vld [vmem:[#allocation2 + $0x12c] sm:$0x1]
        %vm1546 = vsmask.f32 3328
        %vm1547 = vsmask.f32 7440
        %vm1548 = vmor %vm1546, %vm1547
        %v1550 = vshrl.u32 %v1482, 16
        %v1552 = vrot.slane %v1550, 4
        %v1553 = vshll.u32 %v1482, 16
        %v1555 = vrot.slane %v1553, 5
        %v1556 = vor.u32 %v1552, %v1555
        %v1557 = vrot.slane %v1556, 4
        %v1559 = vshll.u32 %v1514, 16
        %v1561 = vrot.slane %v1559, 5
        %v1562 = vsel %vm1548, %v1557, %v1561
        %v1564 = vshrl.u32 %v1483, 16
        %v1566 = vrot.slane %v1564, 4
        %v1567 = vshll.u32 %v1483, 16
        %v1569 = vrot.slane %v1567, 5
        %v1570 = vor.u32 %v1566, %v1569
        %v1571 = vrot.slane %v1570, 4
        %v1573 = vshll.u32 %v1515, 16
        %v1575 = vrot.slane %v1573, 5
        %v1576 = vsel %vm1548, %v1571, %v1575
        %v1578 = vshrl.u32 %v1484, 16
        %v1580 = vrot.slane %v1578, 4
        %v1581 = vshll.u32 %v1484, 16
        %v1583 = vrot.slane %v1581, 5
        %v1584 = vor.u32 %v1580, %v1583
        %v1585 = vrot.slane %v1584, 4
        %v1587 = vshll.u32 %v1516, 16
        %v1589 = vrot.slane %v1587, 5
        %v1590 = vsel %vm1548, %v1585, %v1589
        %v1592 = vshrl.u32 %v1485, 16
        %v1594 = vrot.slane %v1592, 4
        %v1595 = vshll.u32 %v1485, 16
        %v1597 = vrot.slane %v1595, 5
        %v1598 = vor.u32 %v1594, %v1597
        %v1599 = vrot.slane %v1598, 4
        %v1601 = vshll.u32 %v1517, 16
        %v1603 = vrot.slane %v1601, 5
        %v1604 = vsel %vm1548, %v1599, %v1603
        %v1606 = vshrl.u32 %v1486, 16
        %v1608 = vrot.slane %v1606, 4
        %v1609 = vshll.u32 %v1486, 16
        %v1611 = vrot.slane %v1609, 5
        %v1612 = vor.u32 %v1608, %v1611
        %v1613 = vrot.slane %v1612, 4
        %v1615 = vshll.u32 %v1518, 16
        %v1617 = vrot.slane %v1615, 5
        %v1618 = vsel %vm1548, %v1613, %v1617
        %v1620 = vshrl.u32 %v1487, 16
        %v1622 = vrot.slane %v1620, 4
        %v1623 = vshll.u32 %v1487, 16
        %v1625 = vrot.slane %v1623, 5
        %v1626 = vor.u32 %v1622, %v1625
        %v1627 = vrot.slane %v1626, 4
        %v1629 = vshll.u32 %v1519, 16
        %v1631 = vrot.slane %v1629, 5
        %v1632 = vsel %vm1548, %v1627, %v1631
        %v1634 = vshrl.u32 %v1488, 16
        %v1636 = vrot.slane %v1634, 4
        %v1637 = vshll.u32 %v1488, 16
        %v1639 = vrot.slane %v1637, 5
        %v1640 = vor.u32 %v1636, %v1639
        %v1641 = vrot.slane %v1640, 4
        %v1643 = vshll.u32 %v1520, 16
        %v1645 = vrot.slane %v1643, 5
        %v1646 = vsel %vm1548, %v1641, %v1645
        %v1648 = vshrl.u32 %v1489, 16
        %v1650 = vrot.slane %v1648, 4
        %v1651 = vshll.u32 %v1489, 16
        %v1653 = vrot.slane %v1651, 5
        %v1654 = vor.u32 %v1650, %v1653
        %v1655 = vrot.slane %v1654, 4
        %v1657 = vshll.u32 %v1521, 16
        %v1659 = vrot.slane %v1657, 5
        %v1660 = vsel %vm1548, %v1655, %v1659
        %v1662 = vshrl.u32 %v1490, 16
        %v1664 = vrot.slane %v1662, 4
        %v1665 = vshll.u32 %v1490, 16
        %v1667 = vrot.slane %v1665, 5
        %v1668 = vor.u32 %v1664, %v1667
        %v1669 = vrot.slane %v1668, 4
        %v1671 = vshll.u32 %v1522, 16
        %v1673 = vrot.slane %v1671, 5
        %v1674 = vsel %vm1548, %v1669, %v1673
        %v1676 = vshrl.u32 %v1491, 16
        %v1678 = vrot.slane %v1676, 4
        %v1679 = vshll.u32 %v1491, 16
        %v1681 = vrot.slane %v1679, 5
        %v1682 = vor.u32 %v1678, %v1681
        %v1683 = vrot.slane %v1682, 4
        %v1685 = vshll.u32 %v1523, 16
        %v1687 = vrot.slane %v1685, 5
        %v1688 = vsel %vm1548, %v1683, %v1687
        %v1690 = vshrl.u32 %v1492, 16
        %v1692 = vrot.slane %v1690, 4
        %v1693 = vshll.u32 %v1492, 16
        %v1695 = vrot.slane %v1693, 5
        %v1696 = vor.u32 %v1692, %v1695
        %v1697 = vrot.slane %v1696, 4
        %v1699 = vshll.u32 %v1524, 16
        %v1701 = vrot.slane %v1699, 5
        %v1702 = vsel %vm1548, %v1697, %v1701
        %v1704 = vshrl.u32 %v1493, 16
        %v1706 = vrot.slane %v1704, 4
        %v1707 = vshll.u32 %v1493, 16
        %v1709 = vrot.slane %v1707, 5
        %v1710 = vor.u32 %v1706, %v1709
        %v1711 = vrot.slane %v1710, 4
        %v1713 = vshll.u32 %v1525, 16
        %v1715 = vrot.slane %v1713, 5
        %v1716 = vsel %vm1548, %v1711, %v1715
        %v1718 = vshrl.u32 %v1494, 16
        %v1720 = vrot.slane %v1718, 4
        %v1721 = vshll.u32 %v1494, 16
        %v1723 = vrot.slane %v1721, 5
        %v1724 = vor.u32 %v1720, %v1723
        %v1725 = vrot.slane %v1724, 4
        %v1727 = vshll.u32 %v1526, 16
        %v1729 = vrot.slane %v1727, 5
        %v1730 = vsel %vm1548, %v1725, %v1729
        %v1732 = vshrl.u32 %v1495, 16
        %v1734 = vrot.slane %v1732, 4
        %v1735 = vshll.u32 %v1495, 16
        %v1737 = vrot.slane %v1735, 5
        %v1738 = vor.u32 %v1734, %v1737
        %v1739 = vrot.slane %v1738, 4
        %v1741 = vshll.u32 %v1527, 16
        %v1743 = vrot.slane %v1741, 5
        %v1744 = vsel %vm1548, %v1739, %v1743
        %v1746 = vshrl.u32 %v1496, 16
        %v1748 = vrot.slane %v1746, 4
        %v1749 = vshll.u32 %v1496, 16
        %v1751 = vrot.slane %v1749, 5
        %v1752 = vor.u32 %v1748, %v1751
        %v1753 = vrot.slane %v1752, 4
        %v1755 = vshll.u32 %v1528, 16
        %v1757 = vrot.slane %v1755, 5
        %v1758 = vsel %vm1548, %v1753, %v1757
        %v1760 = vshrl.u32 %v1497, 16
        %v1762 = vrot.slane %v1760, 4
        %v1763 = vshll.u32 %v1497, 16
        %v1765 = vrot.slane %v1763, 5
        %v1766 = vor.u32 %v1762, %v1765
        %v1767 = vrot.slane %v1766, 4
        %v1769 = vshll.u32 %v1529, 16
        %v1771 = vrot.slane %v1769, 5
        %v1772 = vsel %vm1548, %v1767, %v1771
        %v1774 = vshrl.u32 %v1498, 16
        %v1776 = vrot.slane %v1774, 4
        %v1777 = vshll.u32 %v1498, 16
        %v1779 = vrot.slane %v1777, 5
        %v1780 = vor.u32 %v1776, %v1779
        %v1781 = vrot.slane %v1780, 4
        %v1783 = vshll.u32 %v1530, 16
        %v1785 = vrot.slane %v1783, 5
        %v1786 = vsel %vm1548, %v1781, %v1785
        %v1788 = vshrl.u32 %v1499, 16
        %v1790 = vrot.slane %v1788, 4
        %v1791 = vshll.u32 %v1499, 16
        %v1793 = vrot.slane %v1791, 5
        %v1794 = vor.u32 %v1790, %v1793
        %v1795 = vrot.slane %v1794, 4
        %v1797 = vshll.u32 %v1531, 16
        %v1799 = vrot.slane %v1797, 5
        %v1800 = vsel %vm1548, %v1795, %v1799
        %v1802 = vshrl.u32 %v1500, 16
        %v1804 = vrot.slane %v1802, 4
        %v1805 = vshll.u32 %v1500, 16
        %v1807 = vrot.slane %v1805, 5
        %v1808 = vor.u32 %v1804, %v1807
        %v1809 = vrot.slane %v1808, 4
        %v1811 = vshll.u32 %v1532, 16
        %v1813 = vrot.slane %v1811, 5
        %v1814 = vsel %vm1548, %v1809, %v1813
        %v1816 = vshrl.u32 %v1501, 16
        %v1818 = vrot.slane %v1816, 4
        %v1819 = vshll.u32 %v1501, 16
        %v1821 = vrot.slane %v1819, 5
        %v1822 = vor.u32 %v1818, %v1821
        %v1823 = vrot.slane %v1822, 4
        %v1825 = vshll.u32 %v1533, 16
        %v1827 = vrot.slane %v1825, 5
        %v1828 = vsel %vm1548, %v1823, %v1827
        %v1830 = vshrl.u32 %v1502, 16
        %v1832 = vrot.slane %v1830, 4
        %v1833 = vshll.u32 %v1502, 16
        %v1835 = vrot.slane %v1833, 5
        %v1836 = vor.u32 %v1832, %v1835
        %v1837 = vrot.slane %v1836, 4
        %v1839 = vshll.u32 %v1534, 16
        %v1841 = vrot.slane %v1839, 5
        %v1842 = vsel %vm1548, %v1837, %v1841
        %v1844 = vshrl.u32 %v1503, 16
        %v1846 = vrot.slane %v1844, 4
        %v1847 = vshll.u32 %v1503, 16
        %v1849 = vrot.slane %v1847, 5
        %v1850 = vor.u32 %v1846, %v1849
        %v1851 = vrot.slane %v1850, 4
        %v1853 = vshll.u32 %v1535, 16
        %v1855 = vrot.slane %v1853, 5
        %v1856 = vsel %vm1548, %v1851, %v1855
        %v1858 = vshrl.u32 %v1504, 16
        %v1860 = vrot.slane %v1858, 4
        %v1861 = vshll.u32 %v1504, 16
        %v1863 = vrot.slane %v1861, 5
        %v1864 = vor.u32 %v1860, %v1863
        %v1865 = vrot.slane %v1864, 4
        %v1867 = vshll.u32 %v1536, 16
        %v1869 = vrot.slane %v1867, 5
        %v1870 = vsel %vm1548, %v1865, %v1869
        %v1872 = vshrl.u32 %v1505, 16
        %v1874 = vrot.slane %v1872, 4
        %v1875 = vshll.u32 %v1505, 16
        %v1877 = vrot.slane %v1875, 5
        %v1878 = vor.u32 %v1874, %v1877
        %v1879 = vrot.slane %v1878, 4
        %v1881 = vshll.u32 %v1537, 16
        %v1883 = vrot.slane %v1881, 5
        %v1884 = vsel %vm1548, %v1879, %v1883
        %v1886 = vshrl.u32 %v1506, 16
        %v1888 = vrot.slane %v1886, 4
        %v1889 = vshll.u32 %v1506, 16
        %v1891 = vrot.slane %v1889, 5
        %v1892 = vor.u32 %v1888, %v1891
        %v1893 = vrot.slane %v1892, 4
        %v1895 = vshll.u32 %v1538, 16
        %v1897 = vrot.slane %v1895, 5
        %v1898 = vsel %vm1548, %v1893, %v1897
        %v1900 = vshrl.u32 %v1507, 16
        %v1902 = vrot.slane %v1900, 4
        %v1903 = vshll.u32 %v1507, 16
        %v1905 = vrot.slane %v1903, 5
        %v1906 = vor.u32 %v1902, %v1905
        %v1907 = vrot.slane %v1906, 4
        %v1909 = vshll.u32 %v1539, 16
        %v1911 = vrot.slane %v1909, 5
        %v1912 = vsel %vm1548, %v1907, %v1911
        %v1914 = vshrl.u32 %v1508, 16
        %v1916 = vrot.slane %v1914, 4
        %v1917 = vshll.u32 %v1508, 16
        %v1919 = vrot.slane %v1917, 5
        %v1920 = vor.u32 %v1916, %v1919
        %v1921 = vrot.slane %v1920, 4
        %v1923 = vshll.u32 %v1540, 16
        %v1925 = vrot.slane %v1923, 5
        %v1926 = vsel %vm1548, %v1921, %v1925
        %v1928 = vshrl.u32 %v1509, 16
        %v1930 = vrot.slane %v1928, 4
        %v1931 = vshll.u32 %v1509, 16
        %v1933 = vrot.slane %v1931, 5
        %v1934 = vor.u32 %v1930, %v1933
        %v1935 = vrot.slane %v1934, 4
        %v1937 = vshll.u32 %v1541, 16
        %v1939 = vrot.slane %v1937, 5
        %v1940 = vsel %vm1548, %v1935, %v1939
        %v1942 = vshrl.u32 %v1510, 16
        %v1944 = vrot.slane %v1942, 4
        %v1945 = vshll.u32 %v1510, 16
        %v1947 = vrot.slane %v1945, 5
        %v1948 = vor.u32 %v1944, %v1947
        %v1949 = vrot.slane %v1948, 4
        %v1951 = vshll.u32 %v1542, 16
        %v1953 = vrot.slane %v1951, 5
        %v1954 = vsel %vm1548, %v1949, %v1953
        %v1956 = vshrl.u32 %v1511, 16
        %v1958 = vrot.slane %v1956, 4
        %v1959 = vshll.u32 %v1511, 16
        %v1961 = vrot.slane %v1959, 5
        %v1962 = vor.u32 %v1958, %v1961
        %v1963 = vrot.slane %v1962, 4
        %v1965 = vshll.u32 %v1543, 16
        %v1967 = vrot.slane %v1965, 5
        %v1968 = vsel %vm1548, %v1963, %v1967
        %v1970 = vshrl.u32 %v1512, 16
        %v1972 = vrot.slane %v1970, 4
        %v1973 = vshll.u32 %v1512, 16
        %v1975 = vrot.slane %v1973, 5
        %v1976 = vor.u32 %v1972, %v1975
        %v1977 = vrot.slane %v1976, 4
        %v1979 = vshll.u32 %v1544, 16
        %v1981 = vrot.slane %v1979, 5
        %v1982 = vsel %vm1548, %v1977, %v1981
        %v1984 = vshrl.u32 %v1513, 16
        %v1986 = vrot.slane %v1984, 4
        %v1987 = vshll.u32 %v1513, 16
        %v1989 = vrot.slane %v1987, 5
        %v1990 = vor.u32 %v1986, %v1989
        %v1991 = vrot.slane %v1990, 4
        %v1993 = vshll.u32 %v1545, 16
        %v1995 = vrot.slane %v1993, 5
        %v1996 = vsel %vm1548, %v1991, %v1995
        %v1997 = vld [vmem:[#allocation2] sm:$0xe]
        %v1998 = vld [vmem:[#allocation2 + $0x8] sm:$0xe]
        %v1999 = vld [vmem:[#allocation2 + $0x10] sm:$0xe]
        %v2000 = vld [vmem:[#allocation2 + $0x18] sm:$0xe]
        %v2001 = vld [vmem:[#allocation2 + $0x20] sm:$0xe]
        %v2002 = vld [vmem:[#allocation2 + $0x28] sm:$0xe]
        %v2003 = vld [vmem:[#allocation2 + $0x30] sm:$0xe]
        %v2004 = vld [vmem:[#allocation2 + $0x38] sm:$0xe]
        %v2005 = vld [vmem:[#allocation2 + $0x50] sm:$0xe]
        %v2006 = vld [vmem:[#allocation2 + $0x58] sm:$0xe]
        %v2007 = vld [vmem:[#allocation2 + $0x60] sm:$0xe]
        %v2008 = vld [vmem:[#allocation2 + $0x68] sm:$0xe]
        %v2009 = vld [vmem:[#allocation2 + $0x70] sm:$0xe]
        %v2010 = vld [vmem:[#allocation2 + $0x78] sm:$0xe]
        %v2011 = vld [vmem:[#allocation2 + $0x80] sm:$0xe]
        %v2012 = vld [vmem:[#allocation2 + $0x88] sm:$0xe]
        %v2013 = vld [vmem:[#allocation2 + $0xa0] sm:$0xe]
        %v2014 = vld [vmem:[#allocation2 + $0xa8] sm:$0xe]
        %v2015 = vld [vmem:[#allocation2 + $0xb0] sm:$0xe]
        %v2016 = vld [vmem:[#allocation2 + $0xb8] sm:$0xe]
        %v2017 = vld [vmem:[#allocation2 + $0xc0] sm:$0xe]
        %v2018 = vld [vmem:[#allocation2 + $0xc8] sm:$0xe]
        %v2019 = vld [vmem:[#allocation2 + $0xd0] sm:$0xe]
        %v2020 = vld [vmem:[#allocation2 + $0xd8] sm:$0xe]
        %v2021 = vld [vmem:[#allocation2 + $0xf0] sm:$0xe]
        %v2022 = vld [vmem:[#allocation2 + $0xf8] sm:$0xe]
        %v2023 = vld [vmem:[#allocation2 + $0x100] sm:$0xe]
        %v2024 = vld [vmem:[#allocation2 + $0x108] sm:$0xe]
        %v2025 = vld [vmem:[#allocation2 + $0x110] sm:$0xe]
        %v2026 = vld [vmem:[#allocation2 + $0x118] sm:$0xe]
        %v2027 = vld [vmem:[#allocation2 + $0x120] sm:$0xe]
        %v2028 = vld [vmem:[#allocation2 + $0x128] sm:$0xe]
        %vm2093 = vcmask 1042432
        %vm2094 = vcmask 1046532
        %vm2095 = vmor %vm2093, %vm2094
        %v2096 = vrot.slane %v1997, 5
        %v2097 = vrot.slane %v2096, 4
        %v2098 = vrot.slane %v1514, 5
        %v2099 = vsel %vm2095, %v2097, %v2098
        %v2100 = vrot.slane %v1998, 5
        %v2101 = vrot.slane %v2100, 4
        %v2102 = vrot.slane %v1515, 5
        %v2103 = vsel %vm2095, %v2101, %v2102
        %v2104 = vrot.slane %v1999, 5
        %v2105 = vrot.slane %v2104, 4
        %v2106 = vrot.slane %v1516, 5
        %v2107 = vsel %vm2095, %v2105, %v2106
        %v2108 = vrot.slane %v2000, 5
        %v2109 = vrot.slane %v2108, 4
        %v2110 = vrot.slane %v1517, 5
        %v2111 = vsel %vm2095, %v2109, %v2110
        %v2112 = vrot.slane %v2001, 5
        %v2113 = vrot.slane %v2112, 4
        %v2114 = vrot.slane %v1518, 5
        %v2115 = vsel %vm2095, %v2113, %v2114
        %v2116 = vrot.slane %v2002, 5
        %v2117 = vrot.slane %v2116, 4
        %v2118 = vrot.slane %v1519, 5
        %v2119 = vsel %vm2095, %v2117, %v2118
        %v2120 = vrot.slane %v2003, 5
        %v2121 = vrot.slane %v2120, 4
        %v2122 = vrot.slane %v1520, 5
        %v2123 = vsel %vm2095, %v2121, %v2122
        %v2124 = vrot.slane %v2004, 5
        %v2125 = vrot.slane %v2124, 4
        %v2126 = vrot.slane %v1521, 5
        %v2127 = vsel %vm2095, %v2125, %v2126
        %v2128 = vrot.slane %v2005, 5
        %v2129 = vrot.slane %v2128, 4
        %v2130 = vrot.slane %v1522, 5
        %v2131 = vsel %vm2095, %v2129, %v2130
        %v2132 = vrot.slane %v2006, 5
        %v2133 = vrot.slane %v2132, 4
        %v2134 = vrot.slane %v1523, 5
        %v2135 = vsel %vm2095, %v2133, %v2134
        %v2136 = vrot.slane %v2007, 5
        %v2137 = vrot.slane %v2136, 4
        %v2138 = vrot.slane %v1524, 5
        %v2139 = vsel %vm2095, %v2137, %v2138
        %v2140 = vrot.slane %v2008, 5
        %v2141 = vrot.slane %v2140, 4
        %v2142 = vrot.slane %v1525, 5
        %v2143 = vsel %vm2095, %v2141, %v2142
        %v2144 = vrot.slane %v2009, 5
        %v2145 = vrot.slane %v2144, 4
        %v2146 = vrot.slane %v1526, 5
        %v2147 = vsel %vm2095, %v2145, %v2146
        %v2148 = vrot.slane %v2010, 5
        %v2149 = vrot.slane %v2148, 4
        %v2150 = vrot.slane %v1527, 5
        %v2151 = vsel %vm2095, %v2149, %v2150
        %v2152 = vrot.slane %v2011, 5
        %v2153 = vrot.slane %v2152, 4
        %v2154 = vrot.slane %v1528, 5
        %v2155 = vsel %vm2095, %v2153, %v2154
        %v2156 = vrot.slane %v2012, 5
        %v2157 = vrot.slane %v2156, 4
        %v2158 = vrot.slane %v1529, 5
        %v2159 = vsel %vm2095, %v2157, %v2158
        %v2160 = vrot.slane %v2013, 5
        %v2161 = vrot.slane %v2160, 4
        %v2162 = vrot.slane %v1530, 5
        %v2163 = vsel %vm2095, %v2161, %v2162
        %v2164 = vrot.slane %v2014, 5
        %v2165 = vrot.slane %v2164, 4
        %v2166 = vrot.slane %v1531, 5
        %v2167 = vsel %vm2095, %v2165, %v2166
        %v2168 = vrot.slane %v2015, 5
        %v2169 = vrot.slane %v2168, 4
        %v2170 = vrot.slane %v1532, 5
        %v2171 = vsel %vm2095, %v2169, %v2170
        %v2172 = vrot.slane %v2016, 5
        %v2173 = vrot.slane %v2172, 4
        %v2174 = vrot.slane %v1533, 5
        %v2175 = vsel %vm2095, %v2173, %v2174
        %v2176 = vrot.slane %v2017, 5
        %v2177 = vrot.slane %v2176, 4
        %v2178 = vrot.slane %v1534, 5
        %v2179 = vsel %vm2095, %v2177, %v2178
        %v2180 = vrot.slane %v2018, 5
        %v2181 = vrot.slane %v2180, 4
        %v2182 = vrot.slane %v1535, 5
        %v2183 = vsel %vm2095, %v2181, %v2182
        %v2184 = vrot.slane %v2019, 5
        %v2185 = vrot.slane %v2184, 4
        %v2186 = vrot.slane %v1536, 5
        %v2187 = vsel %vm2095, %v2185, %v2186
        %v2188 = vrot.slane %v2020, 5
        %v2189 = vrot.slane %v2188, 4
        %v2190 = vrot.slane %v1537, 5
        %v2191 = vsel %vm2095, %v2189, %v2190
        %v2192 = vrot.slane %v2021, 5
        %v2193 = vrot.slane %v2192, 4
        %v2194 = vrot.slane %v1538, 5
        %v2195 = vsel %vm2095, %v2193, %v2194
        %v2196 = vrot.slane %v2022, 5
        %v2197 = vrot.slane %v2196, 4
        %v2198 = vrot.slane %v1539, 5
        %v2199 = vsel %vm2095, %v2197, %v2198
        %v2200 = vrot.slane %v2023, 5
        %v2201 = vrot.slane %v2200, 4
        %v2202 = vrot.slane %v1540, 5
        %v2203 = vsel %vm2095, %v2201, %v2202
        %v2204 = vrot.slane %v2024, 5
        %v2205 = vrot.slane %v2204, 4
        %v2206 = vrot.slane %v1541, 5
        %v2207 = vsel %vm2095, %v2205, %v2206
        %v2208 = vrot.slane %v2025, 5
        %v2209 = vrot.slane %v2208, 4
        %v2210 = vrot.slane %v1542, 5
        %v2211 = vsel %vm2095, %v2209, %v2210
        %v2212 = vrot.slane %v2026, 5
        %v2213 = vrot.slane %v2212, 4
        %v2214 = vrot.slane %v1543, 5
        %v2215 = vsel %vm2095, %v2213, %v2214
        %v2216 = vrot.slane %v2027, 5
        %v2217 = vrot.slane %v2216, 4
        %v2218 = vrot.slane %v1544, 5
        %v2219 = vsel %vm2095, %v2217, %v2218
        %v2220 = vrot.slane %v2028, 5
        %v2221 = vrot.slane %v2220, 4
        %v2222 = vrot.slane %v1545, 5
        %v2223 = vsel %vm2095, %v2221, %v2222
        %v2224 = vld [vmem:[%s674] sm:$0xf]
        %v2225 = vld [vmem:[%s674 + $0x8] sm:$0xf]
        %v2226 = vld [vmem:[%s674 + $0x10] sm:$0xf]
        %v2227 = vld [vmem:[%s674 + $0x18] sm:$0xf]
        %v2228 = vld [vmem:[%s674 + $0x20] sm:$0xf]
        %v2229 = vld [vmem:[%s674 + $0x28] sm:$0xf]
        %v2230 = vld [vmem:[%s674 + $0x30] sm:$0xf]
        %v2231 = vld [vmem:[%s674 + $0x38] sm:$0xf]
        %v2232 = vld [vmem:[%s674 + $0x50] sm:$0xf]
        %v2233 = vld [vmem:[%s674 + $0x58] sm:$0xf]
        %v2234 = vld [vmem:[%s674 + $0x60] sm:$0xf]
        %v2235 = vld [vmem:[%s674 + $0x68] sm:$0xf]
        %v2236 = vld [vmem:[%s674 + $0x70] sm:$0xf]
        %v2237 = vld [vmem:[%s674 + $0x78] sm:$0xf]
        %v2238 = vld [vmem:[%s674 + $0x80] sm:$0xf]
        %v2239 = vld [vmem:[%s674 + $0x88] sm:$0xf]
        %v2240 = vld [vmem:[%s674 + $0xa0] sm:$0xf]
        %v2241 = vld [vmem:[%s674 + $0xa8] sm:$0xf]
        %v2242 = vld [vmem:[%s674 + $0xb0] sm:$0xf]
        %v2243 = vld [vmem:[%s674 + $0xb8] sm:$0xf]
        %v2244 = vld [vmem:[%s674 + $0xc0] sm:$0xf]
        %v2245 = vld [vmem:[%s674 + $0xc8] sm:$0xf]
        %v2246 = vld [vmem:[%s674 + $0xd0] sm:$0xf]
        %v2247 = vld [vmem:[%s674 + $0xd8] sm:$0xf]
        %v2248 = vld [vmem:[%s674 + $0xf0] sm:$0xf]
        %v2249 = vld [vmem:[%s674 + $0xf8] sm:$0xf]
        %v2250 = vld [vmem:[%s674 + $0x100] sm:$0xf]
        %v2251 = vld [vmem:[%s674 + $0x108] sm:$0xf]
        %v2252 = vld [vmem:[%s674 + $0x110] sm:$0xf]
        %v2253 = vld [vmem:[%s674 + $0x118] sm:$0xf]
        %v2254 = vld [vmem:[%s674 + $0x120] sm:$0xf]
        %v2255 = vld [vmem:[%s674 + $0x128] sm:$0xf]
        %v2256 = vld [vmem:[%s674 + $0x4] sm:$0x1]
        %v2257 = vld [vmem:[%s674 + $0xc] sm:$0x1]
        %v2258 = vld [vmem:[%s674 + $0x14] sm:$0x1]
        %v2259 = vld [vmem:[%s674 + $0x1c] sm:$0x1]
        %v2260 = vld [vmem:[%s674 + $0x24] sm:$0x1]
        %v2261 = vld [vmem:[%s674 + $0x2c] sm:$0x1]
        %v2262 = vld [vmem:[%s674 + $0x34] sm:$0x1]
        %v2263 = vld [vmem:[%s674 + $0x3c] sm:$0x1]
        %v2264 = vld [vmem:[%s674 + $0x54] sm:$0x1]
        %v2265 = vld [vmem:[%s674 + $0x5c] sm:$0x1]
        %v2266 = vld [vmem:[%s674 + $0x64] sm:$0x1]
        %v2267 = vld [vmem:[%s674 + $0x6c] sm:$0x1]
        %v2268 = vld [vmem:[%s674 + $0x74] sm:$0x1]
        %v2269 = vld [vmem:[%s674 + $0x7c] sm:$0x1]
        %v2270 = vld [vmem:[%s674 + $0x84] sm:$0x1]
        %v2271 = vld [vmem:[%s674 + $0x8c] sm:$0x1]
        %v2272 = vld [vmem:[%s674 + $0xa4] sm:$0x1]
        %v2273 = vld [vmem:[%s674 + $0xac] sm:$0x1]
        %v2274 = vld [vmem:[%s674 + $0xb4] sm:$0x1]
        %v2275 = vld [vmem:[%s674 + $0xbc] sm:$0x1]
        %v2276 = vld [vmem:[%s674 + $0xc4] sm:$0x1]
        %v2277 = vld [vmem:[%s674 + $0xcc] sm:$0x1]
        %v2278 = vld [vmem:[%s674 + $0xd4] sm:$0x1]
        %v2279 = vld [vmem:[%s674 + $0xdc] sm:$0x1]
        %v2280 = vld [vmem:[%s674 + $0xf4] sm:$0x1]
        %v2281 = vld [vmem:[%s674 + $0xfc] sm:$0x1]
        %v2282 = vld [vmem:[%s674 + $0x104] sm:$0x1]
        %v2283 = vld [vmem:[%s674 + $0x10c] sm:$0x1]
        %v2284 = vld [vmem:[%s674 + $0x114] sm:$0x1]
        %v2285 = vld [vmem:[%s674 + $0x11c] sm:$0x1]
        %v2286 = vld [vmem:[%s674 + $0x124] sm:$0x1]
        %v2287 = vld [vmem:[%s674 + $0x12c] sm:$0x1]
        %v2289 = vshrl.u32 %v2224, 16
        %v2291 = vrot.slane %v2289, 4
        %v2292 = vshll.u32 %v2224, 16
        %v2294 = vrot.slane %v2292, 5
        %v2295 = vor.u32 %v2291, %v2294
        %v2296 = vrot.slane %v2295, 4
        %v2298 = vshll.u32 %v2256, 16
        %v2300 = vrot.slane %v2298, 5
        %v2301 = vsel %vm1548, %v2296, %v2300
        %v2303 = vshrl.u32 %v2225, 16
        %v2305 = vrot.slane %v2303, 4
        %v2306 = vshll.u32 %v2225, 16
        %v2308 = vrot.slane %v2306, 5
        %v2309 = vor.u32 %v2305, %v2308
        %v2310 = vrot.slane %v2309, 4
        %v2312 = vshll.u32 %v2257, 16
        %v2314 = vrot.slane %v2312, 5
        %v2315 = vsel %vm1548, %v2310, %v2314
        %v2317 = vshrl.u32 %v2226, 16
        %v2319 = vrot.slane %v2317, 4
        %v2320 = vshll.u32 %v2226, 16
        %v2322 = vrot.slane %v2320, 5
        %v2323 = vor.u32 %v2319, %v2322
        %v2324 = vrot.slane %v2323, 4
        %v2326 = vshll.u32 %v2258, 16
        %v2328 = vrot.slane %v2326, 5
        %v2329 = vsel %vm1548, %v2324, %v2328
        %v2331 = vshrl.u32 %v2227, 16
        %v2333 = vrot.slane %v2331, 4
        %v2334 = vshll.u32 %v2227, 16
        %v2336 = vrot.slane %v2334, 5
        %v2337 = vor.u32 %v2333, %v2336
        %v2338 = vrot.slane %v2337, 4
        %v2340 = vshll.u32 %v2259, 16
        %v2342 = vrot.slane %v2340, 5
        %v2343 = vsel %vm1548, %v2338, %v2342
        %v2345 = vshrl.u32 %v2228, 16
        %v2347 = vrot.slane %v2345, 4
        %v2348 = vshll.u32 %v2228, 16
        %v2350 = vrot.slane %v2348, 5
        %v2351 = vor.u32 %v2347, %v2350
        %v2352 = vrot.slane %v2351, 4
        %v2354 = vshll.u32 %v2260, 16
        %v2356 = vrot.slane %v2354, 5
        %v2357 = vsel %vm1548, %v2352, %v2356
        %v2359 = vshrl.u32 %v2229, 16
        %v2361 = vrot.slane %v2359, 4
        %v2362 = vshll.u32 %v2229, 16
        %v2364 = vrot.slane %v2362, 5
        %v2365 = vor.u32 %v2361, %v2364
        %v2366 = vrot.slane %v2365, 4
        %v2368 = vshll.u32 %v2261, 16
        %v2370 = vrot.slane %v2368, 5
        %v2371 = vsel %vm1548, %v2366, %v2370
        %v2373 = vshrl.u32 %v2230, 16
        %v2375 = vrot.slane %v2373, 4
        %v2376 = vshll.u32 %v2230, 16
        %v2378 = vrot.slane %v2376, 5
        %v2379 = vor.u32 %v2375, %v2378
        %v2380 = vrot.slane %v2379, 4
        %v2382 = vshll.u32 %v2262, 16
        %v2384 = vrot.slane %v2382, 5
        %v2385 = vsel %vm1548, %v2380, %v2384
        %v2387 = vshrl.u32 %v2231, 16
        %v2389 = vrot.slane %v2387, 4
        %v2390 = vshll.u32 %v2231, 16
        %v2392 = vrot.slane %v2390, 5
        %v2393 = vor.u32 %v2389, %v2392
        %v2394 = vrot.slane %v2393, 4
        %v2396 = vshll.u32 %v2263, 16
        %v2398 = vrot.slane %v2396, 5
        %v2399 = vsel %vm1548, %v2394, %v2398
        %v2401 = vshrl.u32 %v2232, 16
        %v2403 = vrot.slane %v2401, 4
        %v2404 = vshll.u32 %v2232, 16
        %v2406 = vrot.slane %v2404, 5
        %v2407 = vor.u32 %v2403, %v2406
        %v2408 = vrot.slane %v2407, 4
        %v2410 = vshll.u32 %v2264, 16
        %v2412 = vrot.slane %v2410, 5
        %v2413 = vsel %vm1548, %v2408, %v2412
        %v2415 = vshrl.u32 %v2233, 16
        %v2417 = vrot.slane %v2415, 4
        %v2418 = vshll.u32 %v2233, 16
        %v2420 = vrot.slane %v2418, 5
        %v2421 = vor.u32 %v2417, %v2420
        %v2422 = vrot.slane %v2421, 4
        %v2424 = vshll.u32 %v2265, 16
        %v2426 = vrot.slane %v2424, 5
        %v2427 = vsel %vm1548, %v2422, %v2426
        %v2429 = vshrl.u32 %v2234, 16
        %v2431 = vrot.slane %v2429, 4
        %v2432 = vshll.u32 %v2234, 16
        %v2434 = vrot.slane %v2432, 5
        %v2435 = vor.u32 %v2431, %v2434
        %v2436 = vrot.slane %v2435, 4
        %v2438 = vshll.u32 %v2266, 16
        %v2440 = vrot.slane %v2438, 5
        %v2441 = vsel %vm1548, %v2436, %v2440
        %v2443 = vshrl.u32 %v2235, 16
        %v2445 = vrot.slane %v2443, 4
        %v2446 = vshll.u32 %v2235, 16
        %v2448 = vrot.slane %v2446, 5
        %v2449 = vor.u32 %v2445, %v2448
        %v2450 = vrot.slane %v2449, 4
        %v2452 = vshll.u32 %v2267, 16
        %v2454 = vrot.slane %v2452, 5
        %v2455 = vsel %vm1548, %v2450, %v2454
        %v2457 = vshrl.u32 %v2236, 16
        %v2459 = vrot.slane %v2457, 4
        %v2460 = vshll.u32 %v2236, 16
        %v2462 = vrot.slane %v2460, 5
        %v2463 = vor.u32 %v2459, %v2462
        %v2464 = vrot.slane %v2463, 4
        %v2466 = vshll.u32 %v2268, 16
        %v2468 = vrot.slane %v2466, 5
        %v2469 = vsel %vm1548, %v2464, %v2468
        %v2471 = vshrl.u32 %v2237, 16
        %v2473 = vrot.slane %v2471, 4
        %v2474 = vshll.u32 %v2237, 16
        %v2476 = vrot.slane %v2474, 5
        %v2477 = vor.u32 %v2473, %v2476
        %v2478 = vrot.slane %v2477, 4
        %v2480 = vshll.u32 %v2269, 16
        %v2482 = vrot.slane %v2480, 5
        %v2483 = vsel %vm1548, %v2478, %v2482
        %v2485 = vshrl.u32 %v2238, 16
        %v2487 = vrot.slane %v2485, 4
        %v2488 = vshll.u32 %v2238, 16
        %v2490 = vrot.slane %v2488, 5
        %v2491 = vor.u32 %v2487, %v2490
        %v2492 = vrot.slane %v2491, 4
        %v2494 = vshll.u32 %v2270, 16
        %v2496 = vrot.slane %v2494, 5
        %v2497 = vsel %vm1548, %v2492, %v2496
        %v2499 = vshrl.u32 %v2239, 16
        %v2501 = vrot.slane %v2499, 4
        %v2502 = vshll.u32 %v2239, 16
        %v2504 = vrot.slane %v2502, 5
        %v2505 = vor.u32 %v2501, %v2504
        %v2506 = vrot.slane %v2505, 4
        %v2508 = vshll.u32 %v2271, 16
        %v2510 = vrot.slane %v2508, 5
        %v2511 = vsel %vm1548, %v2506, %v2510
        %v2513 = vshrl.u32 %v2240, 16
        %v2515 = vrot.slane %v2513, 4
        %v2516 = vshll.u32 %v2240, 16
        %v2518 = vrot.slane %v2516, 5
        %v2519 = vor.u32 %v2515, %v2518
        %v2520 = vrot.slane %v2519, 4
        %v2522 = vshll.u32 %v2272, 16
        %v2524 = vrot.slane %v2522, 5
        %v2525 = vsel %vm1548, %v2520, %v2524
        %v2527 = vshrl.u32 %v2241, 16
        %v2529 = vrot.slane %v2527, 4
        %v2530 = vshll.u32 %v2241, 16
        %v2532 = vrot.slane %v2530, 5
        %v2533 = vor.u32 %v2529, %v2532
        %v2534 = vrot.slane %v2533, 4
        %v2536 = vshll.u32 %v2273, 16
        %v2538 = vrot.slane %v2536, 5
        %v2539 = vsel %vm1548, %v2534, %v2538
        %v2541 = vshrl.u32 %v2242, 16
        %v2543 = vrot.slane %v2541, 4
        %v2544 = vshll.u32 %v2242, 16
        %v2546 = vrot.slane %v2544, 5
        %v2547 = vor.u32 %v2543, %v2546
        %v2548 = vrot.slane %v2547, 4
        %v2550 = vshll.u32 %v2274, 16
        %v2552 = vrot.slane %v2550, 5
        %v2553 = vsel %vm1548, %v2548, %v2552
        %v2555 = vshrl.u32 %v2243, 16
        %v2557 = vrot.slane %v2555, 4
        %v2558 = vshll.u32 %v2243, 16
        %v2560 = vrot.slane %v2558, 5
        %v2561 = vor.u32 %v2557, %v2560
        %v2562 = vrot.slane %v2561, 4
        %v2564 = vshll.u32 %v2275, 16
        %v2566 = vrot.slane %v2564, 5
        %v2567 = vsel %vm1548, %v2562, %v2566
        %v2569 = vshrl.u32 %v2244, 16
        %v2571 = vrot.slane %v2569, 4
        %v2572 = vshll.u32 %v2244, 16
        %v2574 = vrot.slane %v2572, 5
        %v2575 = vor.u32 %v2571, %v2574
        %v2576 = vrot.slane %v2575, 4
        %v2578 = vshll.u32 %v2276, 16
        %v2580 = vrot.slane %v2578, 5
        %v2581 = vsel %vm1548, %v2576, %v2580
        %v2583 = vshrl.u32 %v2245, 16
        %v2585 = vrot.slane %v2583, 4
        %v2586 = vshll.u32 %v2245, 16
        %v2588 = vrot.slane %v2586, 5
        %v2589 = vor.u32 %v2585, %v2588
        %v2590 = vrot.slane %v2589, 4
        %v2592 = vshll.u32 %v2277, 16
        %v2594 = vrot.slane %v2592, 5
        %v2595 = vsel %vm1548, %v2590, %v2594
        %v2597 = vshrl.u32 %v2246, 16
        %v2599 = vrot.slane %v2597, 4
        %v2600 = vshll.u32 %v2246, 16
        %v2602 = vrot.slane %v2600, 5
        %v2603 = vor.u32 %v2599, %v2602
        %v2604 = vrot.slane %v2603, 4
        %v2606 = vshll.u32 %v2278, 16
        %v2608 = vrot.slane %v2606, 5
        %v2609 = vsel %vm1548, %v2604, %v2608
        %v2611 = vshrl.u32 %v2247, 16
        %v2613 = vrot.slane %v2611, 4
        %v2614 = vshll.u32 %v2247, 16
        %v2616 = vrot.slane %v2614, 5
        %v2617 = vor.u32 %v2613, %v2616
        %v2618 = vrot.slane %v2617, 4
        %v2620 = vshll.u32 %v2279, 16
        %v2622 = vrot.slane %v2620, 5
        %v2623 = vsel %vm1548, %v2618, %v2622
        %v2625 = vshrl.u32 %v2248, 16
        %v2627 = vrot.slane %v2625, 4
        %v2628 = vshll.u32 %v2248, 16
        %v2630 = vrot.slane %v2628, 5
        %v2631 = vor.u32 %v2627, %v2630
        %v2632 = vrot.slane %v2631, 4
        %v2634 = vshll.u32 %v2280, 16
        %v2636 = vrot.slane %v2634, 5
        %v2637 = vsel %vm1548, %v2632, %v2636
        %v2639 = vshrl.u32 %v2249, 16
        %v2641 = vrot.slane %v2639, 4
        %v2642 = vshll.u32 %v2249, 16
        %v2644 = vrot.slane %v2642, 5
        %v2645 = vor.u32 %v2641, %v2644
        %v2646 = vrot.slane %v2645, 4
        %v2648 = vshll.u32 %v2281, 16
        %v2650 = vrot.slane %v2648, 5
        %v2651 = vsel %vm1548, %v2646, %v2650
        %v2653 = vshrl.u32 %v2250, 16
        %v2655 = vrot.slane %v2653, 4
        %v2656 = vshll.u32 %v2250, 16
        %v2658 = vrot.slane %v2656, 5
        %v2659 = vor.u32 %v2655, %v2658
        %v2660 = vrot.slane %v2659, 4
        %v2662 = vshll.u32 %v2282, 16
        %v2664 = vrot.slane %v2662, 5
        %v2665 = vsel %vm1548, %v2660, %v2664
        %v2667 = vshrl.u32 %v2251, 16
        %v2669 = vrot.slane %v2667, 4
        %v2670 = vshll.u32 %v2251, 16
        %v2672 = vrot.slane %v2670, 5
        %v2673 = vor.u32 %v2669, %v2672
        %v2674 = vrot.slane %v2673, 4
        %v2676 = vshll.u32 %v2283, 16
        %v2678 = vrot.slane %v2676, 5
        %v2679 = vsel %vm1548, %v2674, %v2678
        %v2681 = vshrl.u32 %v2252, 16
        %v2683 = vrot.slane %v2681, 4
        %v2684 = vshll.u32 %v2252, 16
        %v2686 = vrot.slane %v2684, 5
        %v2687 = vor.u32 %v2683, %v2686
        %v2688 = vrot.slane %v2687, 4
        %v2690 = vshll.u32 %v2284, 16
        %v2692 = vrot.slane %v2690, 5
        %v2693 = vsel %vm1548, %v2688, %v2692
        %v2695 = vshrl.u32 %v2253, 16
        %v2697 = vrot.slane %v2695, 4
        %v2698 = vshll.u32 %v2253, 16
        %v2700 = vrot.slane %v2698, 5
        %v2701 = vor.u32 %v2697, %v2700
        %v2702 = vrot.slane %v2701, 4
        %v2704 = vshll.u32 %v2285, 16
        %v2706 = vrot.slane %v2704, 5
        %v2707 = vsel %vm1548, %v2702, %v2706
        %v2709 = vshrl.u32 %v2254, 16
        %v2711 = vrot.slane %v2709, 4
        %v2712 = vshll.u32 %v2254, 16
        %v2714 = vrot.slane %v2712, 5
        %v2715 = vor.u32 %v2711, %v2714
        %v2716 = vrot.slane %v2715, 4
        %v2718 = vshll.u32 %v2286, 16
        %v2720 = vrot.slane %v2718, 5
        %v2721 = vsel %vm1548, %v2716, %v2720
        %v2723 = vshrl.u32 %v2255, 16
        %v2725 = vrot.slane %v2723, 4
        %v2726 = vshll.u32 %v2255, 16
        %v2728 = vrot.slane %v2726, 5
        %v2729 = vor.u32 %v2725, %v2728
        %v2730 = vrot.slane %v2729, 4
        %v2732 = vshll.u32 %v2287, 16
        %v2734 = vrot.slane %v2732, 5
        %v2735 = vsel %vm1548, %v2730, %v2734
        %v2736 = vld [vmem:[%s674] sm:$0xe]
        %v2737 = vld [vmem:[%s674 + $0x8] sm:$0xe]
        %v2738 = vld [vmem:[%s674 + $0x10] sm:$0xe]
        %v2739 = vld [vmem:[%s674 + $0x18] sm:$0xe]
        %v2740 = vld [vmem:[%s674 + $0x20] sm:$0xe]
        %v2741 = vld [vmem:[%s674 + $0x28] sm:$0xe]
        %v2742 = vld [vmem:[%s674 + $0x30] sm:$0xe]
        %v2743 = vld [vmem:[%s674 + $0x38] sm:$0xe]
        %v2744 = vld [vmem:[%s674 + $0x50] sm:$0xe]
        %v2745 = vld [vmem:[%s674 + $0x58] sm:$0xe]
        %v2746 = vld [vmem:[%s674 + $0x60] sm:$0xe]
        %v2747 = vld [vmem:[%s674 + $0x68] sm:$0xe]
        %v2748 = vld [vmem:[%s674 + $0x70] sm:$0xe]
        %v2749 = vld [vmem:[%s674 + $0x78] sm:$0xe]
        %v2750 = vld [vmem:[%s674 + $0x80] sm:$0xe]
        %v2751 = vld [vmem:[%s674 + $0x88] sm:$0xe]
        %v2752 = vld [vmem:[%s674 + $0xa0] sm:$0xe]
        %v2753 = vld [vmem:[%s674 + $0xa8] sm:$0xe]
        %v2754 = vld [vmem:[%s674 + $0xb0] sm:$0xe]
        %v2755 = vld [vmem:[%s674 + $0xb8] sm:$0xe]
        %v2756 = vld [vmem:[%s674 + $0xc0] sm:$0xe]
        %v2757 = vld [vmem:[%s674 + $0xc8] sm:$0xe]
        %v2758 = vld [vmem:[%s674 + $0xd0] sm:$0xe]
        %v2759 = vld [vmem:[%s674 + $0xd8] sm:$0xe]
        %v2760 = vld [vmem:[%s674 + $0xf0] sm:$0xe]
        %v2761 = vld [vmem:[%s674 + $0xf8] sm:$0xe]
        %v2762 = vld [vmem:[%s674 + $0x100] sm:$0xe]
        %v2763 = vld [vmem:[%s674 + $0x108] sm:$0xe]
        %v2764 = vld [vmem:[%s674 + $0x110] sm:$0xe]
        %v2765 = vld [vmem:[%s674 + $0x118] sm:$0xe]
        %v2766 = vld [vmem:[%s674 + $0x120] sm:$0xe]
        %v2767 = vld [vmem:[%s674 + $0x128] sm:$0xe]
        %v2832 = vrot.slane %v2736, 5
        %v2833 = vrot.slane %v2832, 4
        %v2834 = vrot.slane %v2256, 5
        %v2835 = vsel %vm2095, %v2833, %v2834
        %v2836 = vrot.slane %v2737, 5
        %v2837 = vrot.slane %v2836, 4
        %v2838 = vrot.slane %v2257, 5
        %v2839 = vsel %vm2095, %v2837, %v2838
        %v2840 = vrot.slane %v2738, 5
        %v2841 = vrot.slane %v2840, 4
        %v2842 = vrot.slane %v2258, 5
        %v2843 = vsel %vm2095, %v2841, %v2842
        %v2844 = vrot.slane %v2739, 5
        %v2845 = vrot.slane %v2844, 4
        %v2846 = vrot.slane %v2259, 5
        %v2847 = vsel %vm2095, %v2845, %v2846
        %v2848 = vrot.slane %v2740, 5
        %v2849 = vrot.slane %v2848, 4
        %v2850 = vrot.slane %v2260, 5
        %v2851 = vsel %vm2095, %v2849, %v2850
        %v2852 = vrot.slane %v2741, 5
        %v2853 = vrot.slane %v2852, 4
        %v2854 = vrot.slane %v2261, 5
        %v2855 = vsel %vm2095, %v2853, %v2854
        %v2856 = vrot.slane %v2742, 5
        %v2857 = vrot.slane %v2856, 4
        %v2858 = vrot.slane %v2262, 5
        %v2859 = vsel %vm2095, %v2857, %v2858
        %v2860 = vrot.slane %v2743, 5
        %v2861 = vrot.slane %v2860, 4
        %v2862 = vrot.slane %v2263, 5
        %v2863 = vsel %vm2095, %v2861, %v2862
        %v2864 = vrot.slane %v2744, 5
        %v2865 = vrot.slane %v2864, 4
        %v2866 = vrot.slane %v2264, 5
        %v2867 = vsel %vm2095, %v2865, %v2866
        %v2868 = vrot.slane %v2745, 5
        %v2869 = vrot.slane %v2868, 4
        %v2870 = vrot.slane %v2265, 5
        %v2871 = vsel %vm2095, %v2869, %v2870
        %v2872 = vrot.slane %v2746, 5
        %v2873 = vrot.slane %v2872, 4
        %v2874 = vrot.slane %v2266, 5
        %v2875 = vsel %vm2095, %v2873, %v2874
        %v2876 = vrot.slane %v2747, 5
        %v2877 = vrot.slane %v2876, 4
        %v2878 = vrot.slane %v2267, 5
        %v2879 = vsel %vm2095, %v2877, %v2878
        %v2880 = vrot.slane %v2748, 5
        %v2881 = vrot.slane %v2880, 4
        %v2882 = vrot.slane %v2268, 5
        %v2883 = vsel %vm2095, %v2881, %v2882
        %v2884 = vrot.slane %v2749, 5
        %v2885 = vrot.slane %v2884, 4
        %v2886 = vrot.slane %v2269, 5
        %v2887 = vsel %vm2095, %v2885, %v2886
        %v2888 = vrot.slane %v2750, 5
        %v2889 = vrot.slane %v2888, 4
        %v2890 = vrot.slane %v2270, 5
        %v2891 = vsel %vm2095, %v2889, %v2890
        %v2892 = vrot.slane %v2751, 5
        %v2893 = vrot.slane %v2892, 4
        %v2894 = vrot.slane %v2271, 5
        %v2895 = vsel %vm2095, %v2893, %v2894
        %v2896 = vrot.slane %v2752, 5
        %v2897 = vrot.slane %v2896, 4
        %v2898 = vrot.slane %v2272, 5
        %v2899 = vsel %vm2095, %v2897, %v2898
        %v2900 = vrot.slane %v2753, 5
        %v2901 = vrot.slane %v2900, 4
        %v2902 = vrot.slane %v2273, 5
        %v2903 = vsel %vm2095, %v2901, %v2902
        %v2904 = vrot.slane %v2754, 5
        %v2905 = vrot.slane %v2904, 4
        %v2906 = vrot.slane %v2274, 5
        %v2907 = vsel %vm2095, %v2905, %v2906
        %v2908 = vrot.slane %v2755, 5
        %v2909 = vrot.slane %v2908, 4
        %v2910 = vrot.slane %v2275, 5
        %v2911 = vsel %vm2095, %v2909, %v2910
        %v2912 = vrot.slane %v2756, 5
        %v2913 = vrot.slane %v2912, 4
        %v2914 = vrot.slane %v2276, 5
        %v2915 = vsel %vm2095, %v2913, %v2914
        %v2916 = vrot.slane %v2757, 5
        %v2917 = vrot.slane %v2916, 4
        %v2918 = vrot.slane %v2277, 5
        %v2919 = vsel %vm2095, %v2917, %v2918
        %v2920 = vrot.slane %v2758, 5
        %v2921 = vrot.slane %v2920, 4
        %v2922 = vrot.slane %v2278, 5
        %v2923 = vsel %vm2095, %v2921, %v2922
        %v2924 = vrot.slane %v2759, 5
        %v2925 = vrot.slane %v2924, 4
        %v2926 = vrot.slane %v2279, 5
        %v2927 = vsel %vm2095, %v2925, %v2926
        %v2928 = vrot.slane %v2760, 5
        %v2929 = vrot.slane %v2928, 4
        %v2930 = vrot.slane %v2280, 5
        %v2931 = vsel %vm2095, %v2929, %v2930
        %v2932 = vrot.slane %v2761, 5
        %v2933 = vrot.slane %v2932, 4
        %v2934 = vrot.slane %v2281, 5
        %v2935 = vsel %vm2095, %v2933, %v2934
        %v2936 = vrot.slane %v2762, 5
        %v2937 = vrot.slane %v2936, 4
        %v2938 = vrot.slane %v2282, 5
        %v2939 = vsel %vm2095, %v2937, %v2938
        %v2940 = vrot.slane %v2763, 5
        %v2941 = vrot.slane %v2940, 4
        %v2942 = vrot.slane %v2283, 5
        %v2943 = vsel %vm2095, %v2941, %v2942
        %v2944 = vrot.slane %v2764, 5
        %v2945 = vrot.slane %v2944, 4
        %v2946 = vrot.slane %v2284, 5
        %v2947 = vsel %vm2095, %v2945, %v2946
        %v2948 = vrot.slane %v2765, 5
        %v2949 = vrot.slane %v2948, 4
        %v2950 = vrot.slane %v2285, 5
        %v2951 = vsel %vm2095, %v2949, %v2950
        %v2952 = vrot.slane %v2766, 5
        %v2953 = vrot.slane %v2952, 4
        %v2954 = vrot.slane %v2286, 5
        %v2955 = vsel %vm2095, %v2953, %v2954
        %v2956 = vrot.slane %v2767, 5
        %v2957 = vrot.slane %v2956, 4
        %v2958 = vrot.slane %v2287, 5
        %v2959 = vsel %vm2095, %v2957, %v2958
        %s2960 = scalar_lea.vmem [#allocation2], 16
        %v2961 = vld [vmem:[%s2960] sm:$0xf]
        %v2962 = vld [vmem:[%s2960 + $0x8] sm:$0xf]
        %v2963 = vld [vmem:[%s2960 + $0x10] sm:$0xf]
        %v2964 = vld [vmem:[%s2960 + $0x18] sm:$0xf]
        %v2965 = vld [vmem:[%s2960 + $0x20] sm:$0xf]
        %v2966 = vld [vmem:[%s2960 + $0x28] sm:$0xf]
        %v2967 = vld [vmem:[%s2960 + $0x30] sm:$0xf]
        %v2968 = vld [vmem:[%s2960 + $0x38] sm:$0xf]
        %v2969 = vld [vmem:[%s2960 + $0x50] sm:$0xf]
        %v2970 = vld [vmem:[%s2960 + $0x58] sm:$0xf]
        %v2971 = vld [vmem:[%s2960 + $0x60] sm:$0xf]
        %v2972 = vld [vmem:[%s2960 + $0x68] sm:$0xf]
        %v2973 = vld [vmem:[%s2960 + $0x70] sm:$0xf]
        %v2974 = vld [vmem:[%s2960 + $0x78] sm:$0xf]
        %v2975 = vld [vmem:[%s2960 + $0x80] sm:$0xf]
        %v2976 = vld [vmem:[%s2960 + $0x88] sm:$0xf]
        %v2977 = vld [vmem:[%s2960 + $0xa0] sm:$0xf]
        %v2978 = vld [vmem:[%s2960 + $0xa8] sm:$0xf]
        %v2979 = vld [vmem:[%s2960 + $0xb0] sm:$0xf]
        %v2980 = vld [vmem:[%s2960 + $0xb8] sm:$0xf]
        %v2981 = vld [vmem:[%s2960 + $0xc0] sm:$0xf]
        %v2982 = vld [vmem:[%s2960 + $0xc8] sm:$0xf]
        %v2983 = vld [vmem:[%s2960 + $0xd0] sm:$0xf]
        %v2984 = vld [vmem:[%s2960 + $0xd8] sm:$0xf]
        %v2985 = vld [vmem:[%s2960 + $0xf0] sm:$0xf]
        %v2986 = vld [vmem:[%s2960 + $0xf8] sm:$0xf]
        %v2987 = vld [vmem:[%s2960 + $0x100] sm:$0xf]
        %v2988 = vld [vmem:[%s2960 + $0x108] sm:$0xf]
        %v2989 = vld [vmem:[%s2960 + $0x110] sm:$0xf]
        %v2990 = vld [vmem:[%s2960 + $0x118] sm:$0xf]
        %v2991 = vld [vmem:[%s2960 + $0x120] sm:$0xf]
        %v2992 = vld [vmem:[%s2960 + $0x128] sm:$0xf]
        %v2993 = vld [vmem:[%s2960 + $0x4] sm:$0x1]
        %v2994 = vld [vmem:[%s2960 + $0xc] sm:$0x1]
        %v2995 = vld [vmem:[%s2960 + $0x14] sm:$0x1]
        %v2996 = vld [vmem:[%s2960 + $0x1c] sm:$0x1]
        %v2997 = vld [vmem:[%s2960 + $0x24] sm:$0x1]
        %v2998 = vld [vmem:[%s2960 + $0x2c] sm:$0x1]
        %v2999 = vld [vmem:[%s2960 + $0x34] sm:$0x1]
        %v3000 = vld [vmem:[%s2960 + $0x3c] sm:$0x1]
        %v3001 = vld [vmem:[%s2960 + $0x54] sm:$0x1]
        %v3002 = vld [vmem:[%s2960 + $0x5c] sm:$0x1]
        %v3003 = vld [vmem:[%s2960 + $0x64] sm:$0x1]
        %v3004 = vld [vmem:[%s2960 + $0x6c] sm:$0x1]
        %v3005 = vld [vmem:[%s2960 + $0x74] sm:$0x1]
        %v3006 = vld [vmem:[%s2960 + $0x7c] sm:$0x1]
        %v3007 = vld [vmem:[%s2960 + $0x84] sm:$0x1]
        %v3008 = vld [vmem:[%s2960 + $0x8c] sm:$0x1]
        %v3009 = vld [vmem:[%s2960 + $0xa4] sm:$0x1]
        %v3010 = vld [vmem:[%s2960 + $0xac] sm:$0x1]
        %v3011 = vld [vmem:[%s2960 + $0xb4] sm:$0x1]
        %v3012 = vld [vmem:[%s2960 + $0xbc] sm:$0x1]
        %v3013 = vld [vmem:[%s2960 + $0xc4] sm:$0x1]
        %v3014 = vld [vmem:[%s2960 + $0xcc] sm:$0x1]
        %v3015 = vld [vmem:[%s2960 + $0xd4] sm:$0x1]
        %v3016 = vld [vmem:[%s2960 + $0xdc] sm:$0x1]
        %v3017 = vld [vmem:[%s2960 + $0xf4] sm:$0x1]
        %v3018 = vld [vmem:[%s2960 + $0xfc] sm:$0x1]
        %v3019 = vld [vmem:[%s2960 + $0x104] sm:$0x1]
        %v3020 = vld [vmem:[%s2960 + $0x10c] sm:$0x1]
        %v3021 = vld [vmem:[%s2960 + $0x114] sm:$0x1]
        %v3022 = vld [vmem:[%s2960 + $0x11c] sm:$0x1]
        %v3023 = vld [vmem:[%s2960 + $0x124] sm:$0x1]
        %v3024 = vld [vmem:[%s2960 + $0x12c] sm:$0x1]
        %v3026 = vshrl.u32 %v2961, 16
        %v3028 = vrot.slane %v3026, 4
        %v3029 = vshll.u32 %v2961, 16
        %v3031 = vrot.slane %v3029, 5
        %v3032 = vor.u32 %v3028, %v3031
        %v3033 = vrot.slane %v3032, 4
        %v3035 = vshll.u32 %v2993, 16
        %v3037 = vrot.slane %v3035, 5
        %v3038 = vsel %vm1548, %v3033, %v3037
        %v3040 = vshrl.u32 %v2962, 16
        %v3042 = vrot.slane %v3040, 4
        %v3043 = vshll.u32 %v2962, 16
        %v3045 = vrot.slane %v3043, 5
        %v3046 = vor.u32 %v3042, %v3045
        %v3047 = vrot.slane %v3046, 4
        %v3049 = vshll.u32 %v2994, 16
        %v3051 = vrot.slane %v3049, 5
        %v3052 = vsel %vm1548, %v3047, %v3051
        %v3054 = vshrl.u32 %v2963, 16
        %v3056 = vrot.slane %v3054, 4
        %v3057 = vshll.u32 %v2963, 16
        %v3059 = vrot.slane %v3057, 5
        %v3060 = vor.u32 %v3056, %v3059
        %v3061 = vrot.slane %v3060, 4
        %v3063 = vshll.u32 %v2995, 16
        %v3065 = vrot.slane %v3063, 5
        %v3066 = vsel %vm1548, %v3061, %v3065
        %v3068 = vshrl.u32 %v2964, 16
        %v3070 = vrot.slane %v3068, 4
        %v3071 = vshll.u32 %v2964, 16
        %v3073 = vrot.slane %v3071, 5
        %v3074 = vor.u32 %v3070, %v3073
        %v3075 = vrot.slane %v3074, 4
        %v3077 = vshll.u32 %v2996, 16
        %v3079 = vrot.slane %v3077, 5
        %v3080 = vsel %vm1548, %v3075, %v3079
        %v3082 = vshrl.u32 %v2965, 16
        %v3084 = vrot.slane %v3082, 4
        %v3085 = vshll.u32 %v2965, 16
        %v3087 = vrot.slane %v3085, 5
        %v3088 = vor.u32 %v3084, %v3087
        %v3089 = vrot.slane %v3088, 4
        %v3091 = vshll.u32 %v2997, 16
        %v3093 = vrot.slane %v3091, 5
        %v3094 = vsel %vm1548, %v3089, %v3093
        %v3096 = vshrl.u32 %v2966, 16
        %v3098 = vrot.slane %v3096, 4
        %v3099 = vshll.u32 %v2966, 16
        %v3101 = vrot.slane %v3099, 5
        %v3102 = vor.u32 %v3098, %v3101
        %v3103 = vrot.slane %v3102, 4
        %v3105 = vshll.u32 %v2998, 16
        %v3107 = vrot.slane %v3105, 5
        %v3108 = vsel %vm1548, %v3103, %v3107
        %v3110 = vshrl.u32 %v2967, 16
        %v3112 = vrot.slane %v3110, 4
        %v3113 = vshll.u32 %v2967, 16
        %v3115 = vrot.slane %v3113, 5
        %v3116 = vor.u32 %v3112, %v3115
        %v3117 = vrot.slane %v3116, 4
        %v3119 = vshll.u32 %v2999, 16
        %v3121 = vrot.slane %v3119, 5
        %v3122 = vsel %vm1548, %v3117, %v3121
        %v3124 = vshrl.u32 %v2968, 16
        %v3126 = vrot.slane %v3124, 4
        %v3127 = vshll.u32 %v2968, 16
        %v3129 = vrot.slane %v3127, 5
        %v3130 = vor.u32 %v3126, %v3129
        %v3131 = vrot.slane %v3130, 4
        %v3133 = vshll.u32 %v3000, 16
        %v3135 = vrot.slane %v3133, 5
        %v3136 = vsel %vm1548, %v3131, %v3135
        %v3138 = vshrl.u32 %v2969, 16
        %v3140 = vrot.slane %v3138, 4
        %v3141 = vshll.u32 %v2969, 16
        %v3143 = vrot.slane %v3141, 5
        %v3144 = vor.u32 %v3140, %v3143
        %v3145 = vrot.slane %v3144, 4
        %v3147 = vshll.u32 %v3001, 16
        %v3149 = vrot.slane %v3147, 5
        %v3150 = vsel %vm1548, %v3145, %v3149
        %v3152 = vshrl.u32 %v2970, 16
        %v3154 = vrot.slane %v3152, 4
        %v3155 = vshll.u32 %v2970, 16
        %v3157 = vrot.slane %v3155, 5
        %v3158 = vor.u32 %v3154, %v3157
        %v3159 = vrot.slane %v3158, 4
        %v3161 = vshll.u32 %v3002, 16
        %v3163 = vrot.slane %v3161, 5
        %v3164 = vsel %vm1548, %v3159, %v3163
        %v3166 = vshrl.u32 %v2971, 16
        %v3168 = vrot.slane %v3166, 4
        %v3169 = vshll.u32 %v2971, 16
        %v3171 = vrot.slane %v3169, 5
        %v3172 = vor.u32 %v3168, %v3171
        %v3173 = vrot.slane %v3172, 4
        %v3175 = vshll.u32 %v3003, 16
        %v3177 = vrot.slane %v3175, 5
        %v3178 = vsel %vm1548, %v3173, %v3177
        %v3180 = vshrl.u32 %v2972, 16
        %v3182 = vrot.slane %v3180, 4
        %v3183 = vshll.u32 %v2972, 16
        %v3185 = vrot.slane %v3183, 5
        %v3186 = vor.u32 %v3182, %v3185
        %v3187 = vrot.slane %v3186, 4
        %v3189 = vshll.u32 %v3004, 16
        %v3191 = vrot.slane %v3189, 5
        %v3192 = vsel %vm1548, %v3187, %v3191
        %v3194 = vshrl.u32 %v2973, 16
        %v3196 = vrot.slane %v3194, 4
        %v3197 = vshll.u32 %v2973, 16
        %v3199 = vrot.slane %v3197, 5
        %v3200 = vor.u32 %v3196, %v3199
        %v3201 = vrot.slane %v3200, 4
        %v3203 = vshll.u32 %v3005, 16
        %v3205 = vrot.slane %v3203, 5
        %v3206 = vsel %vm1548, %v3201, %v3205
        %v3208 = vshrl.u32 %v2974, 16
        %v3210 = vrot.slane %v3208, 4
        %v3211 = vshll.u32 %v2974, 16
        %v3213 = vrot.slane %v3211, 5
        %v3214 = vor.u32 %v3210, %v3213
        %v3215 = vrot.slane %v3214, 4
        %v3217 = vshll.u32 %v3006, 16
        %v3219 = vrot.slane %v3217, 5
        %v3220 = vsel %vm1548, %v3215, %v3219
        %v3222 = vshrl.u32 %v2975, 16
        %v3224 = vrot.slane %v3222, 4
        %v3225 = vshll.u32 %v2975, 16
        %v3227 = vrot.slane %v3225, 5
        %v3228 = vor.u32 %v3224, %v3227
        %v3229 = vrot.slane %v3228, 4
        %v3231 = vshll.u32 %v3007, 16
        %v3233 = vrot.slane %v3231, 5
        %v3234 = vsel %vm1548, %v3229, %v3233
        %v3236 = vshrl.u32 %v2976, 16
        %v3238 = vrot.slane %v3236, 4
        %v3239 = vshll.u32 %v2976, 16
        %v3241 = vrot.slane %v3239, 5
        %v3242 = vor.u32 %v3238, %v3241
        %v3243 = vrot.slane %v3242, 4
        %v3245 = vshll.u32 %v3008, 16
        %v3247 = vrot.slane %v3245, 5
        %v3248 = vsel %vm1548, %v3243, %v3247
        %v3250 = vshrl.u32 %v2977, 16
        %v3252 = vrot.slane %v3250, 4
        %v3253 = vshll.u32 %v2977, 16
        %v3255 = vrot.slane %v3253, 5
        %v3256 = vor.u32 %v3252, %v3255
        %v3257 = vrot.slane %v3256, 4
        %v3259 = vshll.u32 %v3009, 16
        %v3261 = vrot.slane %v3259, 5
        %v3262 = vsel %vm1548, %v3257, %v3261
        %v3264 = vshrl.u32 %v2978, 16
        %v3266 = vrot.slane %v3264, 4
        %v3267 = vshll.u32 %v2978, 16
        %v3269 = vrot.slane %v3267, 5
        %v3270 = vor.u32 %v3266, %v3269
        %v3271 = vrot.slane %v3270, 4
        %v3273 = vshll.u32 %v3010, 16
        %v3275 = vrot.slane %v3273, 5
        %v3276 = vsel %vm1548, %v3271, %v3275
        %v3278 = vshrl.u32 %v2979, 16
        %v3280 = vrot.slane %v3278, 4
        %v3281 = vshll.u32 %v2979, 16
        %v3283 = vrot.slane %v3281, 5
        %v3284 = vor.u32 %v3280, %v3283
        %v3285 = vrot.slane %v3284, 4
        %v3287 = vshll.u32 %v3011, 16
        %v3289 = vrot.slane %v3287, 5
        %v3290 = vsel %vm1548, %v3285, %v3289
        %v3292 = vshrl.u32 %v2980, 16
        %v3294 = vrot.slane %v3292, 4
        %v3295 = vshll.u32 %v2980, 16
        %v3297 = vrot.slane %v3295, 5
        %v3298 = vor.u32 %v3294, %v3297
        %v3299 = vrot.slane %v3298, 4
        %v3301 = vshll.u32 %v3012, 16
        %v3303 = vrot.slane %v3301, 5
        %v3304 = vsel %vm1548, %v3299, %v3303
        %v3306 = vshrl.u32 %v2981, 16
        %v3308 = vrot.slane %v3306, 4
        %v3309 = vshll.u32 %v2981, 16
        %v3311 = vrot.slane %v3309, 5
        %v3312 = vor.u32 %v3308, %v3311
        %v3313 = vrot.slane %v3312, 4
        %v3315 = vshll.u32 %v3013, 16
        %v3317 = vrot.slane %v3315, 5
        %v3318 = vsel %vm1548, %v3313, %v3317
        %v3320 = vshrl.u32 %v2982, 16
        %v3322 = vrot.slane %v3320, 4
        %v3323 = vshll.u32 %v2982, 16
        %v3325 = vrot.slane %v3323, 5
        %v3326 = vor.u32 %v3322, %v3325
        %v3327 = vrot.slane %v3326, 4
        %v3329 = vshll.u32 %v3014, 16
        %v3331 = vrot.slane %v3329, 5
        %v3332 = vsel %vm1548, %v3327, %v3331
        %v3334 = vshrl.u32 %v2983, 16
        %v3336 = vrot.slane %v3334, 4
        %v3337 = vshll.u32 %v2983, 16
        %v3339 = vrot.slane %v3337, 5
        %v3340 = vor.u32 %v3336, %v3339
        %v3341 = vrot.slane %v3340, 4
        %v3343 = vshll.u32 %v3015, 16
        %v3345 = vrot.slane %v3343, 5
        %v3346 = vsel %vm1548, %v3341, %v3345
        %v3348 = vshrl.u32 %v2984, 16
        %v3350 = vrot.slane %v3348, 4
        %v3351 = vshll.u32 %v2984, 16
        %v3353 = vrot.slane %v3351, 5
        %v3354 = vor.u32 %v3350, %v3353
        %v3355 = vrot.slane %v3354, 4
        %v3357 = vshll.u32 %v3016, 16
        %v3359 = vrot.slane %v3357, 5
        %v3360 = vsel %vm1548, %v3355, %v3359
        %v3362 = vshrl.u32 %v2985, 16
        %v3364 = vrot.slane %v3362, 4
        %v3365 = vshll.u32 %v2985, 16
        %v3367 = vrot.slane %v3365, 5
        %v3368 = vor.u32 %v3364, %v3367
        %v3369 = vrot.slane %v3368, 4
        %v3371 = vshll.u32 %v3017, 16
        %v3373 = vrot.slane %v3371, 5
        %v3374 = vsel %vm1548, %v3369, %v3373
        %v3376 = vshrl.u32 %v2986, 16
        %v3378 = vrot.slane %v3376, 4
        %v3379 = vshll.u32 %v2986, 16
        %v3381 = vrot.slane %v3379, 5
        %v3382 = vor.u32 %v3378, %v3381
        %v3383 = vrot.slane %v3382, 4
        %v3385 = vshll.u32 %v3018, 16
        %v3387 = vrot.slane %v3385, 5
        %v3388 = vsel %vm1548, %v3383, %v3387
        %v3390 = vshrl.u32 %v2987, 16
        %v3392 = vrot.slane %v3390, 4
        %v3393 = vshll.u32 %v2987, 16
        %v3395 = vrot.slane %v3393, 5
        %v3396 = vor.u32 %v3392, %v3395
        %v3397 = vrot.slane %v3396, 4
        %v3399 = vshll.u32 %v3019, 16
        %v3401 = vrot.slane %v3399, 5
        %v3402 = vsel %vm1548, %v3397, %v3401
        %v3404 = vshrl.u32 %v2988, 16
        %v3406 = vrot.slane %v3404, 4
        %v3407 = vshll.u32 %v2988, 16
        %v3409 = vrot.slane %v3407, 5
        %v3410 = vor.u32 %v3406, %v3409
        %v3411 = vrot.slane %v3410, 4
        %v3413 = vshll.u32 %v3020, 16
        %v3415 = vrot.slane %v3413, 5
        %v3416 = vsel %vm1548, %v3411, %v3415
        %v3418 = vshrl.u32 %v2989, 16
        %v3420 = vrot.slane %v3418, 4
        %v3421 = vshll.u32 %v2989, 16
        %v3423 = vrot.slane %v3421, 5
        %v3424 = vor.u32 %v3420, %v3423
        %v3425 = vrot.slane %v3424, 4
        %v3427 = vshll.u32 %v3021, 16
        %v3429 = vrot.slane %v3427, 5
        %v3430 = vsel %vm1548, %v3425, %v3429
        %v3432 = vshrl.u32 %v2990, 16
        %v3434 = vrot.slane %v3432, 4
        %v3435 = vshll.u32 %v2990, 16
        %v3437 = vrot.slane %v3435, 5
        %v3438 = vor.u32 %v3434, %v3437
        %v3439 = vrot.slane %v3438, 4
        %v3441 = vshll.u32 %v3022, 16
        %v3443 = vrot.slane %v3441, 5
        %v3444 = vsel %vm1548, %v3439, %v3443
        %v3446 = vshrl.u32 %v2991, 16
        %v3448 = vrot.slane %v3446, 4
        %v3449 = vshll.u32 %v2991, 16
        %v3451 = vrot.slane %v3449, 5
        %v3452 = vor.u32 %v3448, %v3451
        %v3453 = vrot.slane %v3452, 4
        %v3455 = vshll.u32 %v3023, 16
        %v3457 = vrot.slane %v3455, 5
        %v3458 = vsel %vm1548, %v3453, %v3457
        %v3460 = vshrl.u32 %v2992, 16
        %v3462 = vrot.slane %v3460, 4
        %v3463 = vshll.u32 %v2992, 16
        %v3465 = vrot.slane %v3463, 5
        %v3466 = vor.u32 %v3462, %v3465
        %v3467 = vrot.slane %v3466, 4
        %v3469 = vshll.u32 %v3024, 16
        %v3471 = vrot.slane %v3469, 5
        %v3472 = vsel %vm1548, %v3467, %v3471
        %v3473 = vld [vmem:[%s2960] sm:$0xe]
        %v3474 = vld [vmem:[%s2960 + $0x8] sm:$0xe]
        %v3475 = vld [vmem:[%s2960 + $0x10] sm:$0xe]
        %v3476 = vld [vmem:[%s2960 + $0x18] sm:$0xe]
        %v3477 = vld [vmem:[%s2960 + $0x20] sm:$0xe]
        %v3478 = vld [vmem:[%s2960 + $0x28] sm:$0xe]
        %v3479 = vld [vmem:[%s2960 + $0x30] sm:$0xe]
        %v3480 = vld [vmem:[%s2960 + $0x38] sm:$0xe]
        %v3481 = vld [vmem:[%s2960 + $0x50] sm:$0xe]
        %v3482 = vld [vmem:[%s2960 + $0x58] sm:$0xe]
        %v3483 = vld [vmem:[%s2960 + $0x60] sm:$0xe]
        %v3484 = vld [vmem:[%s2960 + $0x68] sm:$0xe]
        %v3485 = vld [vmem:[%s2960 + $0x70] sm:$0xe]
        %v3486 = vld [vmem:[%s2960 + $0x78] sm:$0xe]
        %v3487 = vld [vmem:[%s2960 + $0x80] sm:$0xe]
        %v3488 = vld [vmem:[%s2960 + $0x88] sm:$0xe]
        %v3489 = vld [vmem:[%s2960 + $0xa0] sm:$0xe]
        %v3490 = vld [vmem:[%s2960 + $0xa8] sm:$0xe]
        %v3491 = vld [vmem:[%s2960 + $0xb0] sm:$0xe]
        %v3492 = vld [vmem:[%s2960 + $0xb8] sm:$0xe]
        %v3493 = vld [vmem:[%s2960 + $0xc0] sm:$0xe]
        %v3494 = vld [vmem:[%s2960 + $0xc8] sm:$0xe]
        %v3495 = vld [vmem:[%s2960 + $0xd0] sm:$0xe]
        %v3496 = vld [vmem:[%s2960 + $0xd8] sm:$0xe]
        %v3497 = vld [vmem:[%s2960 + $0xf0] sm:$0xe]
        %v3498 = vld [vmem:[%s2960 + $0xf8] sm:$0xe]
        %v3499 = vld [vmem:[%s2960 + $0x100] sm:$0xe]
        %v3500 = vld [vmem:[%s2960 + $0x108] sm:$0xe]
        %v3501 = vld [vmem:[%s2960 + $0x110] sm:$0xe]
        %v3502 = vld [vmem:[%s2960 + $0x118] sm:$0xe]
        %v3503 = vld [vmem:[%s2960 + $0x120] sm:$0xe]
        %v3504 = vld [vmem:[%s2960 + $0x128] sm:$0xe]
        %v3569 = vrot.slane %v3473, 5
        %v3570 = vrot.slane %v3569, 4
        %v3571 = vrot.slane %v2993, 5
        %v3572 = vsel %vm2095, %v3570, %v3571
        %v3573 = vrot.slane %v3474, 5
        %v3574 = vrot.slane %v3573, 4
        %v3575 = vrot.slane %v2994, 5
        %v3576 = vsel %vm2095, %v3574, %v3575
        %v3577 = vrot.slane %v3475, 5
        %v3578 = vrot.slane %v3577, 4
        %v3579 = vrot.slane %v2995, 5
        %v3580 = vsel %vm2095, %v3578, %v3579
        %v3581 = vrot.slane %v3476, 5
        %v3582 = vrot.slane %v3581, 4
        %v3583 = vrot.slane %v2996, 5
        %v3584 = vsel %vm2095, %v3582, %v3583
        %v3585 = vrot.slane %v3477, 5
        %v3586 = vrot.slane %v3585, 4
        %v3587 = vrot.slane %v2997, 5
        %v3588 = vsel %vm2095, %v3586, %v3587
        %v3589 = vrot.slane %v3478, 5
        %v3590 = vrot.slane %v3589, 4
        %v3591 = vrot.slane %v2998, 5
        %v3592 = vsel %vm2095, %v3590, %v3591
        %v3593 = vrot.slane %v3479, 5
        %v3594 = vrot.slane %v3593, 4
        %v3595 = vrot.slane %v2999, 5
        %v3596 = vsel %vm2095, %v3594, %v3595
        %v3597 = vrot.slane %v3480, 5
        %v3598 = vrot.slane %v3597, 4
        %v3599 = vrot.slane %v3000, 5
        %v3600 = vsel %vm2095, %v3598, %v3599
        %v3601 = vrot.slane %v3481, 5
        %v3602 = vrot.slane %v3601, 4
        %v3603 = vrot.slane %v3001, 5
        %v3604 = vsel %vm2095, %v3602, %v3603
        %v3605 = vrot.slane %v3482, 5
        %v3606 = vrot.slane %v3605, 4
        %v3607 = vrot.slane %v3002, 5
        %v3608 = vsel %vm2095, %v3606, %v3607
        %v3609 = vrot.slane %v3483, 5
        %v3610 = vrot.slane %v3609, 4
        %v3611 = vrot.slane %v3003, 5
        %v3612 = vsel %vm2095, %v3610, %v3611
        %v3613 = vrot.slane %v3484, 5
        %v3614 = vrot.slane %v3613, 4
        %v3615 = vrot.slane %v3004, 5
        %v3616 = vsel %vm2095, %v3614, %v3615
        %v3617 = vrot.slane %v3485, 5
        %v3618 = vrot.slane %v3617, 4
        %v3619 = vrot.slane %v3005, 5
        %v3620 = vsel %vm2095, %v3618, %v3619
        %v3621 = vrot.slane %v3486, 5
        %v3622 = vrot.slane %v3621, 4
        %v3623 = vrot.slane %v3006, 5
        %v3624 = vsel %vm2095, %v3622, %v3623
        %v3625 = vrot.slane %v3487, 5
        %v3626 = vrot.slane %v3625, 4
        %v3627 = vrot.slane %v3007, 5
        %v3628 = vsel %vm2095, %v3626, %v3627
        %v3629 = vrot.slane %v3488, 5
        %v3630 = vrot.slane %v3629, 4
        %v3631 = vrot.slane %v3008, 5
        %v3632 = vsel %vm2095, %v3630, %v3631
        %v3633 = vrot.slane %v3489, 5
        %v3634 = vrot.slane %v3633, 4
        %v3635 = vrot.slane %v3009, 5
        %v3636 = vsel %vm2095, %v3634, %v3635
        %v3637 = vrot.slane %v3490, 5
        %v3638 = vrot.slane %v3637, 4
        %v3639 = vrot.slane %v3010, 5
        %v3640 = vsel %vm2095, %v3638, %v3639
        %v3641 = vrot.slane %v3491, 5
        %v3642 = vrot.slane %v3641, 4
        %v3643 = vrot.slane %v3011, 5
        %v3644 = vsel %vm2095, %v3642, %v3643
        %v3645 = vrot.slane %v3492, 5
        %v3646 = vrot.slane %v3645, 4
        %v3647 = vrot.slane %v3012, 5
        %v3648 = vsel %vm2095, %v3646, %v3647
        %v3649 = vrot.slane %v3493, 5
        %v3650 = vrot.slane %v3649, 4
        %v3651 = vrot.slane %v3013, 5
        %v3652 = vsel %vm2095, %v3650, %v3651
        %v3653 = vrot.slane %v3494, 5
        %v3654 = vrot.slane %v3653, 4
        %v3655 = vrot.slane %v3014, 5
        %v3656 = vsel %vm2095, %v3654, %v3655
        %v3657 = vrot.slane %v3495, 5
        %v3658 = vrot.slane %v3657, 4
        %v3659 = vrot.slane %v3015, 5
        %v3660 = vsel %vm2095, %v3658, %v3659
        %v3661 = vrot.slane %v3496, 5
        %v3662 = vrot.slane %v3661, 4
        %v3663 = vrot.slane %v3016, 5
        %v3664 = vsel %vm2095, %v3662, %v3663
        %v3665 = vrot.slane %v3497, 5
        %v3666 = vrot.slane %v3665, 4
        %v3667 = vrot.slane %v3017, 5
        %v3668 = vsel %vm2095, %v3666, %v3667
        %v3669 = vrot.slane %v3498, 5
        %v3670 = vrot.slane %v3669, 4
        %v3671 = vrot.slane %v3018, 5
        %v3672 = vsel %vm2095, %v3670, %v3671
        %v3673 = vrot.slane %v3499, 5
        %v3674 = vrot.slane %v3673, 4
        %v3675 = vrot.slane %v3019, 5
        %v3676 = vsel %vm2095, %v3674, %v3675
        %v3677 = vrot.slane %v3500, 5
        %v3678 = vrot.slane %v3677, 4
        %v3679 = vrot.slane %v3020, 5
        %v3680 = vsel %vm2095, %v3678, %v3679
        %v3681 = vrot.slane %v3501, 5
        %v3682 = vrot.slane %v3681, 4
        %v3683 = vrot.slane %v3021, 5
        %v3684 = vsel %vm2095, %v3682, %v3683
        %v3685 = vrot.slane %v3502, 5
        %v3686 = vrot.slane %v3685, 4
        %v3687 = vrot.slane %v3022, 5
        %v3688 = vsel %vm2095, %v3686, %v3687
        %v3689 = vrot.slane %v3503, 5
        %v3690 = vrot.slane %v3689, 4
        %v3691 = vrot.slane %v3023, 5
        %v3692 = vsel %vm2095, %v3690, %v3691
        %v3693 = vrot.slane %v3504, 5
        %v3694 = vrot.slane %v3693, 4
        %v3695 = vrot.slane %v3024, 5
        %v3696 = vsel %vm2095, %v3694, %v3695
        %v3729 = vunpack.c.l.b16 %v1482
        %v3730 = vunpack.c.l.b16 %v1483
        %v3731 = vunpack.c.l.b16 %v1484
        %v3732 = vunpack.c.l.b16 %v1485
        %v3733 = vunpack.c.l.b16 %v1486
        %v3734 = vunpack.c.l.b16 %v1487
        %v3735 = vunpack.c.l.b16 %v1488
        %v3736 = vunpack.c.l.b16 %v1489
        %v3737 = vunpack.c.l.b16 %v1490
        %v3738 = vunpack.c.l.b16 %v1491
        %v3739 = vunpack.c.l.b16 %v1492
        %v3740 = vunpack.c.l.b16 %v1493
        %v3741 = vunpack.c.l.b16 %v1494
        %v3742 = vunpack.c.l.b16 %v1495
        %v3743 = vunpack.c.l.b16 %v1496
        %v3744 = vunpack.c.l.b16 %v1497
        %v3745 = vunpack.c.l.b16 %v1498
        %v3746 = vunpack.c.l.b16 %v1499
        %v3747 = vunpack.c.l.b16 %v1500
        %v3748 = vunpack.c.l.b16 %v1501
        %v3749 = vunpack.c.l.b16 %v1502
        %v3750 = vunpack.c.l.b16 %v1503
        %v3751 = vunpack.c.l.b16 %v1504
        %v3752 = vunpack.c.l.b16 %v1505
        %v3753 = vunpack.c.l.b16 %v1506
        %v3754 = vunpack.c.l.b16 %v1507
        %v3755 = vunpack.c.l.b16 %v1508
        %v3756 = vunpack.c.l.b16 %v1509
        %v3757 = vunpack.c.l.b16 %v1510
        %v3758 = vunpack.c.l.b16 %v1511
        %v3759 = vunpack.c.l.b16 %v1512
        %v3760 = vunpack.c.l.b16 %v1513
        %v3761 = vpack.c.b16 %v3730, %v3729
        %v3762 = vpack.c.b16 %v3732, %v3731
        %v3763 = vpack.c.b16 %v3734, %v3733
        %v3764 = vpack.c.b16 %v3736, %v3735
        %v3765 = vpack.c.b16 %v3738, %v3737
        %v3766 = vpack.c.b16 %v3740, %v3739
        %v3767 = vpack.c.b16 %v3742, %v3741
        %v3768 = vpack.c.b16 %v3744, %v3743
        %v3769 = vpack.c.b16 %v3746, %v3745
        %v3770 = vpack.c.b16 %v3748, %v3747
        %v3771 = vpack.c.b16 %v3750, %v3749
        %v3772 = vpack.c.b16 %v3752, %v3751
        %v3773 = vpack.c.b16 %v3754, %v3753
        %v3774 = vpack.c.b16 %v3756, %v3755
        %v3775 = vpack.c.b16 %v3758, %v3757
        %v3776 = vpack.c.b16 %v3760, %v3759
        %v3793 = vunpack.c.l.b16 %v1562
        %v3794 = vunpack.c.l.b16 %v1576
        %v3795 = vunpack.c.l.b16 %v1590
        %v3796 = vunpack.c.l.b16 %v1604
        %v3797 = vunpack.c.l.b16 %v1618
        %v3798 = vunpack.c.l.b16 %v1632
        %v3799 = vunpack.c.l.b16 %v1646
        %v3800 = vunpack.c.l.b16 %v1660
        %v3801 = vunpack.c.l.b16 %v1674
        %v3802 = vunpack.c.l.b16 %v1688
        %v3803 = vunpack.c.l.b16 %v1702
        %v3804 = vunpack.c.l.b16 %v1716
        %v3805 = vunpack.c.l.b16 %v1730
        %v3806 = vunpack.c.l.b16 %v1744
        %v3807 = vunpack.c.l.b16 %v1758
        %v3808 = vunpack.c.l.b16 %v1772
        %v3809 = vunpack.c.l.b16 %v1786
        %v3810 = vunpack.c.l.b16 %v1800
        %v3811 = vunpack.c.l.b16 %v1814
        %v3812 = vunpack.c.l.b16 %v1828
        %v3813 = vunpack.c.l.b16 %v1842
        %v3814 = vunpack.c.l.b16 %v1856
        %v3815 = vunpack.c.l.b16 %v1870
        %v3816 = vunpack.c.l.b16 %v1884
        %v3817 = vunpack.c.l.b16 %v1898
        %v3818 = vunpack.c.l.b16 %v1912
        %v3819 = vunpack.c.l.b16 %v1926
        %v3820 = vunpack.c.l.b16 %v1940
        %v3821 = vunpack.c.l.b16 %v1954
        %v3822 = vunpack.c.l.b16 %v1968
        %v3823 = vunpack.c.l.b16 %v1982
        %v3824 = vunpack.c.l.b16 %v1996
        %v3825 = vpack.c.b16 %v3794, %v3793
        %v3826 = vpack.c.b16 %v3796, %v3795
        %v3827 = vpack.c.b16 %v3798, %v3797
        %v3828 = vpack.c.b16 %v3800, %v3799
        %v3829 = vpack.c.b16 %v3802, %v3801
        %v3830 = vpack.c.b16 %v3804, %v3803
        %v3831 = vpack.c.b16 %v3806, %v3805
        %v3832 = vpack.c.b16 %v3808, %v3807
        %v3833 = vpack.c.b16 %v3810, %v3809
        %v3834 = vpack.c.b16 %v3812, %v3811
        %v3835 = vpack.c.b16 %v3814, %v3813
        %v3836 = vpack.c.b16 %v3816, %v3815
        %v3837 = vpack.c.b16 %v3818, %v3817
        %v3838 = vpack.c.b16 %v3820, %v3819
        %v3839 = vpack.c.b16 %v3822, %v3821
        %v3840 = vpack.c.b16 %v3824, %v3823
        %v3857 = vunpack.c.l.b16 %v2099
        %v3858 = vunpack.c.l.b16 %v2103
        %v3859 = vunpack.c.l.b16 %v2107
        %v3860 = vunpack.c.l.b16 %v2111
        %v3861 = vunpack.c.l.b16 %v2115
        %v3862 = vunpack.c.l.b16 %v2119
        %v3863 = vunpack.c.l.b16 %v2123
        %v3864 = vunpack.c.l.b16 %v2127
        %v3865 = vunpack.c.l.b16 %v2131
        %v3866 = vunpack.c.l.b16 %v2135
        %v3867 = vunpack.c.l.b16 %v2139
        %v3868 = vunpack.c.l.b16 %v2143
        %v3869 = vunpack.c.l.b16 %v2147
        %v3870 = vunpack.c.l.b16 %v2151
        %v3871 = vunpack.c.l.b16 %v2155
        %v3872 = vunpack.c.l.b16 %v2159
        %v3873 = vunpack.c.l.b16 %v2163
        %v3874 = vunpack.c.l.b16 %v2167
        %v3875 = vunpack.c.l.b16 %v2171
        %v3876 = vunpack.c.l.b16 %v2175
        %v3877 = vunpack.c.l.b16 %v2179
        %v3878 = vunpack.c.l.b16 %v2183
        %v3879 = vunpack.c.l.b16 %v2187
        %v3880 = vunpack.c.l.b16 %v2191
        %v3881 = vunpack.c.l.b16 %v2195
        %v3882 = vunpack.c.l.b16 %v2199
        %v3883 = vunpack.c.l.b16 %v2203
        %v3884 = vunpack.c.l.b16 %v2207
        %v3885 = vunpack.c.l.b16 %v2211
        %v3886 = vunpack.c.l.b16 %v2215
        %v3887 = vunpack.c.l.b16 %v2219
        %v3888 = vunpack.c.l.b16 %v2223
        %v3889 = vpack.c.b16 %v3858, %v3857
        %v3890 = vpack.c.b16 %v3860, %v3859
        %v3891 = vpack.c.b16 %v3862, %v3861
        %v3892 = vpack.c.b16 %v3864, %v3863
        %v3893 = vpack.c.b16 %v3866, %v3865
        %v3894 = vpack.c.b16 %v3868, %v3867
        %v3895 = vpack.c.b16 %v3870, %v3869
        %v3896 = vpack.c.b16 %v3872, %v3871
        %v3897 = vpack.c.b16 %v3874, %v3873
        %v3898 = vpack.c.b16 %v3876, %v3875
        %v3899 = vpack.c.b16 %v3878, %v3877
        %v3900 = vpack.c.b16 %v3880, %v3879
        %v3901 = vpack.c.b16 %v3882, %v3881
        %v3902 = vpack.c.b16 %v3884, %v3883
        %v3903 = vpack.c.b16 %v3886, %v3885
        %v3904 = vpack.c.b16 %v3888, %v3887
        %v3953 = vunpack.c.l.b16 %v2224
        %v3954 = vunpack.c.l.b16 %v2225
        %v3955 = vunpack.c.l.b16 %v2226
        %v3956 = vunpack.c.l.b16 %v2227
        %v3957 = vunpack.c.l.b16 %v2228
        %v3958 = vunpack.c.l.b16 %v2229
        %v3959 = vunpack.c.l.b16 %v2230
        %v3960 = vunpack.c.l.b16 %v2231
        %v3961 = vunpack.c.l.b16 %v2232
        %v3962 = vunpack.c.l.b16 %v2233
        %v3963 = vunpack.c.l.b16 %v2234
        %v3964 = vunpack.c.l.b16 %v2235
        %v3965 = vunpack.c.l.b16 %v2236
        %v3966 = vunpack.c.l.b16 %v2237
        %v3967 = vunpack.c.l.b16 %v2238
        %v3968 = vunpack.c.l.b16 %v2239
        %v3969 = vunpack.c.l.b16 %v2240
        %v3970 = vunpack.c.l.b16 %v2241
        %v3971 = vunpack.c.l.b16 %v2242
        %v3972 = vunpack.c.l.b16 %v2243
        %v3973 = vunpack.c.l.b16 %v2244
        %v3974 = vunpack.c.l.b16 %v2245
        %v3975 = vunpack.c.l.b16 %v2246
        %v3976 = vunpack.c.l.b16 %v2247
        %v3977 = vunpack.c.l.b16 %v2248
        %v3978 = vunpack.c.l.b16 %v2249
        %v3979 = vunpack.c.l.b16 %v2250
        %v3980 = vunpack.c.l.b16 %v2251
        %v3981 = vunpack.c.l.b16 %v2252
        %v3982 = vunpack.c.l.b16 %v2253
        %v3983 = vunpack.c.l.b16 %v2254
        %v3984 = vunpack.c.l.b16 %v2255
        %v3985 = vpack.c.b16 %v3954, %v3953
        %v3986 = vpack.c.b16 %v3956, %v3955
        %v3987 = vpack.c.b16 %v3958, %v3957
        %v3988 = vpack.c.b16 %v3960, %v3959
        %v3989 = vpack.c.b16 %v3962, %v3961
        %v3990 = vpack.c.b16 %v3964, %v3963
        %v3991 = vpack.c.b16 %v3966, %v3965
        %v3992 = vpack.c.b16 %v3968, %v3967
        %v3993 = vpack.c.b16 %v3970, %v3969
        %v3994 = vpack.c.b16 %v3972, %v3971
        %v3995 = vpack.c.b16 %v3974, %v3973
        %v3996 = vpack.c.b16 %v3976, %v3975
        %v3997 = vpack.c.b16 %v3978, %v3977
        %v3998 = vpack.c.b16 %v3980, %v3979
        %v3999 = vpack.c.b16 %v3982, %v3981
        %v4000 = vpack.c.b16 %v3984, %v3983
        %v4017 = vunpack.c.l.b16 %v2301
        %v4018 = vunpack.c.l.b16 %v2315
        %v4019 = vunpack.c.l.b16 %v2329
        %v4020 = vunpack.c.l.b16 %v2343
        %v4021 = vunpack.c.l.b16 %v2357
        %v4022 = vunpack.c.l.b16 %v2371
        %v4023 = vunpack.c.l.b16 %v2385
        %v4024 = vunpack.c.l.b16 %v2399
        %v4025 = vunpack.c.l.b16 %v2413
        %v4026 = vunpack.c.l.b16 %v2427
        %v4027 = vunpack.c.l.b16 %v2441
        %v4028 = vunpack.c.l.b16 %v2455
        %v4029 = vunpack.c.l.b16 %v2469
        %v4030 = vunpack.c.l.b16 %v2483
        %v4031 = vunpack.c.l.b16 %v2497
        %v4032 = vunpack.c.l.b16 %v2511
        %v4033 = vunpack.c.l.b16 %v2525
        %v4034 = vunpack.c.l.b16 %v2539
        %v4035 = vunpack.c.l.b16 %v2553
        %v4036 = vunpack.c.l.b16 %v2567
        %v4037 = vunpack.c.l.b16 %v2581
        %v4038 = vunpack.c.l.b16 %v2595
        %v4039 = vunpack.c.l.b16 %v2609
        %v4040 = vunpack.c.l.b16 %v2623
        %v4041 = vunpack.c.l.b16 %v2637
        %v4042 = vunpack.c.l.b16 %v2651
        %v4043 = vunpack.c.l.b16 %v2665
        %v4044 = vunpack.c.l.b16 %v2679
        %v4045 = vunpack.c.l.b16 %v2693
        %v4046 = vunpack.c.l.b16 %v2707
        %v4047 = vunpack.c.l.b16 %v2721
        %v4048 = vunpack.c.l.b16 %v2735
        %v4049 = vpack.c.b16 %v4018, %v4017
        %v4050 = vpack.c.b16 %v4020, %v4019
        %v4051 = vpack.c.b16 %v4022, %v4021
        %v4052 = vpack.c.b16 %v4024, %v4023
        %v4053 = vpack.c.b16 %v4026, %v4025
        %v4054 = vpack.c.b16 %v4028, %v4027
        %v4055 = vpack.c.b16 %v4030, %v4029
        %v4056 = vpack.c.b16 %v4032, %v4031
        %v4057 = vpack.c.b16 %v4034, %v4033
        %v4058 = vpack.c.b16 %v4036, %v4035
        %v4059 = vpack.c.b16 %v4038, %v4037
        %v4060 = vpack.c.b16 %v4040, %v4039
        %v4061 = vpack.c.b16 %v4042, %v4041
        %v4062 = vpack.c.b16 %v4044, %v4043
        %v4063 = vpack.c.b16 %v4046, %v4045
        %v4064 = vpack.c.b16 %v4048, %v4047
        %v4081 = vunpack.c.l.b16 %v2835
        %v4082 = vunpack.c.l.b16 %v2839
        %v4083 = vunpack.c.l.b16 %v2843
        %v4084 = vunpack.c.l.b16 %v2847
        %v4085 = vunpack.c.l.b16 %v2851
        %v4086 = vunpack.c.l.b16 %v2855
        %v4087 = vunpack.c.l.b16 %v2859
        %v4088 = vunpack.c.l.b16 %v2863
        %v4089 = vunpack.c.l.b16 %v2867
        %v4090 = vunpack.c.l.b16 %v2871
        %v4091 = vunpack.c.l.b16 %v2875
        %v4092 = vunpack.c.l.b16 %v2879
        %v4093 = vunpack.c.l.b16 %v2883
        %v4094 = vunpack.c.l.b16 %v2887
        %v4095 = vunpack.c.l.b16 %v2891
        %v4096 = vunpack.c.l.b16 %v2895
        %v4097 = vunpack.c.l.b16 %v2899
        %v4098 = vunpack.c.l.b16 %v2903
        %v4099 = vunpack.c.l.b16 %v2907
        %v4100 = vunpack.c.l.b16 %v2911
        %v4101 = vunpack.c.l.b16 %v2915
        %v4102 = vunpack.c.l.b16 %v2919
        %v4103 = vunpack.c.l.b16 %v2923
        %v4104 = vunpack.c.l.b16 %v2927
        %v4105 = vunpack.c.l.b16 %v2931
        %v4106 = vunpack.c.l.b16 %v2935
        %v4107 = vunpack.c.l.b16 %v2939
        %v4108 = vunpack.c.l.b16 %v2943
        %v4109 = vunpack.c.l.b16 %v2947
        %v4110 = vunpack.c.l.b16 %v2951
        %v4111 = vunpack.c.l.b16 %v2955
        %v4112 = vunpack.c.l.b16 %v2959
        %v4113 = vpack.c.b16 %v4082, %v4081
        %v4114 = vpack.c.b16 %v4084, %v4083
        %v4115 = vpack.c.b16 %v4086, %v4085
        %v4116 = vpack.c.b16 %v4088, %v4087
        %v4117 = vpack.c.b16 %v4090, %v4089
        %v4118 = vpack.c.b16 %v4092, %v4091
        %v4119 = vpack.c.b16 %v4094, %v4093
        %v4120 = vpack.c.b16 %v4096, %v4095
        %v4121 = vpack.c.b16 %v4098, %v4097
        %v4122 = vpack.c.b16 %v4100, %v4099
        %v4123 = vpack.c.b16 %v4102, %v4101
        %v4124 = vpack.c.b16 %v4104, %v4103
        %v4125 = vpack.c.b16 %v4106, %v4105
        %v4126 = vpack.c.b16 %v4108, %v4107
        %v4127 = vpack.c.b16 %v4110, %v4109
        %v4128 = vpack.c.b16 %v4112, %v4111
        %v4177 = vunpack.c.l.b16 %v2961
        %v4178 = vunpack.c.l.b16 %v2962
        %v4179 = vunpack.c.l.b16 %v2963
        %v4180 = vunpack.c.l.b16 %v2964
        %v4181 = vunpack.c.l.b16 %v2965
        %v4182 = vunpack.c.l.b16 %v2966
        %v4183 = vunpack.c.l.b16 %v2967
        %v4184 = vunpack.c.l.b16 %v2968
        %v4185 = vunpack.c.l.b16 %v2969
        %v4186 = vunpack.c.l.b16 %v2970
        %v4187 = vunpack.c.l.b16 %v2971
        %v4188 = vunpack.c.l.b16 %v2972
        %v4189 = vunpack.c.l.b16 %v2973
        %v4190 = vunpack.c.l.b16 %v2974
        %v4191 = vunpack.c.l.b16 %v2975
        %v4192 = vunpack.c.l.b16 %v2976
        %v4193 = vunpack.c.l.b16 %v2977
        %v4194 = vunpack.c.l.b16 %v2978
        %v4195 = vunpack.c.l.b16 %v2979
        %v4196 = vunpack.c.l.b16 %v2980
        %v4197 = vunpack.c.l.b16 %v2981
        %v4198 = vunpack.c.l.b16 %v2982
        %v4199 = vunpack.c.l.b16 %v2983
        %v4200 = vunpack.c.l.b16 %v2984
        %v4201 = vunpack.c.l.b16 %v2985
        %v4202 = vunpack.c.l.b16 %v2986
        %v4203 = vunpack.c.l.b16 %v2987
        %v4204 = vunpack.c.l.b16 %v2988
        %v4205 = vunpack.c.l.b16 %v2989
        %v4206 = vunpack.c.l.b16 %v2990
        %v4207 = vunpack.c.l.b16 %v2991
        %v4208 = vunpack.c.l.b16 %v2992
        %v4209 = vpack.c.b16 %v4178, %v4177
        %v4210 = vpack.c.b16 %v4180, %v4179
        %v4211 = vpack.c.b16 %v4182, %v4181
        %v4212 = vpack.c.b16 %v4184, %v4183
        %v4213 = vpack.c.b16 %v4186, %v4185
        %v4214 = vpack.c.b16 %v4188, %v4187
        %v4215 = vpack.c.b16 %v4190, %v4189
        %v4216 = vpack.c.b16 %v4192, %v4191
        %v4217 = vpack.c.b16 %v4194, %v4193
        %v4218 = vpack.c.b16 %v4196, %v4195
        %v4219 = vpack.c.b16 %v4198, %v4197
        %v4220 = vpack.c.b16 %v4200, %v4199
        %v4221 = vpack.c.b16 %v4202, %v4201
        %v4222 = vpack.c.b16 %v4204, %v4203
        %v4223 = vpack.c.b16 %v4206, %v4205
        %v4224 = vpack.c.b16 %v4208, %v4207
        %v4241 = vunpack.c.l.b16 %v3038
        %v4242 = vunpack.c.l.b16 %v3052
        %v4243 = vunpack.c.l.b16 %v3066
        %v4244 = vunpack.c.l.b16 %v3080
        %v4245 = vunpack.c.l.b16 %v3094
        %v4246 = vunpack.c.l.b16 %v3108
        %v4247 = vunpack.c.l.b16 %v3122
        %v4248 = vunpack.c.l.b16 %v3136
        %v4249 = vunpack.c.l.b16 %v3150
        %v4250 = vunpack.c.l.b16 %v3164
        %v4251 = vunpack.c.l.b16 %v3178
        %v4252 = vunpack.c.l.b16 %v3192
        %v4253 = vunpack.c.l.b16 %v3206
        %v4254 = vunpack.c.l.b16 %v3220
        %v4255 = vunpack.c.l.b16 %v3234
        %v4256 = vunpack.c.l.b16 %v3248
        %v4257 = vunpack.c.l.b16 %v3262
        %v4258 = vunpack.c.l.b16 %v3276
        %v4259 = vunpack.c.l.b16 %v3290
        %v4260 = vunpack.c.l.b16 %v3304
        %v4261 = vunpack.c.l.b16 %v3318
        %v4262 = vunpack.c.l.b16 %v3332
        %v4263 = vunpack.c.l.b16 %v3346
        %v4264 = vunpack.c.l.b16 %v3360
        %v4265 = vunpack.c.l.b16 %v3374
        %v4266 = vunpack.c.l.b16 %v3388
        %v4267 = vunpack.c.l.b16 %v3402
        %v4268 = vunpack.c.l.b16 %v3416
        %v4269 = vunpack.c.l.b16 %v3430
        %v4270 = vunpack.c.l.b16 %v3444
        %v4271 = vunpack.c.l.b16 %v3458
        %v4272 = vunpack.c.l.b16 %v3472
        %v4273 = vpack.c.b16 %v4242, %v4241
        %v4274 = vpack.c.b16 %v4244, %v4243
        %v4275 = vpack.c.b16 %v4246, %v4245
        %v4276 = vpack.c.b16 %v4248, %v4247
        %v4277 = vpack.c.b16 %v4250, %v4249
        %v4278 = vpack.c.b16 %v4252, %v4251
        %v4279 = vpack.c.b16 %v4254, %v4253
        %v4280 = vpack.c.b16 %v4256, %v4255
        %v4281 = vpack.c.b16 %v4258, %v4257
        %v4282 = vpack.c.b16 %v4260, %v4259
        %v4283 = vpack.c.b16 %v4262, %v4261
        %v4284 = vpack.c.b16 %v4264, %v4263
        %v4285 = vpack.c.b16 %v4266, %v4265
        %v4286 = vpack.c.b16 %v4268, %v4267
        %v4287 = vpack.c.b16 %v4270, %v4269
        %v4288 = vpack.c.b16 %v4272, %v4271
        %v4305 = vunpack.c.l.b16 %v3572
        %v4306 = vunpack.c.l.b16 %v3576
        %v4307 = vunpack.c.l.b16 %v3580
        %v4308 = vunpack.c.l.b16 %v3584
        %v4309 = vunpack.c.l.b16 %v3588
        %v4310 = vunpack.c.l.b16 %v3592
        %v4311 = vunpack.c.l.b16 %v3596
        %v4312 = vunpack.c.l.b16 %v3600
        %v4313 = vunpack.c.l.b16 %v3604
        %v4314 = vunpack.c.l.b16 %v3608
        %v4315 = vunpack.c.l.b16 %v3612
        %v4316 = vunpack.c.l.b16 %v3616
        %v4317 = vunpack.c.l.b16 %v3620
        %v4318 = vunpack.c.l.b16 %v3624
        %v4319 = vunpack.c.l.b16 %v3628
        %v4320 = vunpack.c.l.b16 %v3632
        %v4321 = vunpack.c.l.b16 %v3636
        %v4322 = vunpack.c.l.b16 %v3640
        %v4323 = vunpack.c.l.b16 %v3644
        %v4324 = vunpack.c.l.b16 %v3648
        %v4325 = vunpack.c.l.b16 %v3652
        %v4326 = vunpack.c.l.b16 %v3656
        %v4327 = vunpack.c.l.b16 %v3660
        %v4328 = vunpack.c.l.b16 %v3664
        %v4329 = vunpack.c.l.b16 %v3668
        %v4330 = vunpack.c.l.b16 %v3672
        %v4331 = vunpack.c.l.b16 %v3676
        %v4332 = vunpack.c.l.b16 %v3680
        %v4333 = vunpack.c.l.b16 %v3684
        %v4334 = vunpack.c.l.b16 %v3688
        %v4335 = vunpack.c.l.b16 %v3692
        %v4336 = vunpack.c.l.b16 %v3696
        %v4337 = vpack.c.b16 %v4306, %v4305
        %v4338 = vpack.c.b16 %v4308, %v4307
        %v4339 = vpack.c.b16 %v4310, %v4309
        %v4340 = vpack.c.b16 %v4312, %v4311
        %v4341 = vpack.c.b16 %v4314, %v4313
        %v4342 = vpack.c.b16 %v4316, %v4315
        %v4343 = vpack.c.b16 %v4318, %v4317
        %v4344 = vpack.c.b16 %v4320, %v4319
        %v4345 = vpack.c.b16 %v4322, %v4321
        %v4346 = vpack.c.b16 %v4324, %v4323
        %v4347 = vpack.c.b16 %v4326, %v4325
        %v4348 = vpack.c.b16 %v4328, %v4327
        %v4349 = vpack.c.b16 %v4330, %v4329
        %v4350 = vpack.c.b16 %v4332, %v4331
        %v4351 = vpack.c.b16 %v4334, %v4333
        %v4352 = vpack.c.b16 %v4336, %v4335
        %v4369 = vld [vmem:[#allocation8] sm:$0xf]
        %v4370 = vld [vmem:[#allocation8 + $0x4] sm:$0xf]
        %v4371 = vld [vmem:[#allocation8 + $0x8] sm:$0xf]
        %v4372 = vld [vmem:[#allocation8 + $0xc] sm:$0xf]
        %v4373 = vld [vmem:[#allocation8 + $0x10] sm:$0xf]
        %v4374 = vld [vmem:[#allocation8 + $0x14] sm:$0xf]
        %v4375 = vld [vmem:[#allocation8 + $0x18] sm:$0xf]
        %v4376 = vld [vmem:[#allocation8 + $0x1c] sm:$0xf]
        %v4377 = vld [vmem:[#allocation8 + $0x20] sm:$0xf]
        %v4378 = vld [vmem:[#allocation8 + $0x24] sm:$0xf]
        %v4379 = vld [vmem:[#allocation8 + $0x28] sm:$0xf]
        %v4380 = vld [vmem:[#allocation8 + $0x2c] sm:$0xf]
        %v4381 = vld [vmem:[#allocation8 + $0x30] sm:$0xf]
        %v4382 = vld [vmem:[#allocation8 + $0x34] sm:$0xf]
        %v4383 = vld [vmem:[#allocation8 + $0x38] sm:$0xf]
        %v4384 = vld [vmem:[#allocation8 + $0x3c] sm:$0xf]
        %v4385 = vld [vmem:[#allocation8 + $0x40] sm:$0xf]
        %v4386 = vld [vmem:[#allocation8 + $0x44] sm:$0xf]
        %v4387 = vld [vmem:[#allocation8 + $0x48] sm:$0xf]
        %v4388 = vld [vmem:[#allocation8 + $0x4c] sm:$0xf]
        %v4389 = vld [vmem:[#allocation8 + $0x50] sm:$0xf]
        %v4390 = vld [vmem:[#allocation8 + $0x54] sm:$0xf]
        %v4391 = vld [vmem:[#allocation8 + $0x58] sm:$0xf]
        %v4392 = vld [vmem:[#allocation8 + $0x5c] sm:$0xf]
        %v4393 = vld [vmem:[#allocation8 + $0x60] sm:$0xf]
        %v4394 = vld [vmem:[#allocation8 + $0x64] sm:$0xf]
        %v4395 = vld [vmem:[#allocation8 + $0x68] sm:$0xf]
        %v4396 = vld [vmem:[#allocation8 + $0x6c] sm:$0xf]
        %v4397 = vld [vmem:[#allocation8 + $0x70] sm:$0xf]
        %v4398 = vld [vmem:[#allocation8 + $0x74] sm:$0xf]
        %v4399 = vld [vmem:[#allocation8 + $0x78] sm:$0xf]
        %v4400 = vld [vmem:[#allocation8 + $0x7c] sm:$0xf]
        %v4401 = vld [vmem:[#allocation8 + $0x80] sm:$0xf]
        %v4402 = vld [vmem:[#allocation8 + $0x84] sm:$0xf]
        %v4403 = vld [vmem:[#allocation8 + $0x88] sm:$0xf]
        %v4404 = vld [vmem:[#allocation8 + $0x8c] sm:$0xf]
        %v4405 = vld [vmem:[#allocation8 + $0x90] sm:$0xf]
        %v4406 = vld [vmem:[#allocation8 + $0x94] sm:$0xf]
        %v4407 = vld [vmem:[#allocation8 + $0x98] sm:$0xf]
        %v4408 = vld [vmem:[#allocation8 + $0x9c] sm:$0xf]
        %v4409 = vld [vmem:[#allocation8 + $0xa0] sm:$0xf]
        %v4410 = vld [vmem:[#allocation8 + $0xa4] sm:$0xf]
        %v4411 = vld [vmem:[#allocation8 + $0xa8] sm:$0xf]
        %v4412 = vld [vmem:[#allocation8 + $0xac] sm:$0xf]
        %v4413 = vld [vmem:[#allocation8 + $0xb0] sm:$0xf]
        %v4414 = vld [vmem:[#allocation8 + $0xb4] sm:$0xf]
        %v4415 = vld [vmem:[#allocation8 + $0xb8] sm:$0xf]
        %v4416 = vld [vmem:[#allocation8 + $0xbc] sm:$0xf]
        %v4417 = vld [vmem:[#allocation8 + $0xc0] sm:$0xf]
        %v4418 = vld [vmem:[#allocation8 + $0xc4] sm:$0xf]
        %v4419 = vld [vmem:[#allocation8 + $0xc8] sm:$0xf]
        %v4420 = vld [vmem:[#allocation8 + $0xcc] sm:$0xf]
        %v4421 = vld [vmem:[#allocation8 + $0xd0] sm:$0xf]
        %v4422 = vld [vmem:[#allocation8 + $0xd4] sm:$0xf]
        %v4423 = vld [vmem:[#allocation8 + $0xd8] sm:$0xf]
        %v4424 = vld [vmem:[#allocation8 + $0xdc] sm:$0xf]
        %v4425 = vld [vmem:[#allocation8 + $0xe0] sm:$0xf]
        %v4426 = vld [vmem:[#allocation8 + $0xe4] sm:$0xf]
        %v4427 = vld [vmem:[#allocation8 + $0xe8] sm:$0xf]
        %v4428 = vld [vmem:[#allocation8 + $0xec] sm:$0xf]
        %v4429 = vld [vmem:[#allocation8 + $0xf0] sm:$0xf]
        %v4430 = vld [vmem:[#allocation8 + $0xf4] sm:$0xf]
        %v4431 = vld [vmem:[#allocation8 + $0xf8] sm:$0xf]
        %v4432 = vld [vmem:[#allocation8 + $0xfc] sm:$0xf]
        %v4433 = vld [vmem:[#allocation8 + $0x100] sm:$0xf]
        %v4434 = vld [vmem:[#allocation8 + $0x104] sm:$0xf]
        %v4435 = vld [vmem:[#allocation8 + $0x108] sm:$0xf]
        %v4436 = vld [vmem:[#allocation8 + $0x10c] sm:$0xf]
        %v4437 = vld [vmem:[#allocation8 + $0x110] sm:$0xf]
        %v4438 = vld [vmem:[#allocation8 + $0x114] sm:$0xf]
        %v4439 = vld [vmem:[#allocation8 + $0x118] sm:$0xf]
        %v4440 = vld [vmem:[#allocation8 + $0x11c] sm:$0xf]
        %v4441 = vld [vmem:[#allocation8 + $0x120] sm:$0xf]
        %v4442 = vld [vmem:[#allocation8 + $0x124] sm:$0xf]
        %v4443 = vld [vmem:[#allocation8 + $0x128] sm:$0xf]
        %v4444 = vld [vmem:[#allocation8 + $0x12c] sm:$0xf]
        %v4445 = vld [vmem:[#allocation8 + $0x130] sm:$0xf]
        %v4446 = vld [vmem:[#allocation8 + $0x134] sm:$0xf]
        %v4447 = vld [vmem:[#allocation8 + $0x138] sm:$0xf]
        %v4448 = vld [vmem:[#allocation8 + $0x13c] sm:$0xf]
        %v4449 = vld [vmem:[#allocation8 + $0x140] sm:$0xf]
        %v4450 = vld [vmem:[#allocation8 + $0x144] sm:$0xf]
        %v4451 = vld [vmem:[#allocation8 + $0x148] sm:$0xf]
        %v4452 = vld [vmem:[#allocation8 + $0x14c] sm:$0xf]
        %v4453 = vld [vmem:[#allocation8 + $0x150] sm:$0xf]
        %v4454 = vld [vmem:[#allocation8 + $0x154] sm:$0xf]
        %v4455 = vld [vmem:[#allocation8 + $0x158] sm:$0xf]
        %v4456 = vld [vmem:[#allocation8 + $0x15c] sm:$0xf]
        %v4457 = vld [vmem:[#allocation8 + $0x160] sm:$0xf]
        %v4458 = vld [vmem:[#allocation8 + $0x164] sm:$0xf]
        %v4459 = vld [vmem:[#allocation8 + $0x168] sm:$0xf]
        %v4460 = vld [vmem:[#allocation8 + $0x16c] sm:$0xf]
        %v4461 = vld [vmem:[#allocation8 + $0x170] sm:$0xf]
        %v4462 = vld [vmem:[#allocation8 + $0x174] sm:$0xf]
        %v4463 = vld [vmem:[#allocation8 + $0x178] sm:$0xf]
        %v4464 = vld [vmem:[#allocation8 + $0x17c] sm:$0xf]
        %v4465 = vld [vmem:[#allocation8 + $0x180] sm:$0xf]
        %v4466 = vld [vmem:[#allocation8 + $0x184] sm:$0xf]
        %v4467 = vld [vmem:[#allocation8 + $0x188] sm:$0xf]
        %v4468 = vld [vmem:[#allocation8 + $0x18c] sm:$0xf]
        %v4469 = vld [vmem:[#allocation8 + $0x190] sm:$0xf]
        %v4470 = vld [vmem:[#allocation8 + $0x194] sm:$0xf]
        %v4471 = vld [vmem:[#allocation8 + $0x198] sm:$0xf]
        %v4472 = vld [vmem:[#allocation8 + $0x19c] sm:$0xf]
        %v4473 = vld [vmem:[#allocation8 + $0x1a0] sm:$0xf]
        %v4474 = vld [vmem:[#allocation8 + $0x1a4] sm:$0xf]
        %v4475 = vld [vmem:[#allocation8 + $0x1a8] sm:$0xf]
        %v4476 = vld [vmem:[#allocation8 + $0x1ac] sm:$0xf]
        %v4477 = vld [vmem:[#allocation8 + $0x1b0] sm:$0xf]
        %v4478 = vld [vmem:[#allocation8 + $0x1b4] sm:$0xf]
        %v4479 = vld [vmem:[#allocation8 + $0x1b8] sm:$0xf]
        %v4480 = vld [vmem:[#allocation8 + $0x1bc] sm:$0xf]
        %v4481 = vld [vmem:[#allocation8 + $0x1c0] sm:$0xf]
        %v4482 = vld [vmem:[#allocation8 + $0x1c4] sm:$0xf]
        %v4483 = vld [vmem:[#allocation8 + $0x1c8] sm:$0xf]
        %v4484 = vld [vmem:[#allocation8 + $0x1cc] sm:$0xf]
        %v4485 = vld [vmem:[#allocation8 + $0x1d0] sm:$0xf]
        %v4486 = vld [vmem:[#allocation8 + $0x1d4] sm:$0xf]
        %v4487 = vld [vmem:[#allocation8 + $0x1d8] sm:$0xf]
        %v4488 = vld [vmem:[#allocation8 + $0x1dc] sm:$0xf]
        %v4489 = vld [vmem:[#allocation8 + $0x1e0] sm:$0xf]
        %v4490 = vld [vmem:[#allocation8 + $0x1e4] sm:$0xf]
        %v4491 = vld [vmem:[#allocation8 + $0x1e8] sm:$0xf]
        %v4492 = vld [vmem:[#allocation8 + $0x1ec] sm:$0xf]
        %v4493 = vld [vmem:[#allocation8 + $0x1f0] sm:$0xf]
        %v4494 = vld [vmem:[#allocation8 + $0x1f4] sm:$0xf]
        %v4495 = vld [vmem:[#allocation8 + $0x1f8] sm:$0xf]
        %v4496 = vld [vmem:[#allocation8 + $0x1fc] sm:$0xf]
        %v4497 = vld [vmem:[#allocation8 + $0x200] sm:$0xf]
        %v4498 = vld [vmem:[#allocation8 + $0x204] sm:$0xf]
        %v4499 = vld [vmem:[#allocation8 + $0x208] sm:$0xf]
        %v4500 = vld [vmem:[#allocation8 + $0x20c] sm:$0xf]
        %v4501 = vld [vmem:[#allocation8 + $0x210] sm:$0xf]
        %v4502 = vld [vmem:[#allocation8 + $0x214] sm:$0xf]
        %v4503 = vld [vmem:[#allocation8 + $0x218] sm:$0xf]
        %v4504 = vld [vmem:[#allocation8 + $0x21c] sm:$0xf]
        %v4505 = vld [vmem:[#allocation8 + $0x220] sm:$0xf]
        %v4506 = vld [vmem:[#allocation8 + $0x224] sm:$0xf]
        %v4507 = vld [vmem:[#allocation8 + $0x228] sm:$0xf]
        %v4508 = vld [vmem:[#allocation8 + $0x22c] sm:$0xf]
        %v4509 = vld [vmem:[#allocation8 + $0x230] sm:$0xf]
        %v4510 = vld [vmem:[#allocation8 + $0x234] sm:$0xf]
        %v4511 = vld [vmem:[#allocation8 + $0x238] sm:$0xf]
        %v4512 = vld [vmem:[#allocation8 + $0x23c] sm:$0xf]
        %v4513 = vld [vmem:[%s4] sm:$0x1]
        %v4515 = vlaneseq
        %v4516 = vshrl.u32 %v4515, 7
        %v4517 = vsub.s32 0, %v4516
        %v4518 = vrot.slane %v4513, %v4517
        %v4664 = vunpack.c.l.b16 %v4369
        %v4665 = vunpack.c.l.b16 %v4370
        %v4666 = vunpack.c.l.b16 %v4371
        %v4667 = vunpack.c.l.b16 %v4372
        %v4668 = vunpack.c.l.b16 %v4373
        %v4669 = vunpack.c.l.b16 %v4374
        %v4670 = vunpack.c.l.b16 %v4375
        %v4671 = vunpack.c.l.b16 %v4376
        %v4672 = vunpack.c.l.b16 %v4377
        %v4673 = vunpack.c.l.b16 %v4378
        %v4674 = vunpack.c.l.b16 %v4379
        %v4675 = vunpack.c.l.b16 %v4380
        %v4676 = vunpack.c.l.b16 %v4381
        %v4677 = vunpack.c.l.b16 %v4382
        %v4678 = vunpack.c.l.b16 %v4383
        %v4679 = vunpack.c.l.b16 %v4384
        %v4680 = vunpack.c.l.b16 %v4385
        %v4681 = vunpack.c.l.b16 %v4386
        %v4682 = vunpack.c.l.b16 %v4387
        %v4683 = vunpack.c.l.b16 %v4388
        %v4684 = vunpack.c.l.b16 %v4389
        %v4685 = vunpack.c.l.b16 %v4390
        %v4686 = vunpack.c.l.b16 %v4391
        %v4687 = vunpack.c.l.b16 %v4392
        %v4688 = vunpack.c.l.b16 %v4393
        %v4689 = vunpack.c.l.b16 %v4394
        %v4690 = vunpack.c.l.b16 %v4395
        %v4691 = vunpack.c.l.b16 %v4396
        %v4692 = vunpack.c.l.b16 %v4397
        %v4693 = vunpack.c.l.b16 %v4398
        %v4694 = vunpack.c.l.b16 %v4399
        %v4695 = vunpack.c.l.b16 %v4400
        %v4696 = vunpack.c.l.b16 %v4401
        %v4697 = vunpack.c.l.b16 %v4402
        %v4698 = vunpack.c.l.b16 %v4403
        %v4699 = vunpack.c.l.b16 %v4404
        %v4700 = vunpack.c.l.b16 %v4405
        %v4701 = vunpack.c.l.b16 %v4406
        %v4702 = vunpack.c.l.b16 %v4407
        %v4703 = vunpack.c.l.b16 %v4408
        %v4704 = vunpack.c.l.b16 %v4409
        %v4705 = vunpack.c.l.b16 %v4410
        %v4706 = vunpack.c.l.b16 %v4411
        %v4707 = vunpack.c.l.b16 %v4412
        %v4708 = vunpack.c.l.b16 %v4413
        %v4709 = vunpack.c.l.b16 %v4414
        %v4710 = vunpack.c.l.b16 %v4415
        %v4711 = vunpack.c.l.b16 %v4416
        %v4712 = vunpack.c.l.b16 %v4417
        %v4713 = vunpack.c.l.b16 %v4418
        %v4714 = vunpack.c.l.b16 %v4419
        %v4715 = vunpack.c.l.b16 %v4420
        %v4716 = vunpack.c.l.b16 %v4421
        %v4717 = vunpack.c.l.b16 %v4422
        %v4718 = vunpack.c.l.b16 %v4423
        %v4719 = vunpack.c.l.b16 %v4424
        %v4720 = vunpack.c.l.b16 %v4425
        %v4721 = vunpack.c.l.b16 %v4426
        %v4722 = vunpack.c.l.b16 %v4427
        %v4723 = vunpack.c.l.b16 %v4428
        %v4724 = vunpack.c.l.b16 %v4429
        %v4725 = vunpack.c.l.b16 %v4430
        %v4726 = vunpack.c.l.b16 %v4431
        %v4727 = vunpack.c.l.b16 %v4432
        %v4728 = vunpack.c.l.b16 %v4433
        %v4729 = vunpack.c.l.b16 %v4434
        %v4730 = vunpack.c.l.b16 %v4435
        %v4731 = vunpack.c.l.b16 %v4436
        %v4732 = vunpack.c.l.b16 %v4437
        %v4733 = vunpack.c.l.b16 %v4438
        %v4734 = vunpack.c.l.b16 %v4439
        %v4735 = vunpack.c.l.b16 %v4440
        %v4736 = vunpack.c.l.b16 %v4441
        %v4737 = vunpack.c.l.b16 %v4442
        %v4738 = vunpack.c.l.b16 %v4443
        %v4739 = vunpack.c.l.b16 %v4444
        %v4740 = vunpack.c.l.b16 %v4445
        %v4741 = vunpack.c.l.b16 %v4446
        %v4742 = vunpack.c.l.b16 %v4447
        %v4743 = vunpack.c.l.b16 %v4448
        %v4744 = vunpack.c.l.b16 %v4449
        %v4745 = vunpack.c.l.b16 %v4450
        %v4746 = vunpack.c.l.b16 %v4451
        %v4747 = vunpack.c.l.b16 %v4452
        %v4748 = vunpack.c.l.b16 %v4453
        %v4749 = vunpack.c.l.b16 %v4454
        %v4750 = vunpack.c.l.b16 %v4455
        %v4751 = vunpack.c.l.b16 %v4456
        %v4752 = vunpack.c.l.b16 %v4457
        %v4753 = vunpack.c.l.b16 %v4458
        %v4754 = vunpack.c.l.b16 %v4459
        %v4755 = vunpack.c.l.b16 %v4460
        %v4756 = vunpack.c.l.b16 %v4461
        %v4757 = vunpack.c.l.b16 %v4462
        %v4758 = vunpack.c.l.b16 %v4463
        %v4759 = vunpack.c.l.b16 %v4464
        %v4760 = vunpack.c.l.b16 %v4465
        %v4761 = vunpack.c.l.b16 %v4466
        %v4762 = vunpack.c.l.b16 %v4467
        %v4763 = vunpack.c.l.b16 %v4468
        %v4764 = vunpack.c.l.b16 %v4469
        %v4765 = vunpack.c.l.b16 %v4470
        %v4766 = vunpack.c.l.b16 %v4471
        %v4767 = vunpack.c.l.b16 %v4472
        %v4768 = vunpack.c.l.b16 %v4473
        %v4769 = vunpack.c.l.b16 %v4474
        %v4770 = vunpack.c.l.b16 %v4475
        %v4771 = vunpack.c.l.b16 %v4476
        %v4772 = vunpack.c.l.b16 %v4477
        %v4773 = vunpack.c.l.b16 %v4478
        %v4774 = vunpack.c.l.b16 %v4479
        %v4775 = vunpack.c.l.b16 %v4480
        %v4776 = vunpack.c.l.b16 %v4481
        %v4777 = vunpack.c.l.b16 %v4482
        %v4778 = vunpack.c.l.b16 %v4483
        %v4779 = vunpack.c.l.b16 %v4484
        %v4780 = vunpack.c.l.b16 %v4485
        %v4781 = vunpack.c.l.b16 %v4486
        %v4782 = vunpack.c.l.b16 %v4487
        %v4783 = vunpack.c.l.b16 %v4488
        %v4784 = vunpack.c.l.b16 %v4489
        %v4785 = vunpack.c.l.b16 %v4490
        %v4786 = vunpack.c.l.b16 %v4491
        %v4787 = vunpack.c.l.b16 %v4492
        %v4788 = vunpack.c.l.b16 %v4493
        %v4789 = vunpack.c.l.b16 %v4494
        %v4790 = vunpack.c.l.b16 %v4495
        %v4791 = vunpack.c.l.b16 %v4496
        %v4792 = vunpack.c.l.b16 %v4497
        %v4793 = vunpack.c.l.b16 %v4498
        %v4794 = vunpack.c.l.b16 %v4499
        %v4795 = vunpack.c.l.b16 %v4500
        %v4796 = vunpack.c.l.b16 %v4501
        %v4797 = vunpack.c.l.b16 %v4502
        %v4798 = vunpack.c.l.b16 %v4503
        %v4799 = vunpack.c.l.b16 %v4504
        %v4800 = vunpack.c.l.b16 %v4505
        %v4801 = vunpack.c.l.b16 %v4506
        %v4802 = vunpack.c.l.b16 %v4507
        %v4803 = vunpack.c.l.b16 %v4508
        %v4804 = vunpack.c.l.b16 %v4509
        %v4805 = vunpack.c.l.b16 %v4510
        %v4806 = vunpack.c.l.b16 %v4511
        %v4807 = vunpack.c.l.b16 %v4512
        %v4808 = vpack.c.b16 %v4665, %v4664
        %v4809 = vpack.c.b16 %v4667, %v4666
        %v4810 = vpack.c.b16 %v4669, %v4668
        %v4811 = vpack.c.b16 %v4671, %v4670
        %v4812 = vpack.c.b16 %v4673, %v4672
        %v4813 = vpack.c.b16 %v4675, %v4674
        %v4814 = vpack.c.b16 %v4677, %v4676
        %v4815 = vpack.c.b16 %v4679, %v4678
        %v4816 = vpack.c.b16 %v4681, %v4680
        %v4817 = vpack.c.b16 %v4683, %v4682
        %v4818 = vpack.c.b16 %v4685, %v4684
        %v4819 = vpack.c.b16 %v4687, %v4686
        %v4820 = vpack.c.b16 %v4689, %v4688
        %v4821 = vpack.c.b16 %v4691, %v4690
        %v4822 = vpack.c.b16 %v4693, %v4692
        %v4823 = vpack.c.b16 %v4695, %v4694
        %v4824 = vpack.c.b16 %v4697, %v4696
        %v4825 = vpack.c.b16 %v4699, %v4698
        %v4826 = vpack.c.b16 %v4701, %v4700
        %v4827 = vpack.c.b16 %v4703, %v4702
        %v4828 = vpack.c.b16 %v4705, %v4704
        %v4829 = vpack.c.b16 %v4707, %v4706
        %v4830 = vpack.c.b16 %v4709, %v4708
        %v4831 = vpack.c.b16 %v4711, %v4710
        %v4832 = vpack.c.b16 %v4713, %v4712
        %v4833 = vpack.c.b16 %v4715, %v4714
        %v4834 = vpack.c.b16 %v4717, %v4716
        %v4835 = vpack.c.b16 %v4719, %v4718
        %v4836 = vpack.c.b16 %v4721, %v4720
        %v4837 = vpack.c.b16 %v4723, %v4722
        %v4838 = vpack.c.b16 %v4725, %v4724
        %v4839 = vpack.c.b16 %v4727, %v4726
        %v4840 = vpack.c.b16 %v4729, %v4728
        %v4841 = vpack.c.b16 %v4731, %v4730
        %v4842 = vpack.c.b16 %v4733, %v4732
        %v4843 = vpack.c.b16 %v4735, %v4734
        %v4844 = vpack.c.b16 %v4737, %v4736
        %v4845 = vpack.c.b16 %v4739, %v4738
        %v4846 = vpack.c.b16 %v4741, %v4740
        %v4847 = vpack.c.b16 %v4743, %v4742
        %v4848 = vpack.c.b16 %v4745, %v4744
        %v4849 = vpack.c.b16 %v4747, %v4746
        %v4850 = vpack.c.b16 %v4749, %v4748
        %v4851 = vpack.c.b16 %v4751, %v4750
        %v4852 = vpack.c.b16 %v4753, %v4752
        %v4853 = vpack.c.b16 %v4755, %v4754
        %v4854 = vpack.c.b16 %v4757, %v4756
        %v4855 = vpack.c.b16 %v4759, %v4758
        %v4856 = vpack.c.b16 %v4761, %v4760
        %v4857 = vpack.c.b16 %v4763, %v4762
        %v4858 = vpack.c.b16 %v4765, %v4764
        %v4859 = vpack.c.b16 %v4767, %v4766
        %v4860 = vpack.c.b16 %v4769, %v4768
        %v4861 = vpack.c.b16 %v4771, %v4770
        %v4862 = vpack.c.b16 %v4773, %v4772
        %v4863 = vpack.c.b16 %v4775, %v4774
        %v4864 = vpack.c.b16 %v4777, %v4776
        %v4865 = vpack.c.b16 %v4779, %v4778
        %v4866 = vpack.c.b16 %v4781, %v4780
        %v4867 = vpack.c.b16 %v4783, %v4782
        %v4868 = vpack.c.b16 %v4785, %v4784
        %v4869 = vpack.c.b16 %v4787, %v4786
        %v4870 = vpack.c.b16 %v4789, %v4788
        %v4871 = vpack.c.b16 %v4791, %v4790
        %v4872 = vpack.c.b16 %v4793, %v4792
        %v4873 = vpack.c.b16 %v4795, %v4794
        %v4874 = vpack.c.b16 %v4797, %v4796
        %v4875 = vpack.c.b16 %v4799, %v4798
        %v4876 = vpack.c.b16 %v4801, %v4800
        %v4877 = vpack.c.b16 %v4803, %v4802
        %v4878 = vpack.c.b16 %v4805, %v4804
        %v4879 = vpack.c.b16 %v4807, %v4806
        %4952 = vmatprep.subr.bf16.mxu0 0
        %4953 = vmatpush1.bf16.msra.mxu0 %v4808
        %4954 = vmatprep.subr.bf16.mxu0 0
        %4955 = vmatpush1.bf16.msra.mxu0 %v4809
        %4956 = vmatprep.subr.bf16.mxu0 0
        %4957 = vmatpush1.bf16.msra.mxu0 %v4810
        %4958 = vmatprep.subr.bf16.mxu0 0
        %4959 = vmatpush1.bf16.msra.mxu0 %v4811
        %4960 = vmatprep.subr.bf16.mxu0 0
        %4961 = vmatpush1.bf16.msra.mxu0 %v4812
        %4962 = vmatprep.subr.bf16.mxu0 0
        %4963 = vmatpush1.bf16.msra.mxu0 %v4813
        %4964 = vmatprep.subr.bf16.mxu0 0
        %4965 = vmatpush1.bf16.msra.mxu0 %v4814
        %4966 = vmatprep.subr.bf16.mxu0 0
        %4967 = vmatpush1.bf16.msra.mxu0 %v4815
        %4968 = vmatprep.subr.bf16.mxu0 0
        %4969 = vmatpush1.bf16.msra.mxu0 %v4816
        %4970 = vmatprep.subr.bf16.mxu0 0
        %4971 = vmatpush1.bf16.msra.mxu0 %v4817
        %4972 = vmatprep.subr.bf16.mxu0 0
        %4973 = vmatpush1.bf16.msra.mxu0 %v4818
        %4974 = vmatprep.subr.bf16.mxu0 0
        %4975 = vmatpush1.bf16.msra.mxu0 %v4819
        %4976 = vmatprep.subr.bf16.mxu0 0
        %4977 = vmatpush1.bf16.msra.mxu0 %v4820
        %4978 = vmatprep.subr.bf16.mxu0 0
        %4979 = vmatpush1.bf16.msra.mxu0 %v4821
        %4980 = vmatprep.subr.bf16.mxu0 0
        %4981 = vmatpush1.bf16.msra.mxu0 %v4822
        %4982 = vmatprep.subr.bf16.mxu0 0
        %4983 = vmatpush1.bf16.msra.mxu0 %v4823
        %4984 = vmatprep.mubr.bf16.mxu0 %v3825
        %4985 = vmatmul.mubr.bf16.gmra.mrb[0].mxu0 %v3761
        %v4986 = vpop.f32.mrb[0].mxu0
        %v4987 = vadd.f32 %v4518, %v4986
        %v4988 = vpop.f32.mrb[0].mxu0
        %v4989 = vpop.f32.mrb[0].mxu0
        %v4990 = vadd.f32 %v4518, %v4989
        %v4991 = vpop.f32.mrb[0].mxu0
        %4992 = vmatprep.mubr.bf16.mxu0 %v3826
        %4993 = vmatmul.mubr.bf16.gmra.mrb[0].mxu0 %v3762
        %v4994 = vpop.f32.mrb[0].mxu0
        %v4995 = vadd.f32 %v4518, %v4994
        %v4996 = vpop.f32.mrb[0].mxu0
        %v4997 = vpop.f32.mrb[0].mxu0
        %v4998 = vadd.f32 %v4518, %v4997
        %v4999 = vpop.f32.mrb[0].mxu0
        %5000 = vmatprep.mubr.bf16.mxu0 %v3827
        %5001 = vmatmul.mubr.bf16.gmra.mrb[0].mxu0 %v3763
        %v5002 = vpop.f32.mrb[0].mxu0
        %v5003 = vadd.f32 %v4518, %v5002
        %v5004 = vpop.f32.mrb[0].mxu0
        %v5005 = vpop.f32.mrb[0].mxu0
        %v5006 = vadd.f32 %v4518, %v5005
        %v5007 = vpop.f32.mrb[0].mxu0
        %5008 = vmatprep.mubr.bf16.mxu0 %v3828
        %5009 = vmatmul.mubr.bf16.gmra.mrb[0].mxu0 %v3764
        %v5010 = vpop.f32.mrb[0].mxu0
        %v5011 = vadd.f32 %v4518, %v5010
        %v5012 = vpop.f32.mrb[0].mxu0
        %v5013 = vpop.f32.mrb[0].mxu0
        %v5014 = vadd.f32 %v4518, %v5013
        %v5015 = vpop.f32.mrb[0].mxu0
        %5016 = vmatprep.mubr.bf16.mxu0 %v3829
        %5017 = vmatmul.mubr.bf16.gmra.mrb[0].mxu0 %v3765
        %v5018 = vpop.f32.mrb[0].mxu0
        %v5019 = vadd.f32 %v4518, %v5018
        %v5020 = vpop.f32.mrb[0].mxu0
        %v5021 = vpop.f32.mrb[0].mxu0
        %v5022 = vadd.f32 %v4518, %v5021
        %v5023 = vpop.f32.mrb[0].mxu0
        %5024 = vmatprep.mubr.bf16.mxu0 %v3830
        %5025 = vmatmul.mubr.bf16.gmra.mrb[0].mxu0 %v3766
        %v5026 = vpop.f32.mrb[0].mxu0
        %v5027 = vadd.f32 %v4518, %v5026
        %v5028 = vpop.f32.mrb[0].mxu0
        %v5029 = vpop.f32.mrb[0].mxu0
        %v5030 = vadd.f32 %v4518, %v5029
        %v5031 = vpop.f32.mrb[0].mxu0
        %5032 = vmatprep.mubr.bf16.mxu0 %v3831
        %5033 = vmatmul.mubr.bf16.gmra.mrb[0].mxu0 %v3767
        %v5034 = vpop.f32.mrb[0].mxu0
        %v5035 = vadd.f32 %v4518, %v5034
        %v5036 = vpop.f32.mrb[0].mxu0
        %v5037 = vpop.f32.mrb[0].mxu0
        %v5038 = vadd.f32 %v4518, %v5037
        %v5039 = vpop.f32.mrb[0].mxu0
        %5040 = vmatprep.mubr.bf16.mxu0 %v3832
        %5041 = vmatmul.mubr.bf16.gmra.mrb[0].mxu0 %v3768
        %v5042 = vpop.f32.mrb[0].mxu0
        %v5043 = vadd.f32 %v4518, %v5042
        %v5044 = vpop.f32.mrb[0].mxu0
        %v5045 = vpop.f32.mrb[0].mxu0
        %v5046 = vadd.f32 %v4518, %v5045
        %v5047 = vpop.f32.mrb[0].mxu0
        %5048 = vmatprep.mubr.bf16.mxu0 %v3833
        %5049 = vmatmul.mubr.bf16.gmra.mrb[0].mxu0 %v3769
        %v5050 = vpop.f32.mrb[0].mxu0
        %v5051 = vadd.f32 %v4518, %v5050
        %v5052 = vpop.f32.mrb[0].mxu0
        %v5053 = vpop.f32.mrb[0].mxu0
        %v5054 = vadd.f32 %v4518, %v5053
        %v5055 = vpop.f32.mrb[0].mxu0
        %5056 = vmatprep.mubr.bf16.mxu0 %v3834
        %5057 = vmatmul.mubr.bf16.gmra.mrb[0].mxu0 %v3770
        %v5058 = vpop.f32.mrb[0].mxu0
        %v5059 = vadd.f32 %v4518, %v5058
        %v5060 = vpop.f32.mrb[0].mxu0
        %v5061 = vpop.f32.mrb[0].mxu0
        %v5062 = vadd.f32 %v4518, %v5061
        %v5063 = vpop.f32.mrb[0].mxu0
        %5064 = vmatprep.mubr.bf16.mxu0 %v3835
        %5065 = vmatmul.mubr.bf16.gmra.mrb[0].mxu0 %v3771
        %v5066 = vpop.f32.mrb[0].mxu0
        %v5067 = vadd.f32 %v4518, %v5066
        %v5068 = vpop.f32.mrb[0].mxu0
        %v5069 = vpop.f32.mrb[0].mxu0
        %v5070 = vadd.f32 %v4518, %v5069
        %v5071 = vpop.f32.mrb[0].mxu0
        %5072 = vmatprep.mubr.bf16.mxu0 %v3836
        %5073 = vmatmul.mubr.bf16.gmra.mrb[0].mxu0 %v3772
        %v5074 = vpop.f32.mrb[0].mxu0
        %v5075 = vadd.f32 %v4518, %v5074
        %v5076 = vpop.f32.mrb[0].mxu0
        %v5077 = vpop.f32.mrb[0].mxu0
        %v5078 = vadd.f32 %v4518, %v5077
        %v5079 = vpop.f32.mrb[0].mxu0
        %5080 = vmatprep.mubr.bf16.mxu0 %v3837
        %5081 = vmatmul.mubr.bf16.gmra.mrb[0].mxu0 %v3773
        %v5082 = vpop.f32.mrb[0].mxu0
        %v5083 = vadd.f32 %v4518, %v5082
        %v5084 = vpop.f32.mrb[0].mxu0
        %v5085 = vpop.f32.mrb[0].mxu0
        %v5086 = vadd.f32 %v4518, %v5085
        %v5087 = vpop.f32.mrb[0].mxu0
        %5088 = vmatprep.mubr.bf16.mxu0 %v3838
        %5089 = vmatmul.mubr.bf16.gmra.mrb[0].mxu0 %v3774
        %v5090 = vpop.f32.mrb[0].mxu0
        %v5091 = vadd.f32 %v4518, %v5090
        %v5092 = vpop.f32.mrb[0].mxu0
        %v5093 = vpop.f32.mrb[0].mxu0
        %v5094 = vadd.f32 %v4518, %v5093
        %v5095 = vpop.f32.mrb[0].mxu0
        %5096 = vmatprep.mubr.bf16.mxu0 %v3839
        %5097 = vmatmul.mubr.bf16.gmra.mrb[0].mxu0 %v3775
        %v5098 = vpop.f32.mrb[0].mxu0
        %v5099 = vadd.f32 %v4518, %v5098
        %v5100 = vpop.f32.mrb[0].mxu0
        %v5101 = vpop.f32.mrb[0].mxu0
        %v5102 = vadd.f32 %v4518, %v5101
        %v5103 = vpop.f32.mrb[0].mxu0
        %5104 = vmatprep.mubr.bf16.mxu0 %v3840
        %5105 = vmatmul.mubr.bf16.gmra.mrb[0].mxu0 %v3776
        %v5106 = vpop.f32.mrb[0].mxu0
        %v5107 = vadd.f32 %v4518, %v5106
        %v5108 = vpop.f32.mrb[0].mxu0
        %v5109 = vpop.f32.mrb[0].mxu0
        %v5110 = vadd.f32 %v4518, %v5109
        %v5111 = vpop.f32.mrb[0].mxu0
        %5112 = vdwg.mxu0
        %5113 = vmatprep.subr.bf16.mxu0 0
        %5114 = vmatpush1.bf16.msra.mxu0 %v4824
        %5115 = vmatprep.subr.bf16.mxu0 0
        %5116 = vmatpush1.bf16.msra.mxu0 %v4825
        %5117 = vmatprep.subr.bf16.mxu0 0
        %5118 = vmatpush1.bf16.msra.mxu0 %v4826
        %5119 = vmatprep.subr.bf16.mxu0 0
        %5120 = vmatpush1.bf16.msra.mxu0 %v4827
        %5121 = vmatprep.subr.bf16.mxu0 0
        %5122 = vmatpush1.bf16.msra.mxu0 %v4828
        %5123 = vmatprep.subr.bf16.mxu0 0
        %5124 = vmatpush1.bf16.msra.mxu0 %v4829
        %5125 = vmatprep.subr.bf16.mxu0 0
        %5126 = vmatpush1.bf16.msra.mxu0 %v4830
        %5127 = vmatprep.subr.bf16.mxu0 0
        %5128 = vmatpush1.bf16.msra.mxu0 %v4831
        %5129 = vmatprep.subr.bf16.mxu0 0
        %5130 = vmatpush1.bf16.msra.mxu0 %v4832
        %5131 = vmatprep.subr.bf16.mxu0 0
        %5132 = vmatpush1.bf16.msra.mxu0 %v4833
        %5133 = vmatprep.subr.bf16.mxu0 0
        %5134 = vmatpush1.bf16.msra.mxu0 %v4834
        %5135 = vmatprep.subr.bf16.mxu0 0
        %5136 = vmatpush1.bf16.msra.mxu0 %v4835
        %5137 = vmatprep.subr.bf16.mxu0 0
        %5138 = vmatpush1.bf16.msra.mxu0 %v4836
        %5139 = vmatprep.subr.bf16.mxu0 0
        %5140 = vmatpush1.bf16.msra.mxu0 %v4837
        %5141 = vmatprep.subr.bf16.mxu0 0
        %5142 = vmatpush1.bf16.msra.mxu0 %v4838
        %5143 = vmatprep.subr.bf16.mxu0 0
        %5144 = vmatpush1.bf16.msra.mxu0 %v4839
        %5145 = vmatprep.mubr.bf16.mxu0 %v3985
        %5146 = vmatmul.mubr.bf16.gmra.mrb[0].mxu0 %v3889
        %v5147 = vpop.f32.mrb[0].mxu0
        %v5148 = vadd.f32 %v4987, %v5147
        %v5149 = vpop.f32.mrb[0].mxu0
        %v5150 = vpop.f32.mrb[0].mxu0
        %v5151 = vadd.f32 %v4990, %v5150
        %v5152 = vpop.f32.mrb[0].mxu0
        %5153 = vmatprep.mubr.bf16.mxu0 %v3986
        %5154 = vmatmul.mubr.bf16.gmra.mrb[0].mxu0 %v3890
        %v5155 = vpop.f32.mrb[0].mxu0
        %v5156 = vadd.f32 %v4995, %v5155
        %v5157 = vpop.f32.mrb[0].mxu0
        %v5158 = vpop.f32.mrb[0].mxu0
        %v5159 = vadd.f32 %v4998, %v5158
        %v5160 = vpop.f32.mrb[0].mxu0
        %5161 = vmatprep.mubr.bf16.mxu0 %v3987
        %5162 = vmatmul.mubr.bf16.gmra.mrb[0].mxu0 %v3891
        %v5163 = vpop.f32.mrb[0].mxu0
        %v5164 = vadd.f32 %v5003, %v5163
        %v5165 = vpop.f32.mrb[0].mxu0
        %v5166 = vpop.f32.mrb[0].mxu0
        %v5167 = vadd.f32 %v5006, %v5166
        %v5168 = vpop.f32.mrb[0].mxu0
        %5169 = vmatprep.mubr.bf16.mxu0 %v3988
        %5170 = vmatmul.mubr.bf16.gmra.mrb[0].mxu0 %v3892
        %v5171 = vpop.f32.mrb[0].mxu0
        %v5172 = vadd.f32 %v5011, %v5171
        %v5173 = vpop.f32.mrb[0].mxu0
        %v5174 = vpop.f32.mrb[0].mxu0
        %v5175 = vadd.f32 %v5014, %v5174
        %v5176 = vpop.f32.mrb[0].mxu0
        %5177 = vmatprep.mubr.bf16.mxu0 %v3989
        %5178 = vmatmul.mubr.bf16.gmra.mrb[0].mxu0 %v3893
        %v5179 = vpop.f32.mrb[0].mxu0
        %v5180 = vadd.f32 %v5019, %v5179
        %v5181 = vpop.f32.mrb[0].mxu0
        %v5182 = vpop.f32.mrb[0].mxu0
        %v5183 = vadd.f32 %v5022, %v5182
        %v5184 = vpop.f32.mrb[0].mxu0
        %5185 = vmatprep.mubr.bf16.mxu0 %v3990
        %5186 = vmatmul.mubr.bf16.gmra.mrb[0].mxu0 %v3894
        %v5187 = vpop.f32.mrb[0].mxu0
        %v5188 = vadd.f32 %v5027, %v5187
        %v5189 = vpop.f32.mrb[0].mxu0
        %v5190 = vpop.f32.mrb[0].mxu0
        %v5191 = vadd.f32 %v5030, %v5190
        %v5192 = vpop.f32.mrb[0].mxu0
        %5193 = vmatprep.mubr.bf16.mxu0 %v3991
        %5194 = vmatmul.mubr.bf16.gmra.mrb[0].mxu0 %v3895
        %v5195 = vpop.f32.mrb[0].mxu0
        %v5196 = vadd.f32 %v5035, %v5195
        %v5197 = vpop.f32.mrb[0].mxu0
        %v5198 = vpop.f32.mrb[0].mxu0
        %v5199 = vadd.f32 %v5038, %v5198
        %v5200 = vpop.f32.mrb[0].mxu0
        %5201 = vmatprep.mubr.bf16.mxu0 %v3992
        %5202 = vmatmul.mubr.bf16.gmra.mrb[0].mxu0 %v3896
        %v5203 = vpop.f32.mrb[0].mxu0
        %v5204 = vadd.f32 %v5043, %v5203
        %v5205 = vpop.f32.mrb[0].mxu0
        %v5206 = vpop.f32.mrb[0].mxu0
        %v5207 = vadd.f32 %v5046, %v5206
        %v5208 = vpop.f32.mrb[0].mxu0
        %5209 = vmatprep.mubr.bf16.mxu0 %v3993
        %5210 = vmatmul.mubr.bf16.gmra.mrb[0].mxu0 %v3897
        %v5211 = vpop.f32.mrb[0].mxu0
        %v5212 = vadd.f32 %v5051, %v5211
        %v5213 = vpop.f32.mrb[0].mxu0
        %v5214 = vpop.f32.mrb[0].mxu0
        %v5215 = vadd.f32 %v5054, %v5214
        %v5216 = vpop.f32.mrb[0].mxu0
        %5217 = vmatprep.mubr.bf16.mxu0 %v3994
        %5218 = vmatmul.mubr.bf16.gmra.mrb[0].mxu0 %v3898
        %v5219 = vpop.f32.mrb[0].mxu0
        %v5220 = vadd.f32 %v5059, %v5219
        %v5221 = vpop.f32.mrb[0].mxu0
        %v5222 = vpop.f32.mrb[0].mxu0
        %v5223 = vadd.f32 %v5062, %v5222
        %v5224 = vpop.f32.mrb[0].mxu0
        %5225 = vmatprep.mubr.bf16.mxu0 %v3995
        %5226 = vmatmul.mubr.bf16.gmra.mrb[0].mxu0 %v3899
        %v5227 = vpop.f32.mrb[0].mxu0
        %v5228 = vadd.f32 %v5067, %v5227
        %v5229 = vpop.f32.mrb[0].mxu0
        %v5230 = vpop.f32.mrb[0].mxu0
        %v5231 = vadd.f32 %v5070, %v5230
        %v5232 = vpop.f32.mrb[0].mxu0
        %5233 = vmatprep.mubr.bf16.mxu0 %v3996
        %5234 = vmatmul.mubr.bf16.gmra.mrb[0].mxu0 %v3900
        %v5235 = vpop.f32.mrb[0].mxu0
        %v5236 = vadd.f32 %v5075, %v5235
        %v5237 = vpop.f32.mrb[0].mxu0
        %v5238 = vpop.f32.mrb[0].mxu0
        %v5239 = vadd.f32 %v5078, %v5238
        %v5240 = vpop.f32.mrb[0].mxu0
        %5241 = vmatprep.mubr.bf16.mxu0 %v3997
        %5242 = vmatmul.mubr.bf16.gmra.mrb[0].mxu0 %v3901
        %v5243 = vpop.f32.mrb[0].mxu0
        %v5244 = vadd.f32 %v5083, %v5243
        %v5245 = vpop.f32.mrb[0].mxu0
        %v5246 = vpop.f32.mrb[0].mxu0
        %v5247 = vadd.f32 %v5086, %v5246
        %v5248 = vpop.f32.mrb[0].mxu0
        %5249 = vmatprep.mubr.bf16.mxu0 %v3998
        %5250 = vmatmul.mubr.bf16.gmra.mrb[0].mxu0 %v3902
        %v5251 = vpop.f32.mrb[0].mxu0
        %v5252 = vadd.f32 %v5091, %v5251
        %v5253 = vpop.f32.mrb[0].mxu0
        %v5254 = vpop.f32.mrb[0].mxu0
        %v5255 = vadd.f32 %v5094, %v5254
        %v5256 = vpop.f32.mrb[0].mxu0
        %5257 = vmatprep.mubr.bf16.mxu0 %v3999
        %5258 = vmatmul.mubr.bf16.gmra.mrb[0].mxu0 %v3903
        %v5259 = vpop.f32.mrb[0].mxu0
        %v5260 = vadd.f32 %v5099, %v5259
        %v5261 = vpop.f32.mrb[0].mxu0
        %v5262 = vpop.f32.mrb[0].mxu0
        %v5263 = vadd.f32 %v5102, %v5262
        %v5264 = vpop.f32.mrb[0].mxu0
        %5265 = vmatprep.mubr.bf16.mxu0 %v4000
        %5266 = vmatmul.mubr.bf16.gmra.mrb[0].mxu0 %v3904
        %v5267 = vpop.f32.mrb[0].mxu0
        %v5268 = vadd.f32 %v5107, %v5267
        %v5269 = vpop.f32.mrb[0].mxu0
        %v5270 = vpop.f32.mrb[0].mxu0
        %v5271 = vadd.f32 %v5110, %v5270
        %v5272 = vpop.f32.mrb[0].mxu0
        %5273 = vdwg.mxu0
        %5274 = vmatprep.subr.bf16.mxu0 0
        %5275 = vmatpush1.bf16.msra.mxu0 %v4840
        %5276 = vmatprep.subr.bf16.mxu0 0
        %5277 = vmatpush1.bf16.msra.mxu0 %v4841
        %5278 = vmatprep.subr.bf16.mxu0 0
        %5279 = vmatpush1.bf16.msra.mxu0 %v4842
        %5280 = vmatprep.subr.bf16.mxu0 0
        %5281 = vmatpush1.bf16.msra.mxu0 %v4843
        %5282 = vmatprep.subr.bf16.mxu0 0
        %5283 = vmatpush1.bf16.msra.mxu0 %v4844
        %5284 = vmatprep.subr.bf16.mxu0 0
        %5285 = vmatpush1.bf16.msra.mxu0 %v4845
        %5286 = vmatprep.subr.bf16.mxu0 0
        %5287 = vmatpush1.bf16.msra.mxu0 %v4846
        %5288 = vmatprep.subr.bf16.mxu0 0
        %5289 = vmatpush1.bf16.msra.mxu0 %v4847
        %5290 = vmatprep.subr.bf16.mxu0 0
        %5291 = vmatpush1.bf16.msra.mxu0 %v4848
        %5292 = vmatprep.subr.bf16.mxu0 0
        %5293 = vmatpush1.bf16.msra.mxu0 %v4849
        %5294 = vmatprep.subr.bf16.mxu0 0
        %5295 = vmatpush1.bf16.msra.mxu0 %v4850
        %5296 = vmatprep.subr.bf16.mxu0 0
        %5297 = vmatpush1.bf16.msra.mxu0 %v4851
        %5298 = vmatprep.subr.bf16.mxu0 0
        %5299 = vmatpush1.bf16.msra.mxu0 %v4852
        %5300 = vmatprep.subr.bf16.mxu0 0
        %5301 = vmatpush1.bf16.msra.mxu0 %v4853
        %5302 = vmatprep.subr.bf16.mxu0 0
        %5303 = vmatpush1.bf16.msra.mxu0 %v4854
        %5304 = vmatprep.subr.bf16.mxu0 0
        %5305 = vmatpush1.bf16.msra.mxu0 %v4855
        %5306 = vmatprep.mubr.bf16.mxu0 %v4113
        %5307 = vmatmul.mubr.bf16.gmra.mrb[0].mxu0 %v4049
        %v5308 = vpop.f32.mrb[0].mxu0
        %v5309 = vadd.f32 %v5148, %v5308
        %v5310 = vpop.f32.mrb[0].mxu0
        %v5311 = vpop.f32.mrb[0].mxu0
        %v5312 = vadd.f32 %v5151, %v5311
        %v5313 = vpop.f32.mrb[0].mxu0
        %5314 = vmatprep.mubr.bf16.mxu0 %v4114
        %5315 = vmatmul.mubr.bf16.gmra.mrb[0].mxu0 %v4050
        %v5316 = vpop.f32.mrb[0].mxu0
        %v5317 = vadd.f32 %v5156, %v5316
        %v5318 = vpop.f32.mrb[0].mxu0
        %v5319 = vpop.f32.mrb[0].mxu0
        %v5320 = vadd.f32 %v5159, %v5319
        %v5321 = vpop.f32.mrb[0].mxu0
        %5322 = vmatprep.mubr.bf16.mxu0 %v4115
        %5323 = vmatmul.mubr.bf16.gmra.mrb[0].mxu0 %v4051
        %v5324 = vpop.f32.mrb[0].mxu0
        %v5325 = vadd.f32 %v5164, %v5324
        %v5326 = vpop.f32.mrb[0].mxu0
        %v5327 = vpop.f32.mrb[0].mxu0
        %v5328 = vadd.f32 %v5167, %v5327
        %v5329 = vpop.f32.mrb[0].mxu0
        %5330 = vmatprep.mubr.bf16.mxu0 %v4116
        %5331 = vmatmul.mubr.bf16.gmra.mrb[0].mxu0 %v4052
        %v5332 = vpop.f32.mrb[0].mxu0
        %v5333 = vadd.f32 %v5172, %v5332
        %v5334 = vpop.f32.mrb[0].mxu0
        %v5335 = vpop.f32.mrb[0].mxu0
        %v5336 = vadd.f32 %v5175, %v5335
        %v5337 = vpop.f32.mrb[0].mxu0
        %5338 = vmatprep.mubr.bf16.mxu0 %v4117
        %5339 = vmatmul.mubr.bf16.gmra.mrb[0].mxu0 %v4053
        %v5340 = vpop.f32.mrb[0].mxu0
        %v5341 = vadd.f32 %v5180, %v5340
        %v5342 = vpop.f32.mrb[0].mxu0
        %v5343 = vpop.f32.mrb[0].mxu0
        %v5344 = vadd.f32 %v5183, %v5343
        %v5345 = vpop.f32.mrb[0].mxu0
        %5346 = vmatprep.mubr.bf16.mxu0 %v4118
        %5347 = vmatmul.mubr.bf16.gmra.mrb[0].mxu0 %v4054
        %v5348 = vpop.f32.mrb[0].mxu0
        %v5349 = vadd.f32 %v5188, %v5348
        %v5350 = vpop.f32.mrb[0].mxu0
        %v5351 = vpop.f32.mrb[0].mxu0
        %v5352 = vadd.f32 %v5191, %v5351
        %v5353 = vpop.f32.mrb[0].mxu0
        %5354 = vmatprep.mubr.bf16.mxu0 %v4119
        %5355 = vmatmul.mubr.bf16.gmra.mrb[0].mxu0 %v4055
        %v5356 = vpop.f32.mrb[0].mxu0
        %v5357 = vadd.f32 %v5196, %v5356
        %v5358 = vpop.f32.mrb[0].mxu0
        %v5359 = vpop.f32.mrb[0].mxu0
        %v5360 = vadd.f32 %v5199, %v5359
        %v5361 = vpop.f32.mrb[0].mxu0
        %5362 = vmatprep.mubr.bf16.mxu0 %v4120
        %5363 = vmatmul.mubr.bf16.gmra.mrb[0].mxu0 %v4056
        %v5364 = vpop.f32.mrb[0].mxu0
        %v5365 = vadd.f32 %v5204, %v5364
        %v5366 = vpop.f32.mrb[0].mxu0
        %v5367 = vpop.f32.mrb[0].mxu0
        %v5368 = vadd.f32 %v5207, %v5367
        %v5369 = vpop.f32.mrb[0].mxu0
        %5370 = vmatprep.mubr.bf16.mxu0 %v4121
        %5371 = vmatmul.mubr.bf16.gmra.mrb[0].mxu0 %v4057
        %v5372 = vpop.f32.mrb[0].mxu0
        %v5373 = vadd.f32 %v5212, %v5372
        %v5374 = vpop.f32.mrb[0].mxu0
        %v5375 = vpop.f32.mrb[0].mxu0
        %v5376 = vadd.f32 %v5215, %v5375
        %v5377 = vpop.f32.mrb[0].mxu0
        %5378 = vmatprep.mubr.bf16.mxu0 %v4122
        %5379 = vmatmul.mubr.bf16.gmra.mrb[0].mxu0 %v4058
        %v5380 = vpop.f32.mrb[0].mxu0
        %v5381 = vadd.f32 %v5220, %v5380
        %v5382 = vpop.f32.mrb[0].mxu0
        %v5383 = vpop.f32.mrb[0].mxu0
        %v5384 = vadd.f32 %v5223, %v5383
        %v5385 = vpop.f32.mrb[0].mxu0
        %5386 = vmatprep.mubr.bf16.mxu0 %v4123
        %5387 = vmatmul.mubr.bf16.gmra.mrb[0].mxu0 %v4059
        %v5388 = vpop.f32.mrb[0].mxu0
        %v5389 = vadd.f32 %v5228, %v5388
        %v5390 = vpop.f32.mrb[0].mxu0
        %v5391 = vpop.f32.mrb[0].mxu0
        %v5392 = vadd.f32 %v5231, %v5391
        %v5393 = vpop.f32.mrb[0].mxu0
        %5394 = vmatprep.mubr.bf16.mxu0 %v4124
        %5395 = vmatmul.mubr.bf16.gmra.mrb[0].mxu0 %v4060
        %v5396 = vpop.f32.mrb[0].mxu0
        %v5397 = vadd.f32 %v5236, %v5396
        %v5398 = vpop.f32.mrb[0].mxu0
        %v5399 = vpop.f32.mrb[0].mxu0
        %v5400 = vadd.f32 %v5239, %v5399
        %v5401 = vpop.f32.mrb[0].mxu0
        %5402 = vmatprep.mubr.bf16.mxu0 %v4125
        %5403 = vmatmul.mubr.bf16.gmra.mrb[0].mxu0 %v4061
        %v5404 = vpop.f32.mrb[0].mxu0
        %v5405 = vadd.f32 %v5244, %v5404
        %v5406 = vpop.f32.mrb[0].mxu0
        %v5407 = vpop.f32.mrb[0].mxu0
        %v5408 = vadd.f32 %v5247, %v5407
        %v5409 = vpop.f32.mrb[0].mxu0
        %5410 = vmatprep.mubr.bf16.mxu0 %v4126
        %5411 = vmatmul.mubr.bf16.gmra.mrb[0].mxu0 %v4062
        %v5412 = vpop.f32.mrb[0].mxu0
        %v5413 = vadd.f32 %v5252, %v5412
        %v5414 = vpop.f32.mrb[0].mxu0
        %v5415 = vpop.f32.mrb[0].mxu0
        %v5416 = vadd.f32 %v5255, %v5415
        %v5417 = vpop.f32.mrb[0].mxu0
        %5418 = vmatprep.mubr.bf16.mxu0 %v4127
        %5419 = vmatmul.mubr.bf16.gmra.mrb[0].mxu0 %v4063
        %v5420 = vpop.f32.mrb[0].mxu0
        %v5421 = vadd.f32 %v5260, %v5420
        %v5422 = vpop.f32.mrb[0].mxu0
        %v5423 = vpop.f32.mrb[0].mxu0
        %v5424 = vadd.f32 %v5263, %v5423
        %v5425 = vpop.f32.mrb[0].mxu0
        %5426 = vmatprep.mubr.bf16.mxu0 %v4128
        %5427 = vmatmul.mubr.bf16.gmra.mrb[0].mxu0 %v4064
        %v5428 = vpop.f32.mrb[0].mxu0
        %v5429 = vadd.f32 %v5268, %v5428
        %v5430 = vpop.f32.mrb[0].mxu0
        %v5431 = vpop.f32.mrb[0].mxu0
        %v5432 = vadd.f32 %v5271, %v5431
        %v5433 = vpop.f32.mrb[0].mxu0
        %5434 = vdwg.mxu0
        %5435 = vmatprep.subr.bf16.mxu0 0
        %5436 = vmatpush1.bf16.msra.mxu0 %v4856
        %5437 = vmatprep.subr.bf16.mxu0 0
        %5438 = vmatpush1.bf16.msra.mxu0 %v4857
        %5439 = vmatprep.subr.bf16.mxu0 0
        %5440 = vmatpush1.bf16.msra.mxu0 %v4858
        %5441 = vmatprep.subr.bf16.mxu0 0
        %5442 = vmatpush1.bf16.msra.mxu0 %v4859
        %5443 = vmatprep.subr.bf16.mxu0 0
        %5444 = vmatpush1.bf16.msra.mxu0 %v4860
        %5445 = vmatprep.subr.bf16.mxu0 0
        %5446 = vmatpush1.bf16.msra.mxu0 %v4861
        %5447 = vmatprep.subr.bf16.mxu0 0
        %5448 = vmatpush1.bf16.msra.mxu0 %v4862
        %5449 = vmatprep.subr.bf16.mxu0 0
        %5450 = vmatpush1.bf16.msra.mxu0 %v4863
        %5451 = vmatprep.subr.bf16.mxu0 0
        %5452 = vmatpush1.bf16.msra.mxu0 %v4864
        %5453 = vmatprep.subr.bf16.mxu0 0
        %5454 = vmatpush1.bf16.msra.mxu0 %v4865
        %5455 = vmatprep.subr.bf16.mxu0 0
        %5456 = vmatpush1.bf16.msra.mxu0 %v4866
        %5457 = vmatprep.subr.bf16.mxu0 0
        %5458 = vmatpush1.bf16.msra.mxu0 %v4867
        %5459 = vmatprep.subr.bf16.mxu0 0
        %5460 = vmatpush1.bf16.msra.mxu0 %v4868
        %5461 = vmatprep.subr.bf16.mxu0 0
        %5462 = vmatpush1.bf16.msra.mxu0 %v4869
        %5463 = vmatprep.subr.bf16.mxu0 0
        %5464 = vmatpush1.bf16.msra.mxu0 %v4870
        %5465 = vmatprep.subr.bf16.mxu0 0
        %5466 = vmatpush1.bf16.msra.mxu0 %v4871
        %5467 = vmatprep.mubr.bf16.mxu0 %v4273
        %5468 = vmatmul.mubr.bf16.gmra.mrb[0].mxu0 %v4209
        %v5469 = vpop.f32.mrb[0].mxu0
        %v5470 = vadd.f32 %v5309, %v5469
        %v5471 = vpop.f32.mrb[0].mxu0
        %v5472 = vpop.f32.mrb[0].mxu0
        %v5473 = vadd.f32 %v5312, %v5472
        %v5474 = vpop.f32.mrb[0].mxu0
        %5475 = vmatprep.mubr.bf16.mxu0 %v4274
        %5476 = vmatmul.mubr.bf16.gmra.mrb[0].mxu0 %v4210
        %v5477 = vpop.f32.mrb[0].mxu0
        %v5478 = vadd.f32 %v5317, %v5477
        %v5479 = vpop.f32.mrb[0].mxu0
        %v5480 = vpop.f32.mrb[0].mxu0
        %v5481 = vadd.f32 %v5320, %v5480
        %v5482 = vpop.f32.mrb[0].mxu0
        %5483 = vmatprep.mubr.bf16.mxu0 %v4275
        %5484 = vmatmul.mubr.bf16.gmra.mrb[0].mxu0 %v4211
        %v5485 = vpop.f32.mrb[0].mxu0
        %v5486 = vadd.f32 %v5325, %v5485
        %v5487 = vpop.f32.mrb[0].mxu0
        %v5488 = vpop.f32.mrb[0].mxu0
        %v5489 = vadd.f32 %v5328, %v5488
        %v5490 = vpop.f32.mrb[0].mxu0
        %5491 = vmatprep.mubr.bf16.mxu0 %v4276
        %5492 = vmatmul.mubr.bf16.gmra.mrb[0].mxu0 %v4212
        %v5493 = vpop.f32.mrb[0].mxu0
        %v5494 = vadd.f32 %v5333, %v5493
        %v5495 = vpop.f32.mrb[0].mxu0
        %v5496 = vpop.f32.mrb[0].mxu0
        %v5497 = vadd.f32 %v5336, %v5496
        %v5498 = vpop.f32.mrb[0].mxu0
        %5499 = vmatprep.mubr.bf16.mxu0 %v4277
        %5500 = vmatmul.mubr.bf16.gmra.mrb[0].mxu0 %v4213
        %v5501 = vpop.f32.mrb[0].mxu0
        %v5502 = vadd.f32 %v5341, %v5501
        %v5503 = vpop.f32.mrb[0].mxu0
        %v5504 = vpop.f32.mrb[0].mxu0
        %v5505 = vadd.f32 %v5344, %v5504
        %v5506 = vpop.f32.mrb[0].mxu0
        %5507 = vmatprep.mubr.bf16.mxu0 %v4278
        %5508 = vmatmul.mubr.bf16.gmra.mrb[0].mxu0 %v4214
        %v5509 = vpop.f32.mrb[0].mxu0
        %v5510 = vadd.f32 %v5349, %v5509
        %v5511 = vpop.f32.mrb[0].mxu0
        %v5512 = vpop.f32.mrb[0].mxu0
        %v5513 = vadd.f32 %v5352, %v5512
        %v5514 = vpop.f32.mrb[0].mxu0
        %5515 = vmatprep.mubr.bf16.mxu0 %v4279
        %5516 = vmatmul.mubr.bf16.gmra.mrb[0].mxu0 %v4215
        %v5517 = vpop.f32.mrb[0].mxu0
        %v5518 = vadd.f32 %v5357, %v5517
        %v5519 = vpop.f32.mrb[0].mxu0
        %v5520 = vpop.f32.mrb[0].mxu0
        %v5521 = vadd.f32 %v5360, %v5520
        %v5522 = vpop.f32.mrb[0].mxu0
        %5523 = vmatprep.mubr.bf16.mxu0 %v4280
        %5524 = vmatmul.mubr.bf16.gmra.mrb[0].mxu0 %v4216
        %v5525 = vpop.f32.mrb[0].mxu0
        %v5526 = vadd.f32 %v5365, %v5525
        %v5527 = vpop.f32.mrb[0].mxu0
        %v5528 = vpop.f32.mrb[0].mxu0
        %v5529 = vadd.f32 %v5368, %v5528
        %v5530 = vpop.f32.mrb[0].mxu0
        %5531 = vmatprep.mubr.bf16.mxu0 %v4281
        %5532 = vmatmul.mubr.bf16.gmra.mrb[0].mxu0 %v4217
        %v5533 = vpop.f32.mrb[0].mxu0
        %v5534 = vadd.f32 %v5373, %v5533
        %v5535 = vpop.f32.mrb[0].mxu0
        %v5536 = vpop.f32.mrb[0].mxu0
        %v5537 = vadd.f32 %v5376, %v5536
        %v5538 = vpop.f32.mrb[0].mxu0
        %5539 = vmatprep.mubr.bf16.mxu0 %v4282
        %5540 = vmatmul.mubr.bf16.gmra.mrb[0].mxu0 %v4218
        %v5541 = vpop.f32.mrb[0].mxu0
        %v5542 = vadd.f32 %v5381, %v5541
        %v5543 = vpop.f32.mrb[0].mxu0
        %v5544 = vpop.f32.mrb[0].mxu0
        %v5545 = vadd.f32 %v5384, %v5544
        %v5546 = vpop.f32.mrb[0].mxu0
        %5547 = vmatprep.mubr.bf16.mxu0 %v4283
        %5548 = vmatmul.mubr.bf16.gmra.mrb[0].mxu0 %v4219
        %v5549 = vpop.f32.mrb[0].mxu0
        %v5550 = vadd.f32 %v5389, %v5549
        %v5551 = vpop.f32.mrb[0].mxu0
        %v5552 = vpop.f32.mrb[0].mxu0
        %v5553 = vadd.f32 %v5392, %v5552
        %v5554 = vpop.f32.mrb[0].mxu0
        %5555 = vmatprep.mubr.bf16.mxu0 %v4284
        %5556 = vmatmul.mubr.bf16.gmra.mrb[0].mxu0 %v4220
        %v5557 = vpop.f32.mrb[0].mxu0
        %v5558 = vadd.f32 %v5397, %v5557
        %v5559 = vpop.f32.mrb[0].mxu0
        %v5560 = vpop.f32.mrb[0].mxu0
        %v5561 = vadd.f32 %v5400, %v5560
        %v5562 = vpop.f32.mrb[0].mxu0
        %5563 = vmatprep.mubr.bf16.mxu0 %v4285
        %5564 = vmatmul.mubr.bf16.gmra.mrb[0].mxu0 %v4221
        %v5565 = vpop.f32.mrb[0].mxu0
        %v5566 = vadd.f32 %v5405, %v5565
        %v5567 = vpop.f32.mrb[0].mxu0
        %v5568 = vpop.f32.mrb[0].mxu0
        %v5569 = vadd.f32 %v5408, %v5568
        %v5570 = vpop.f32.mrb[0].mxu0
        %5571 = vmatprep.mubr.bf16.mxu0 %v4286
        %5572 = vmatmul.mubr.bf16.gmra.mrb[0].mxu0 %v4222
        %v5573 = vpop.f32.mrb[0].mxu0
        %v5574 = vadd.f32 %v5413, %v5573
        %v5575 = vpop.f32.mrb[0].mxu0
        %v5576 = vpop.f32.mrb[0].mxu0
        %v5577 = vadd.f32 %v5416, %v5576
        %v5578 = vpop.f32.mrb[0].mxu0
        %5579 = vmatprep.mubr.bf16.mxu0 %v4287
        %5580 = vmatmul.mubr.bf16.gmra.mrb[0].mxu0 %v4223
        %v5581 = vpop.f32.mrb[0].mxu0
        %v5582 = vadd.f32 %v5421, %v5581
        %v5583 = vpop.f32.mrb[0].mxu0
        %v5584 = vpop.f32.mrb[0].mxu0
        %v5585 = vadd.f32 %v5424, %v5584
        %v5586 = vpop.f32.mrb[0].mxu0
        %5587 = vmatprep.mubr.bf16.mxu0 %v4288
        %5588 = vmatmul.mubr.bf16.gmra.mrb[0].mxu0 %v4224
        %v5589 = vpop.f32.mrb[0].mxu0
        %v5590 = vadd.f32 %v5429, %v5589
        %v5591 = vpop.f32.mrb[0].mxu0
        %v5592 = vpop.f32.mrb[0].mxu0
        %v5593 = vadd.f32 %v5432, %v5592
        %v5594 = vpop.f32.mrb[0].mxu0
        %5595 = vdwg.mxu0
        %5596 = vmatprep.subr.bf16.mxu0 0
        %5597 = vmatpush1.bf16.msra.mxu0 %v4872
        %5598 = vmatprep.subr.bf16.mxu0 0
        %5599 = vmatpush1.bf16.msra.mxu0 %v4873
        %5600 = vmatprep.subr.bf16.mxu0 0
        %5601 = vmatpush1.bf16.msra.mxu0 %v4874
        %5602 = vmatprep.subr.bf16.mxu0 0
        %5603 = vmatpush1.bf16.msra.mxu0 %v4875
        %5604 = vmatprep.subr.bf16.mxu0 0
        %5605 = vmatpush1.bf16.msra.mxu0 %v4876
        %5606 = vmatprep.subr.bf16.mxu0 0
        %5607 = vmatpush1.bf16.msra.mxu0 %v4877
        %5608 = vmatprep.subr.bf16.mxu0 0
        %5609 = vmatpush1.bf16.msra.mxu0 %v4878
        %5610 = vmatprep.subr.bf16.mxu0 0
        %5611 = vmatpush1.bf16.msra.mxu0 %v4879
        %5612 = vmatprep.subr.bf16.mxu0 0
        %5613 = vmatpush1.bf16.msra.mxu0 0
        %5614 = vmatprep.subr.bf16.mxu0 0
        %5615 = vmatpush1.bf16.msra.mxu0 0
        %5616 = vmatprep.subr.bf16.mxu0 0
        %5617 = vmatpush1.bf16.msra.mxu0 0
        %5618 = vmatprep.subr.bf16.mxu0 0
        %5619 = vmatpush1.bf16.msra.mxu0 0
        %5620 = vmatprep.subr.bf16.mxu0 0
        %5621 = vmatpush1.bf16.msra.mxu0 0
        %5622 = vmatprep.subr.bf16.mxu0 0
        %5623 = vmatpush1.bf16.msra.mxu0 0
        %5624 = vmatprep.subr.bf16.mxu0 0
        %5625 = vmatpush1.bf16.msra.mxu0 0
        %5626 = vmatprep.subr.bf16.mxu0 0
        %5627 = vmatpush1.bf16.msra.mxu0 0
        %5628 = vmatprep.mubr.bf16.mxu0 0
        %5629 = vmatmul.mubr.bf16.gmra.mrb[0].mxu0 %v4337
        %v5630 = vpop.f32.mrb[0].mxu0
        %v5631 = vadd.f32 %v5470, %v5630
        %v5632 = vpop.f32.mrb[0].mxu0
        %v5633 = vpop.f32.mrb[0].mxu0
        %v5634 = vadd.f32 %v5473, %v5633
        %v5635 = vpop.f32.mrb[0].mxu0
        %5636 = vmatprep.mubr.bf16.mxu0 0
        %5637 = vmatmul.mubr.bf16.gmra.mrb[0].mxu0 %v4338
        %v5638 = vpop.f32.mrb[0].mxu0
        %v5639 = vadd.f32 %v5478, %v5638
        %v5640 = vpop.f32.mrb[0].mxu0
        %v5641 = vpop.f32.mrb[0].mxu0
        %v5642 = vadd.f32 %v5481, %v5641
        %v5643 = vpop.f32.mrb[0].mxu0
        %5644 = vmatprep.mubr.bf16.mxu0 0
        %5645 = vmatmul.mubr.bf16.gmra.mrb[0].mxu0 %v4339
        %v5646 = vpop.f32.mrb[0].mxu0
        %v5647 = vadd.f32 %v5486, %v5646
        %v5648 = vpop.f32.mrb[0].mxu0
        %v5649 = vpop.f32.mrb[0].mxu0
        %v5650 = vadd.f32 %v5489, %v5649
        %v5651 = vpop.f32.mrb[0].mxu0
        %5652 = vmatprep.mubr.bf16.mxu0 0
        %5653 = vmatmul.mubr.bf16.gmra.mrb[0].mxu0 %v4340
        %v5654 = vpop.f32.mrb[0].mxu0
        %v5655 = vadd.f32 %v5494, %v5654
        %v5656 = vpop.f32.mrb[0].mxu0
        %v5657 = vpop.f32.mrb[0].mxu0
        %v5658 = vadd.f32 %v5497, %v5657
        %v5659 = vpop.f32.mrb[0].mxu0
        %5660 = vmatprep.mubr.bf16.mxu0 0
        %5661 = vmatmul.mubr.bf16.gmra.mrb[0].mxu0 %v4341
        %v5662 = vpop.f32.mrb[0].mxu0
        %v5663 = vadd.f32 %v5502, %v5662
        %v5664 = vpop.f32.mrb[0].mxu0
        %v5665 = vpop.f32.mrb[0].mxu0
        %v5666 = vadd.f32 %v5505, %v5665
        %v5667 = vpop.f32.mrb[0].mxu0
        %5668 = vmatprep.mubr.bf16.mxu0 0
        %5669 = vmatmul.mubr.bf16.gmra.mrb[0].mxu0 %v4342
        %v5670 = vpop.f32.mrb[0].mxu0
        %v5671 = vadd.f32 %v5510, %v5670
        %v5672 = vpop.f32.mrb[0].mxu0
        %v5673 = vpop.f32.mrb[0].mxu0
        %v5674 = vadd.f32 %v5513, %v5673
        %v5675 = vpop.f32.mrb[0].mxu0
        %5676 = vmatprep.mubr.bf16.mxu0 0
        %5677 = vmatmul.mubr.bf16.gmra.mrb[0].mxu0 %v4343
        %v5678 = vpop.f32.mrb[0].mxu0
        %v5679 = vadd.f32 %v5518, %v5678
        %v5680 = vpop.f32.mrb[0].mxu0
        %v5681 = vpop.f32.mrb[0].mxu0
        %v5682 = vadd.f32 %v5521, %v5681
        %v5683 = vpop.f32.mrb[0].mxu0
        %5684 = vmatprep.mubr.bf16.mxu0 0
        %5685 = vmatmul.mubr.bf16.gmra.mrb[0].mxu0 %v4344
        %v5686 = vpop.f32.mrb[0].mxu0
        %v5687 = vadd.f32 %v5526, %v5686
        %v5688 = vpop.f32.mrb[0].mxu0
        %v5689 = vpop.f32.mrb[0].mxu0
        %v5690 = vadd.f32 %v5529, %v5689
        %v5691 = vpop.f32.mrb[0].mxu0
        %5692 = vmatprep.mubr.bf16.mxu0 0
        %5693 = vmatmul.mubr.bf16.gmra.mrb[0].mxu0 %v4345
        %v5694 = vpop.f32.mrb[0].mxu0
        %v5695 = vadd.f32 %v5534, %v5694
        %v5696 = vpop.f32.mrb[0].mxu0
        %v5697 = vpop.f32.mrb[0].mxu0
        %v5698 = vadd.f32 %v5537, %v5697
        %v5699 = vpop.f32.mrb[0].mxu0
        %5700 = vmatprep.mubr.bf16.mxu0 0
        %5701 = vmatmul.mubr.bf16.gmra.mrb[0].mxu0 %v4346
        %v5702 = vpop.f32.mrb[0].mxu0
        %v5703 = vadd.f32 %v5542, %v5702
        %v5704 = vpop.f32.mrb[0].mxu0
        %v5705 = vpop.f32.mrb[0].mxu0
        %v5706 = vadd.f32 %v5545, %v5705
        %v5707 = vpop.f32.mrb[0].mxu0
        %5708 = vmatprep.mubr.bf16.mxu0 0
        %5709 = vmatmul.mubr.bf16.gmra.mrb[0].mxu0 %v4347
        %v5710 = vpop.f32.mrb[0].mxu0
        %v5711 = vadd.f32 %v5550, %v5710
        %v5712 = vpop.f32.mrb[0].mxu0
        %v5713 = vpop.f32.mrb[0].mxu0
        %v5714 = vadd.f32 %v5553, %v5713
        %v5715 = vpop.f32.mrb[0].mxu0
        %5716 = vmatprep.mubr.bf16.mxu0 0
        %5717 = vmatmul.mubr.bf16.gmra.mrb[0].mxu0 %v4348
        %v5718 = vpop.f32.mrb[0].mxu0
        %v5719 = vadd.f32 %v5558, %v5718
        %v5720 = vpop.f32.mrb[0].mxu0
        %v5721 = vpop.f32.mrb[0].mxu0
        %v5722 = vadd.f32 %v5561, %v5721
        %v5723 = vpop.f32.mrb[0].mxu0
        %5724 = vmatprep.mubr.bf16.mxu0 0
        %5725 = vmatmul.mubr.bf16.gmra.mrb[0].mxu0 %v4349
        %v5726 = vpop.f32.mrb[0].mxu0
        %v5727 = vadd.f32 %v5566, %v5726
        %v5728 = vpop.f32.mrb[0].mxu0
        %v5729 = vpop.f32.mrb[0].mxu0
        %v5730 = vadd.f32 %v5569, %v5729
        %v5731 = vpop.f32.mrb[0].mxu0
        %5732 = vmatprep.mubr.bf16.mxu0 0
        %5733 = vmatmul.mubr.bf16.gmra.mrb[0].mxu0 %v4350
        %v5734 = vpop.f32.mrb[0].mxu0
        %v5735 = vadd.f32 %v5574, %v5734
        %v5736 = vpop.f32.mrb[0].mxu0
        %v5737 = vpop.f32.mrb[0].mxu0
        %v5738 = vadd.f32 %v5577, %v5737
        %v5739 = vpop.f32.mrb[0].mxu0
        %5740 = vmatprep.mubr.bf16.mxu0 0
        %5741 = vmatmul.mubr.bf16.gmra.mrb[0].mxu0 %v4351
        %v5742 = vpop.f32.mrb[0].mxu0
        %v5743 = vadd.f32 %v5582, %v5742
        %v5744 = vpop.f32.mrb[0].mxu0
        %v5745 = vpop.f32.mrb[0].mxu0
        %v5746 = vadd.f32 %v5585, %v5745
        %v5747 = vpop.f32.mrb[0].mxu0
        %5748 = vmatprep.mubr.bf16.mxu0 0
        %5749 = vmatmul.mubr.bf16.gmra.mrb[0].mxu0 %v4352
        %v5750 = vpop.f32.mrb[0].mxu0
        %v5751 = vadd.f32 %v5590, %v5750
        %v5752 = vpop.f32.mrb[0].mxu0
        %v5753 = vpop.f32.mrb[0].mxu0
        %v5754 = vadd.f32 %v5593, %v5753
        %v5755 = vpop.f32.mrb[0].mxu0
        %5756 = vdwg.mxu0
        %v5757 = vmax.f32 %v5631, 0.0
        %v5758 = vmax.f32 %v5634, 0.0
        %v5759 = vmax.f32 %v5639, 0.0
        %v5760 = vmax.f32 %v5642, 0.0
        %v5761 = vmax.f32 %v5647, 0.0
        %v5762 = vmax.f32 %v5650, 0.0
        %v5763 = vmax.f32 %v5655, 0.0
        %v5764 = vmax.f32 %v5658, 0.0
        %v5765 = vmax.f32 %v5663, 0.0
        %v5766 = vmax.f32 %v5666, 0.0
        %v5767 = vmax.f32 %v5671, 0.0
        %v5768 = vmax.f32 %v5674, 0.0
        %v5769 = vmax.f32 %v5679, 0.0
        %v5770 = vmax.f32 %v5682, 0.0
        %v5771 = vmax.f32 %v5687, 0.0
        %v5772 = vmax.f32 %v5690, 0.0
        %v5773 = vmax.f32 %v5695, 0.0
        %v5774 = vmax.f32 %v5698, 0.0
        %v5775 = vmax.f32 %v5703, 0.0
        %v5776 = vmax.f32 %v5706, 0.0
        %v5777 = vmax.f32 %v5711, 0.0
        %v5778 = vmax.f32 %v5714, 0.0
        %v5779 = vmax.f32 %v5719, 0.0
        %v5780 = vmax.f32 %v5722, 0.0
        %v5781 = vmax.f32 %v5727, 0.0
        %v5782 = vmax.f32 %v5730, 0.0
        %v5783 = vmax.f32 %v5735, 0.0
        %v5784 = vmax.f32 %v5738, 0.0
        %v5785 = vmax.f32 %v5743, 0.0
        %v5786 = vmax.f32 %v5746, 0.0
        %v5787 = vmax.f32 %v5751, 0.0
        %v5788 = vmax.f32 %v5754, 0.0
        %v5789 = vpack.c.bf16 %v5758, %v5757
        %v5790 = vpack.c.bf16 %v5760, %v5759
        %v5791 = vpack.c.bf16 %v5762, %v5761
        %v5792 = vpack.c.bf16 %v5764, %v5763
        %v5793 = vpack.c.bf16 %v5766, %v5765
        %v5794 = vpack.c.bf16 %v5768, %v5767
        %v5795 = vpack.c.bf16 %v5770, %v5769
        %v5796 = vpack.c.bf16 %v5772, %v5771
        %v5797 = vpack.c.bf16 %v5774, %v5773
        %v5798 = vpack.c.bf16 %v5776, %v5775
        %v5799 = vpack.c.bf16 %v5778, %v5777
        %v5800 = vpack.c.bf16 %v5780, %v5779
        %v5801 = vpack.c.bf16 %v5782, %v5781
        %v5802 = vpack.c.bf16 %v5784, %v5783
        %v5803 = vpack.c.bf16 %v5786, %v5785
        %v5804 = vpack.c.bf16 %v5788, %v5787
        %v5805 = vld [vmem:[#allocation9] sm:$0xf]
        %v5806 = vld [vmem:[#allocation9 + $0x4] sm:$0xf]
        %v5807 = vld [vmem:[#allocation9 + $0x8] sm:$0xf]
        %v5808 = vld [vmem:[#allocation9 + $0xc] sm:$0xf]
        %v5809 = vld [vmem:[#allocation9 + $0x10] sm:$0xf]
        %v5810 = vld [vmem:[#allocation9 + $0x14] sm:$0xf]
        %v5811 = vld [vmem:[#allocation9 + $0x18] sm:$0xf]
        %v5812 = vld [vmem:[#allocation9 + $0x1c] sm:$0xf]
        %v5813 = vld [vmem:[#allocation9 + $0x20] sm:$0xf]
        %v5814 = vld [vmem:[#allocation9 + $0x24] sm:$0xf]
        %v5815 = vld [vmem:[#allocation9 + $0x28] sm:$0xf]
        %v5816 = vld [vmem:[#allocation9 + $0x2c] sm:$0xf]
        %v5817 = vld [vmem:[#allocation9 + $0x30] sm:$0xf]
        %v5818 = vld [vmem:[#allocation9 + $0x34] sm:$0xf]
        %v5819 = vld [vmem:[#allocation9 + $0x38] sm:$0xf]
        %v5820 = vld [vmem:[#allocation9 + $0x3c] sm:$0xf]
        %v5821 = vld [vmem:[%s6] sm:$0x1]
        %v5823 = vlaneseq
        %v5824 = vshrl.u32 %v5823, 7
        %v5825 = vsub.s32 0, %v5824
        %v5826 = vrot.slane %v5821, %v5825
        %v5844 = vunpack.c.l.b16 %v5805
        %v5845 = vunpack.c.l.b16 %v5806
        %v5846 = vunpack.c.l.b16 %v5807
        %v5847 = vunpack.c.l.b16 %v5808
        %v5848 = vunpack.c.l.b16 %v5809
        %v5849 = vunpack.c.l.b16 %v5810
        %v5850 = vunpack.c.l.b16 %v5811
        %v5851 = vunpack.c.l.b16 %v5812
        %v5852 = vunpack.c.l.b16 %v5813
        %v5853 = vunpack.c.l.b16 %v5814
        %v5854 = vunpack.c.l.b16 %v5815
        %v5855 = vunpack.c.l.b16 %v5816
        %v5856 = vunpack.c.l.b16 %v5817
        %v5857 = vunpack.c.l.b16 %v5818
        %v5858 = vunpack.c.l.b16 %v5819
        %v5859 = vunpack.c.l.b16 %v5820
        %v5860 = vpack.c.b16 %v5845, %v5844
        %v5861 = vpack.c.b16 %v5847, %v5846
        %v5862 = vpack.c.b16 %v5849, %v5848
        %v5863 = vpack.c.b16 %v5851, %v5850
        %v5864 = vpack.c.b16 %v5853, %v5852
        %v5865 = vpack.c.b16 %v5855, %v5854
        %v5866 = vpack.c.b16 %v5857, %v5856
        %v5867 = vpack.c.b16 %v5859, %v5858
        %5876 = vmatprep.subr.bf16.mxu0 0
        %5877 = vmatpush1.bf16.msra.mxu0 %v5860
        %5878 = vmatprep.subr.bf16.mxu0 0
        %5879 = vmatpush1.bf16.msra.mxu0 %v5861
        %5880 = vmatprep.subr.bf16.mxu0 0
        %5881 = vmatpush1.bf16.msra.mxu0 %v5862
        %5882 = vmatprep.subr.bf16.mxu0 0
        %5883 = vmatpush1.bf16.msra.mxu0 %v5863
        %5884 = vmatprep.subr.bf16.mxu0 0
        %5885 = vmatpush1.bf16.msra.mxu0 %v5864
        %5886 = vmatprep.subr.bf16.mxu0 0
        %5887 = vmatpush1.bf16.msra.mxu0 %v5865
        %5888 = vmatprep.subr.bf16.mxu0 0
        %5889 = vmatpush1.bf16.msra.mxu0 %v5866
        %5890 = vmatprep.subr.bf16.mxu0 0
        %5891 = vmatpush1.bf16.msra.mxu0 %v5867
        %5892 = vmatprep.subr.bf16.mxu0 0
        %5893 = vmatpush1.bf16.msra.mxu0 0
        %5894 = vmatprep.subr.bf16.mxu0 0
        %5895 = vmatpush1.bf16.msra.mxu0 0
        %5896 = vmatprep.subr.bf16.mxu0 0
        %5897 = vmatpush1.bf16.msra.mxu0 0
        %5898 = vmatprep.subr.bf16.mxu0 0
        %5899 = vmatpush1.bf16.msra.mxu0 0
        %5900 = vmatprep.subr.bf16.mxu0 0
        %5901 = vmatpush1.bf16.msra.mxu0 0
        %5902 = vmatprep.subr.bf16.mxu0 0
        %5903 = vmatpush1.bf16.msra.mxu0 0
        %5904 = vmatprep.subr.bf16.mxu0 0
        %5905 = vmatpush1.bf16.msra.mxu0 0
        %5906 = vmatprep.subr.bf16.mxu0 0
        %5907 = vmatpush1.bf16.msra.mxu0 0
        %5908 = vmatprep.mubr.bf16.mxu0 0
        %5909 = vmatmul.mubr.bf16.gmra.mrb[0].mxu0 %v5789
        %v5910 = vpop.f32.mrb[0].mxu0
        %v5911 = vadd.f32 %v5826, %v5910
        %v5912 = vpop.f32.mrb[0].mxu0
        %v5913 = vpop.f32.mrb[0].mxu0
        %v5914 = vadd.f32 %v5826, %v5913
        %v5915 = vpop.f32.mrb[0].mxu0
        %5916 = vmatprep.mubr.bf16.mxu0 0
        %5917 = vmatmul.mubr.bf16.gmra.mrb[0].mxu0 %v5790
        %v5918 = vpop.f32.mrb[0].mxu0
        %v5919 = vadd.f32 %v5826, %v5918
        %v5920 = vpop.f32.mrb[0].mxu0
        %v5921 = vpop.f32.mrb[0].mxu0
        %v5922 = vadd.f32 %v5826, %v5921
        %v5923 = vpop.f32.mrb[0].mxu0
        %5924 = vmatprep.mubr.bf16.mxu0 0
        %5925 = vmatmul.mubr.bf16.gmra.mrb[0].mxu0 %v5791
        %v5926 = vpop.f32.mrb[0].mxu0
        %v5927 = vadd.f32 %v5826, %v5926
        %v5928 = vpop.f32.mrb[0].mxu0
        %v5929 = vpop.f32.mrb[0].mxu0
        %v5930 = vadd.f32 %v5826, %v5929
        %v5931 = vpop.f32.mrb[0].mxu0
        %5932 = vmatprep.mubr.bf16.mxu0 0
        %5933 = vmatmul.mubr.bf16.gmra.mrb[0].mxu0 %v5792
        %v5934 = vpop.f32.mrb[0].mxu0
        %v5935 = vadd.f32 %v5826, %v5934
        %v5936 = vpop.f32.mrb[0].mxu0
        %v5937 = vpop.f32.mrb[0].mxu0
        %v5938 = vadd.f32 %v5826, %v5937
        %v5939 = vpop.f32.mrb[0].mxu0
        %5940 = vmatprep.mubr.bf16.mxu0 0
        %5941 = vmatmul.mubr.bf16.gmra.mrb[0].mxu0 %v5793
        %v5942 = vpop.f32.mrb[0].mxu0
        %v5943 = vadd.f32 %v5826, %v5942
        %v5944 = vpop.f32.mrb[0].mxu0
        %v5945 = vpop.f32.mrb[0].mxu0
        %v5946 = vadd.f32 %v5826, %v5945
        %v5947 = vpop.f32.mrb[0].mxu0
        %5948 = vmatprep.mubr.bf16.mxu0 0
        %5949 = vmatmul.mubr.bf16.gmra.mrb[0].mxu0 %v5794
        %v5950 = vpop.f32.mrb[0].mxu0
        %v5951 = vadd.f32 %v5826, %v5950
        %v5952 = vpop.f32.mrb[0].mxu0
        %v5953 = vpop.f32.mrb[0].mxu0
        %v5954 = vadd.f32 %v5826, %v5953
        %v5955 = vpop.f32.mrb[0].mxu0
        %5956 = vmatprep.mubr.bf16.mxu0 0
        %5957 = vmatmul.mubr.bf16.gmra.mrb[0].mxu0 %v5795
        %v5958 = vpop.f32.mrb[0].mxu0
        %v5959 = vadd.f32 %v5826, %v5958
        %v5960 = vpop.f32.mrb[0].mxu0
        %v5961 = vpop.f32.mrb[0].mxu0
        %v5962 = vadd.f32 %v5826, %v5961
        %v5963 = vpop.f32.mrb[0].mxu0
        %5964 = vmatprep.mubr.bf16.mxu0 0
        %5965 = vmatmul.mubr.bf16.gmra.mrb[0].mxu0 %v5796
        %v5966 = vpop.f32.mrb[0].mxu0
        %v5967 = vadd.f32 %v5826, %v5966
        %v5968 = vpop.f32.mrb[0].mxu0
        %v5969 = vpop.f32.mrb[0].mxu0
        %v5970 = vadd.f32 %v5826, %v5969
        %v5971 = vpop.f32.mrb[0].mxu0
        %5972 = vmatprep.mubr.bf16.mxu0 0
        %5973 = vmatmul.mubr.bf16.gmra.mrb[0].mxu0 %v5797
        %v5974 = vpop.f32.mrb[0].mxu0
        %v5975 = vadd.f32 %v5826, %v5974
        %v5976 = vpop.f32.mrb[0].mxu0
        %v5977 = vpop.f32.mrb[0].mxu0
        %v5978 = vadd.f32 %v5826, %v5977
        %v5979 = vpop.f32.mrb[0].mxu0
        %5980 = vmatprep.mubr.bf16.mxu0 0
        %5981 = vmatmul.mubr.bf16.gmra.mrb[0].mxu0 %v5798
        %v5982 = vpop.f32.mrb[0].mxu0
        %v5983 = vadd.f32 %v5826, %v5982
        %v5984 = vpop.f32.mrb[0].mxu0
        %v5985 = vpop.f32.mrb[0].mxu0
        %v5986 = vadd.f32 %v5826, %v5985
        %v5987 = vpop.f32.mrb[0].mxu0
        %5988 = vmatprep.mubr.bf16.mxu0 0
        %5989 = vmatmul.mubr.bf16.gmra.mrb[0].mxu0 %v5799
        %v5990 = vpop.f32.mrb[0].mxu0
        %v5991 = vadd.f32 %v5826, %v5990
        %v5992 = vpop.f32.mrb[0].mxu0
        %v5993 = vpop.f32.mrb[0].mxu0
        %v5994 = vadd.f32 %v5826, %v5993
        %v5995 = vpop.f32.mrb[0].mxu0
        %5996 = vmatprep.mubr.bf16.mxu0 0
        %5997 = vmatmul.mubr.bf16.gmra.mrb[0].mxu0 %v5800
        %v5998 = vpop.f32.mrb[0].mxu0
        %v5999 = vadd.f32 %v5826, %v5998
        %v6000 = vpop.f32.mrb[0].mxu0
        %v6001 = vpop.f32.mrb[0].mxu0
        %v6002 = vadd.f32 %v5826, %v6001
        %v6003 = vpop.f32.mrb[0].mxu0
        %6004 = vmatprep.mubr.bf16.mxu0 0
        %6005 = vmatmul.mubr.bf16.gmra.mrb[0].mxu0 %v5801
        %v6006 = vpop.f32.mrb[0].mxu0
        %v6007 = vadd.f32 %v5826, %v6006
        %v6008 = vpop.f32.mrb[0].mxu0
        %v6009 = vpop.f32.mrb[0].mxu0
        %v6010 = vadd.f32 %v5826, %v6009
        %v6011 = vpop.f32.mrb[0].mxu0
        %6012 = vmatprep.mubr.bf16.mxu0 0
        %6013 = vmatmul.mubr.bf16.gmra.mrb[0].mxu0 %v5802
        %v6014 = vpop.f32.mrb[0].mxu0
        %v6015 = vadd.f32 %v5826, %v6014
        %v6016 = vpop.f32.mrb[0].mxu0
        %v6017 = vpop.f32.mrb[0].mxu0
        %v6018 = vadd.f32 %v5826, %v6017
        %v6019 = vpop.f32.mrb[0].mxu0
        %6020 = vmatprep.mubr.bf16.mxu0 0
        %6021 = vmatmul.mubr.bf16.gmra.mrb[0].mxu0 %v5803
        %v6022 = vpop.f32.mrb[0].mxu0
        %v6023 = vadd.f32 %v5826, %v6022
        %v6024 = vpop.f32.mrb[0].mxu0
        %v6025 = vpop.f32.mrb[0].mxu0
        %v6026 = vadd.f32 %v5826, %v6025
        %v6027 = vpop.f32.mrb[0].mxu0
        %6028 = vmatprep.mubr.bf16.mxu0 0
        %6029 = vmatmul.mubr.bf16.gmra.mrb[0].mxu0 %v5804
        %v6030 = vpop.f32.mrb[0].mxu0
        %v6031 = vadd.f32 %v5826, %v6030
        %v6032 = vpop.f32.mrb[0].mxu0
        %v6033 = vpop.f32.mrb[0].mxu0
        %v6034 = vadd.f32 %v5826, %v6033
        %v6035 = vpop.f32.mrb[0].mxu0
        %6036 = vdwg.mxu0
        %v6037 = vld [vmem:[%s299] sm:$0xff]
        %v6038 = vld [vmem:[%s299 + $0x8] sm:$0xff]
        %v6039 = vld [vmem:[%s299 + $0x10] sm:$0xff]
        %v6040 = vld [vmem:[%s299 + $0x18] sm:$0xff]
        %v6041 = vld [vmem:[%s299 + $0x20] sm:$0xff]
        %v6042 = vld [vmem:[%s299 + $0x28] sm:$0xff]
        %v6043 = vld [vmem:[%s299 + $0x30] sm:$0xff]
        %v6044 = vld [vmem:[%s299 + $0x38] sm:$0xff]
        %v6045 = vld [vmem:[%s299 + $0x40] sm:$0xff]
        %v6046 = vld [vmem:[%s299 + $0x48] sm:$0xff]
        %v6047 = vld [vmem:[%s299 + $0x50] sm:$0xff]
        %v6048 = vld [vmem:[%s299 + $0x58] sm:$0xff]
        %v6049 = vld [vmem:[%s299 + $0x60] sm:$0xff]
        %v6050 = vld [vmem:[%s299 + $0x68] sm:$0xff]
        %v6051 = vld [vmem:[%s299 + $0x70] sm:$0xff]
        %v6052 = vld [vmem:[%s299 + $0x78] sm:$0xff]
        %v6053 = vld [vmem:[%s299 + $0x80] sm:$0xff]
        %v6054 = vld [vmem:[%s299 + $0x88] sm:$0xff]
        %v6055 = vld [vmem:[%s299 + $0x90] sm:$0xff]
        %v6056 = vld [vmem:[%s299 + $0x98] sm:$0xff]
        %v6057 = vld [vmem:[%s299 + $0xa0] sm:$0xff]
        %v6058 = vld [vmem:[%s299 + $0xa8] sm:$0xff]
        %v6059 = vld [vmem:[%s299 + $0xb0] sm:$0xff]
        %v6060 = vld [vmem:[%s299 + $0xb8] sm:$0xff]
        %v6061 = vld [vmem:[%s299 + $0xc0] sm:$0xff]
        %v6062 = vld [vmem:[%s299 + $0xc8] sm:$0xff]
        %v6063 = vld [vmem:[%s299 + $0xd0] sm:$0xff]
        %v6064 = vld [vmem:[%s299 + $0xd8] sm:$0xff]
        %v6065 = vld [vmem:[%s299 + $0xe0] sm:$0xff]
        %v6066 = vld [vmem:[%s299 + $0xe8] sm:$0xff]
        %v6067 = vld [vmem:[%s299 + $0xf0] sm:$0xff]
        %v6068 = vld [vmem:[%s299 + $0xf8] sm:$0xff]
        %v6069 = vadd.f32 %v5911, %v6037
        %v6070 = vadd.f32 %v5914, %v6038
        %v6071 = vadd.f32 %v5919, %v6039
        %v6072 = vadd.f32 %v5922, %v6040
        %v6073 = vadd.f32 %v5927, %v6041
        %v6074 = vadd.f32 %v5930, %v6042
        %v6075 = vadd.f32 %v5935, %v6043
        %v6076 = vadd.f32 %v5938, %v6044
        %v6077 = vadd.f32 %v5943, %v6045
        %v6078 = vadd.f32 %v5946, %v6046
        %v6079 = vadd.f32 %v5951, %v6047
        %v6080 = vadd.f32 %v5954, %v6048
        %v6081 = vadd.f32 %v5959, %v6049
        %v6082 = vadd.f32 %v5962, %v6050
        %v6083 = vadd.f32 %v5967, %v6051
        %v6084 = vadd.f32 %v5970, %v6052
        %v6085 = vadd.f32 %v5975, %v6053
        %v6086 = vadd.f32 %v5978, %v6054
        %v6087 = vadd.f32 %v5983, %v6055
        %v6088 = vadd.f32 %v5986, %v6056
        %v6089 = vadd.f32 %v5991, %v6057
        %v6090 = vadd.f32 %v5994, %v6058
        %v6091 = vadd.f32 %v5999, %v6059
        %v6092 = vadd.f32 %v6002, %v6060
        %v6093 = vadd.f32 %v6007, %v6061
        %v6094 = vadd.f32 %v6010, %v6062
        %v6095 = vadd.f32 %v6015, %v6063
        %v6096 = vadd.f32 %v6018, %v6064
        %v6097 = vadd.f32 %v6023, %v6065
        %v6098 = vadd.f32 %v6026, %v6066
        %v6099 = vadd.f32 %v6031, %v6067
        %v6100 = vadd.f32 %v6034, %v6068
        %v6101 = vmax.f32 %v6069, 0.0
        %v6102 = vmax.f32 %v6070, 0.0
        %v6103 = vmax.f32 %v6071, 0.0
        %v6104 = vmax.f32 %v6072, 0.0
        %v6105 = vmax.f32 %v6073, 0.0
        %v6106 = vmax.f32 %v6074, 0.0
        %v6107 = vmax.f32 %v6075, 0.0
        %v6108 = vmax.f32 %v6076, 0.0
        %v6109 = vmax.f32 %v6077, 0.0
        %v6110 = vmax.f32 %v6078, 0.0
        %v6111 = vmax.f32 %v6079, 0.0
        %v6112 = vmax.f32 %v6080, 0.0
        %v6113 = vmax.f32 %v6081, 0.0
        %v6114 = vmax.f32 %v6082, 0.0
        %v6115 = vmax.f32 %v6083, 0.0
        %v6116 = vmax.f32 %v6084, 0.0
        %v6117 = vmax.f32 %v6085, 0.0
        %v6118 = vmax.f32 %v6086, 0.0
        %v6119 = vmax.f32 %v6087, 0.0
        %v6120 = vmax.f32 %v6088, 0.0
        %v6121 = vmax.f32 %v6089, 0.0
        %v6122 = vmax.f32 %v6090, 0.0
        %v6123 = vmax.f32 %v6091, 0.0
        %v6124 = vmax.f32 %v6092, 0.0
        %v6125 = vmax.f32 %v6093, 0.0
        %v6126 = vmax.f32 %v6094, 0.0
        %v6127 = vmax.f32 %v6095, 0.0
        %v6128 = vmax.f32 %v6096, 0.0
        %v6129 = vmax.f32 %v6097, 0.0
        %v6130 = vmax.f32 %v6098, 0.0
        %v6131 = vmax.f32 %v6099, 0.0
        %v6132 = vmax.f32 %v6100, 0.0
        %6133 = vst [vmem:[%s341] sm:$0xff] %v6101
        %6134 = vst [vmem:[%s341 + $0x8] sm:$0xff] %v6102
        %6135 = vst [vmem:[%s341 + $0x10] sm:$0xff] %v6103
        %6136 = vst [vmem:[%s341 + $0x18] sm:$0xff] %v6104
        %6137 = vst [vmem:[%s341 + $0x20] sm:$0xff] %v6105
        %6138 = vst [vmem:[%s341 + $0x28] sm:$0xff] %v6106
        %6139 = vst [vmem:[%s341 + $0x30] sm:$0xff] %v6107
        %6140 = vst [vmem:[%s341 + $0x38] sm:$0xff] %v6108
        %6141 = vst [vmem:[%s341 + $0x40] sm:$0xff] %v6109
        %6142 = vst [vmem:[%s341 + $0x48] sm:$0xff] %v6110
        %6143 = vst [vmem:[%s341 + $0x50] sm:$0xff] %v6111
        %6144 = vst [vmem:[%s341 + $0x58] sm:$0xff] %v6112
        %6145 = vst [vmem:[%s341 + $0x60] sm:$0xff] %v6113
        %6146 = vst [vmem:[%s341 + $0x68] sm:$0xff] %v6114
        %6147 = vst [vmem:[%s341 + $0x70] sm:$0xff] %v6115
        %6148 = vst [vmem:[%s341 + $0x78] sm:$0xff] %v6116
        %6149 = vst [vmem:[%s341 + $0x80] sm:$0xff] %v6117
        %6150 = vst [vmem:[%s341 + $0x88] sm:$0xff] %v6118
        %6151 = vst [vmem:[%s341 + $0x90] sm:$0xff] %v6119
        %6152 = vst [vmem:[%s341 + $0x98] sm:$0xff] %v6120
        %6153 = vst [vmem:[%s341 + $0xa0] sm:$0xff] %v6121
        %6154 = vst [vmem:[%s341 + $0xa8] sm:$0xff] %v6122
        %6155 = vst [vmem:[%s341 + $0xb0] sm:$0xff] %v6123
        %6156 = vst [vmem:[%s341 + $0xb8] sm:$0xff] %v6124
        %6157 = vst [vmem:[%s341 + $0xc0] sm:$0xff] %v6125
        %6158 = vst [vmem:[%s341 + $0xc8] sm:$0xff] %v6126
        %6159 = vst [vmem:[%s341 + $0xd0] sm:$0xff] %v6127
        %6160 = vst [vmem:[%s341 + $0xd8] sm:$0xff] %v6128
        %6161 = vst [vmem:[%s341 + $0xe0] sm:$0xff] %v6129
        %6162 = vst [vmem:[%s341 + $0xe8] sm:$0xff] %v6130
        %6163 = vst [vmem:[%s341 + $0xf0] sm:$0xff] %v6131
        %6164 = vst [vmem:[%s341 + $0xf8] sm:$0xff] %v6132
        %s6165 = sand.u32 %s186, 1
        %s6166 = scalar_lea.sflag [#allocation5], %s6165
        %s6167 = sand.u32 %s186, 1
        %s6168 = smul.addr %s6167, 256
        %s6169 = scalar_lea.vmem [#allocation11], %s6168
        // Predicated region
        $region65: #{tpu_custom_call.1} parent=47 // pred_check
          %p6170 = pneg %p196
        $region66: #{tpu_custom_call.1} parent=47 // pred_check_branch
          %6172 = sbr.rel (%p6170) target = $region68
        $region67: #{tpu_custom_call.1} parent=47 // pred_region
          %s6173 = smul.u32 4, %s26
          %s6175 = ssub.s32 4096, 4096
          %6176 = vsyncadd %s6166, %s6175
          %s6177 = smul.addr %s6173, 8
          %s6178 = smul.addr %s6177, 128
          %s6179 = scalar_lea.hbm %s7, %s6178
          %s6180 = sshll.u32 %s6169, 4
          %s6181 = int_to_ptr.vmem [resolvable:$true] %s6180
          %6186 = dma.vmem_to_hbm [thread:$0]  %s6181, 4096, %s6179, %s6166, 128, 128, 8
        $region68: #{tpu_custom_call.1} parent=47 // pred_fallthru
          _
      $region48: #{tpu_custom_call.1} parent=5 // pred_fallthru
        _
      %p6187 = scmp.le.s32.totalorder 2, %s21
      // Predicated region
      $region69: #{tpu_custom_call.1} parent=5 // pred_check
        %p6188 = pneg %p6187
      $region70: #{tpu_custom_call.1} parent=5 // pred_check_branch
        %6190 = sbr.rel (%p6188) target = $region72
      $region71: #{tpu_custom_call.1} parent=5 // pred_region
        %s6191 = ssub.s32 %s21, 2
        // Predicated region
        $region73: #{tpu_custom_call.1} parent=71 // pred_check
          %p6192 = pneg %p202
        $region74: #{tpu_custom_call.1} parent=71 // pred_check_branch
          %6194 = sbr.rel (%p6192) target = $region76
        $region75: #{tpu_custom_call.1} parent=71 // pred_region
          %s6195 = sand.u32 %s187, 1
          %s6196 = scalar_lea.sflag [#allocation5], %s6195
          %s6197 = sand.u32 %s187, 1
          %s6198 = smul.addr %s6197, 256
          %s6199 = scalar_lea.vmem [#allocation11], %s6198
          %6200 = dma.done %s6196, 4096
        $region76: #{tpu_custom_call.1} parent=71 // pred_fallthru
          _
      $region72: #{tpu_custom_call.1} parent=5 // pred_fallthru
        _
    $region6: #{tpu_custom_call.1} parent=1 // loop_footer
      %s25 = sadd.s32 1, %s21
    $region7: #{tpu_custom_call.1} parent=1 // loop_footer_branch
      %20 = sbr.rel target = $region3
    $region8: #{tpu_custom_call.1} parent=1 // loop_exit
      _
    %6201 = vsyncpa [#allocation4], 1
    %s6202 = scalar_lea.sflag [#allocation4], 1
    %6203 = vsyncpa %s6202, 1
    %6204 = vsyncpa [#allocation7], 1
    %6205 = vsyncpa [#allocation10], 1
    %6206 = vsyncpa [#allocation5], 1
    %s6207 = scalar_lea.sflag [#allocation5], 1
    %6208 = vsyncpa %s6207, 1

</llo_original>
